<compile_context>
chip_gen: v6e
topology: v6e:2x2x1
jax: 0.10.0
libtpu: 0.0.40
codegen_flags: <defaults>
</compile_context>

<pallas_src>
import jax
import jax.numpy as jnp
from jax.experimental import pallas as pl
from jax.experimental.pallas import tpu as pltpu

LN_EPS = 1e-5
_INV_SQRT2 = 0.7071067811865476


# ----------------------------- in-kernel math ------------------------------

def _layernorm(x, w=None, b=None):
    # x: (rows, C) f32 ; optional affine w, b: (1, C) f32
    mu = jnp.mean(x, axis=-1, keepdims=True)
    var = jnp.mean((x - mu) ** 2, axis=-1, keepdims=True)
    y = (x - mu) * jax.lax.rsqrt(var + LN_EPS)
    if w is not None:
        y = y * w + b
    return y


def _gelu_exact(x):
    # matches torch.nn.GELU (erf form)
    return 0.5 * x * (1.0 + jax.lax.erf(x * _INV_SQRT2))


def _mix_heads(ts, w_ref, b_ref):
    """Talking-heads mix: out[i] = sum_h w[i,h] * ts[h] + b[i].

    ts: list of H (Bt, N, N) f32 tensors. w_ref/b_ref live in SMEM, so each
    coefficient is a cheap scalar load broadcast by the VPU (no MXU, no
    (H, N*N) reshape, no extra full-logits copies)."""
    H = len(ts)
    out = []
    for i in range(H):
        acc = ts[0] * w_ref[i, 0] + b_ref[i]
        for h in range(1, H):
            acc = acc + ts[h] * w_ref[i, h]
        out.append(acc)
    return out


def _softmax_lastdim(t):
    # f32 statistics; EUP approximate reciprocal for the normalization.
    t = t - jnp.max(t, axis=-1, keepdims=True)
    e = jnp.exp(t)
    return e * pl.reciprocal(jnp.sum(e, axis=-1, keepdims=True), approx=True)


def layer_scale_block_kernel(x_ref,
                             ln1_w_ref, ln1_b_ref, wqkv_ref,
                             wl_ref, bl_ref, ww_ref, bw_ref,
                             wproj_ref, bproj_ref,
                             wfc1_ref, bfc1_ref, wfc2_ref, bfc2_ref,
                             o_ref):
    Bt, N, C = x_ref.shape
    H = wl_ref.shape[0]
    Dh = C // H
    rows = Bt * N
    md = wqkv_ref.dtype          # matmul operand dtype (e.g. bf16); accum is f32

    # Residual stream in f32; all row-parallel matmuls see a (Bt*N, C) slab.
    x2 = x_ref[...].reshape(rows, C).astype(jnp.float32)

    # -------- attention branch: gamma_1 * TalkingHeadAttn(norm1(x)) --------
    xn = _layernorm(x2, ln1_w_ref[...], ln1_b_ref[...])
    # 1/sqrt(Dh) is pre-folded into the q columns of wqkv (see _prepare_params).
    qkv = jnp.dot(xn.astype(md), wqkv_ref[...],
                  preferred_element_type=jnp.float32)          # (rows, 3C) f32
    qkv = qkv.reshape(Bt, N, 3 * C)

    # Per-head lane slices (each head is a contiguous lane window), batched
    # over the Bt samples of this grid step.
    q = [qkv[:, :, h * Dh:(h + 1) * Dh].astype(md) for h in range(H)]
    k = [qkv[:, :, C + h * Dh: C + (h + 1) * Dh].astype(md) for h in range(H)]
    v = [qkv[:, :, 2 * C + h * Dh: 2 * C + (h + 1) * Dh].astype(md) for h in range(H)]

    # Per-head logits, batched over Bt (single batch-dim dot_general per head).
    s = [jnp.einsum('bqd,bkd->bqk', q[h], k[h],
                    preferred_element_type=jnp.float32) for h in range(H)]
    s = _mix_heads(s, wl_ref, bl_ref)            # pre-softmax talking heads (VPU)
    p = [_softmax_lastdim(t) for t in s]         # f32 softmax
    p = _mix_heads(p, ww_ref, bw_ref)            # post-softmax talking heads (VPU)

    ctx = [jnp.einsum('bqk,bkd->bqd', p[h].astype(md), v[h],
                      preferred_element_type=jnp.float32) for h in range(H)]
    # Head concat along lanes + one full-K (C) output projection matmul.
    # gamma_1 is pre-folded into wproj / bproj.
    ctx = jnp.concatenate(ctx, axis=-1).reshape(rows, C)
    attn = jnp.dot(ctx.astype(md), wproj_ref[...],
                   preferred_element_type=jnp.float32)
    x2 = x2 + (attn + bproj_ref[...])

    # -------- MLP branch: gamma_2 * Mlp(norm2(x)) --------
    # norm2's affine is pre-folded into wfc1 / bfc1; gamma_2 into wfc2 / bfc2.
    xn2 = _layernorm(x2)
    h1 = jnp.dot(xn2.astype(md), wfc1_ref[...],
                 preferred_element_type=jnp.float32)
    h1 = _gelu_exact(h1 + bfc1_ref[...])
    h2 = jnp.dot(h1.astype(md), wfc2_ref[...],
                 preferred_element_type=jnp.float32)
    x2 = x2 + (h2 + bfc2_ref[...])

    o_ref[...] = x2.reshape(Bt, N, C).astype(o_ref.dtype)


# ------------------------------ host wrapper -------------------------------

def _pick_batch_tile(B, N, target_rows=256):
    """Largest divisor of B whose row count Bt*N approaches target_rows, while
    keeping >=2 grid steps when B > 1 (so both TensorCores get work)."""
    divisors = [d for d in range(1, B + 1) if B % d == 0]
    target_bt = max(1, target_rows // max(N, 1))
    cands = [d for d in divisors if d <= target_bt] or [1]
    bt = max(cands)
    if bt == B and B > 1:
        smaller = [d for d in divisors if d < B]
        bt = max(smaller) if smaller else bt
    return bt


def layer_scale_block(x, params, *, batch_tile=None):
    B, N, C = x.shape
    bt = batch_tile if batch_tile is not None else _pick_batch_tile(B, N)
    assert B % bt == 0

    # Order must match the kernel signature.
    names = ['ln1_w', 'ln1_b', 'wqkv_t', 'wl', 'bl', 'ww', 'bw',
             'wproj_t', 'bproj', 'wfc1_t', 'bfc1', 'wfc2_t', 'bfc2']
    smem_names = {'wl', 'bl', 'ww', 'bw'}     # tiny HxH tables -> SMEM scalar reads
    param_list = [params[n] for n in names]

    # Weights are whole-array resident (single copy, no double-buffered per-step
    # DMA); only the activation block is pipelined over the grid.
    p_specs = [
        pl.BlockSpec(memory_space=(pltpu.MemorySpace.SMEM if n in smem_names
                                   else pltpu.MemorySpace.VMEM))
        for n in names
    ]
    x_spec = pl.BlockSpec((bt, N, C), lambda b: (b, 0, 0))
    out_spec = pl.BlockSpec((bt, N, C), lambda b: (b, 0, 0))

    return pl.pallas_call(
        layer_scale_block_kernel,
        out_shape=jax.ShapeDtypeStruct((B, N, C), x.dtype),
        grid_spec=pltpu.PrefetchScalarGridSpec(
            num_scalar_prefetch=0,
            grid=(B // bt,),
            in_specs=[x_spec] + p_specs,
            out_specs=out_spec,
        ),
        compiler_params=pltpu.CompilerParams(
            dimension_semantics=("parallel",),
            vmem_limit_bytes=64 * 1024 * 1024,
        ),
    )(x, *param_list)


# ------------------------- parameter preparation ---------------------------

def _prepare_params(raw, compute_dtype=jnp.float32):
    """Torch-layout params -> kernel params (all static transforms).
    - linear weights transposed to (in, out) and cast to compute_dtype (MXU inputs)
    - 1/sqrt(Dh) folded into the q columns of the qkv weight
    - gamma_1 folded into proj weight/bias, gamma_2 into fc2 weight/bias
    - norm2 affine folded into fc1 weight/bias
    - small vectors / talking-heads tables kept in f32
    """
    f32 = jnp.float32
    C = raw['ln1_w'].shape[0]
    H = raw['w_l'].shape[0]
    Dh = C // H
    scale = Dh ** -0.5
    g1 = raw['gamma_1'].astype(f32)
    g2 = raw['gamma_2'].astype(f32)

    # qkv weight: (3C, C) torch -> (C, 3C), q-columns pre-scaled by 1/sqrt(Dh).
    col_scale = jnp.concatenate(
        [jnp.full((C,), scale, f32), jnp.ones((2 * C,), f32)])
    wqkv_t = (raw['w_qkv'].astype(f32).T * col_scale[None, :]).astype(compute_dtype)

    # Output projection: fold gamma_1 into the columns / bias.
    wproj_t = (raw['w_proj'].astype(f32).T * g1[None, :]).astype(compute_dtype)
    bproj = (g1 * raw['b_proj'].astype(f32)).reshape(1, C)

    # fc1: fold norm2 affine (w into rows, b into bias through the weight).
    wfc1_t_f32 = raw['w_fc1'].astype(f32).T                       # (C, Hd)
    ln2_w = raw['ln2_w'].astype(f32)
    ln2_b = raw['ln2_b'].astype(f32)
    wfc1_t = (wfc1_t_f32 * ln2_w[:, None]).astype(compute_dtype)
    bfc1 = (raw['b_fc1'].astype(f32) + ln2_b @ wfc1_t_f32).reshape(1, -1)

    # fc2: fold gamma_2 into the columns / bias.
    wfc2_t = (raw['w_fc2'].astype(f32).T * g2[None, :]).astype(compute_dtype)
    bfc2 = (g2 * raw['b_fc2'].astype(f32)).reshape(1, C)

    return dict(
        ln1_w=raw['ln1_w'].astype(f32).reshape(1, C),
        ln1_b=raw['ln1_b'].astype(f32).reshape(1, C),
        wqkv_t=wqkv_t,
        wl=raw['w_l'].astype(f32),
        bl=raw['b_l'].astype(f32),
        ww=raw['w_w'].astype(f32),
        bw=raw['b_w'].astype(f32),
        wproj_t=wproj_t,
        bproj=bproj,
        wfc1_t=wfc1_t,
        bfc1=bfc1,
        wfc2_t=wfc2_t,
        bfc2=bfc2,
    )


# --------------------------- pure-JAX reference ----------------------------

def _reference(x, raw):
    """Torch-faithful fp32 reference of LayerScaleBlock.forward."""
    f32 = jnp.float32
    x = x.astype(f32)
    B, N, C = x.shape
    H = raw['w_l'].shape[0]
    Dh = C // H
    scale = Dh ** -0.5

    def ln(t, w, b):
        mu = jnp.mean(t, -1, keepdims=True)
        var = jnp.mean((t - mu) ** 2, -1, keepdims=True)
        return (t - mu) * jax.lax.rsqrt(var + LN_EPS) * w + b

    # attention
    xn = ln(x, raw['ln1_w'].astype(f32), raw['ln1_b'].astype(f32))
    qkv = jnp.einsum('bnc,oc->bno', xn, raw['w_qkv'].astype(f32))
    qkv = qkv.reshape(B, N, 3, H, Dh).transpose(2, 0, 3, 1, 4)
    q, k, v = qkv[0] * scale, qkv[1], qkv[2]
    a = jnp.einsum('bhqd,bhkd->bhqk', q, k)
    a = (jnp.einsum('bhqk,ih->biqk', a, raw['w_l'].astype(f32))
         + raw['b_l'].astype(f32)[None, :, None, None])
    a = jax.nn.softmax(a, axis=-1)
    a = (jnp.einsum('bhqk,ih->biqk', a, raw['w_w'].astype(f32))
         + raw['b_w'].astype(f32)[None, :, None, None])
    o = jnp.einsum('bhqk,bhkd->bhqd', a, v)
    o = o.transpose(0, 2, 1, 3).reshape(B, N, C)
    o = jnp.einsum('bnc,oc->bno', o, raw['w_proj'].astype(f32)) + raw['b_proj'].astype(f32)
    x = x + raw['gamma_1'].astype(f32) * o

    # mlp
    xn2 = ln(x, raw['ln2_w'].astype(f32), raw['ln2_b'].astype(f32))
    h = jnp.einsum('bnc,oc->bno', xn2, raw['w_fc1'].astype(f32)) + raw['b_fc1'].astype(f32)
    h = 0.5 * h * (1.0 + jax.lax.erf(h * _INV_SQRT2))
    h = jnp.einsum('bnh,oh->bno', h, raw['w_fc2'].astype(f32)) + raw['b_fc2'].astype(f32)
    x = x + raw['gamma_2'].astype(f32) * h
    return x


# ----------------------------------- demo ----------------------------------

if __name__ == "__main__":
    # Small shapes consistent with the module: dim=32, num_heads=4, mlp_ratio=4.
    B, N, C, H = 4, 8, 32, 4
    Hd = int(C * 4.0)
    init_values = 1e-4

    key = jax.random.PRNGKey(0)
    ks = jax.random.split(key, 20)

    def nrm(k, shape, s=0.02):
        return (s * jax.random.normal(k, shape)).astype(jnp.float32)

    raw = {
        # Non-trivial LN affines so the norm2-fold path is actually exercised.
        'ln1_w': (1.0 + nrm(ks[12], (C,), 0.1)),
        'ln1_b': nrm(ks[13], (C,), 0.05),
        'w_qkv': nrm(ks[0], (3 * C, C)),                 # qkv.weight (qkv_bias=False)
        'w_l': nrm(ks[1], (H, H)), 'b_l': nrm(ks[2], (H,)),   # proj_l
        'w_w': nrm(ks[3], (H, H)), 'b_w': nrm(ks[4], (H,)),   # proj_w
        'w_proj': nrm(ks[5], (C, C)), 'b_proj': nrm(ks[6], (C,)),
        'ln2_w': (1.0 + nrm(ks[14], (C,), 0.1)),
        'ln2_b': nrm(ks[15], (C,), 0.05),
        'w_fc1': nrm(ks[7], (Hd, C)), 'b_fc1': nrm(ks[8], (Hd,)),
        'w_fc2': nrm(ks[9], (C, Hd)), 'b_fc2': nrm(ks[10], (C,)),
        'gamma_1': jnp.full((C,), init_values, jnp.float32),
        'gamma_2': jnp.full((C,), init_values, jnp.float32),
    }
    x = jax.random.normal(ks[11], (B, N, C), jnp.float32)
    x16 = x.astype(jnp.bfloat16)          # take the bf16 view before any run
    ref = _reference(x, raw)

    # fp32 run — tight correctness check against the torch-faithful reference.
    params32 = _prepare_params(raw, jnp.float32)
    y32 = jax.block_until_ready(layer_scale_block(x, params32))
    assert y32.shape == (B, N, C)
    err32 = float(jnp.max(jnp.abs(y32 - ref)))
    assert jnp.allclose(y32, ref, atol=2e-3, rtol=2e-3), err32

    # bf16 MXU operands (f32 LN/softmax/residual inside the kernel) — loose check.
    params16 = _prepare_params(raw, jnp.bfloat16)
    y16 = jax.block_until_ready(layer_scale_block(x16, params16))
    ref16 = _reference(x16.astype(jnp.float32), raw)
    err16 = float(jnp.max(jnp.abs(y16.astype(jnp.float32) - ref16)))
    assert jnp.allclose(y16.astype(jnp.float32), ref16, atol=5e-2, rtol=5e-2), err16

    print("KERNEL_OK")
</pallas_src>

<mosaic_0001>
module attributes {stable_mosaic.version = 11 : i64} {
  func.func @layer_scale_block_kernel(%arg0: i32, %arg1: memref<2x8x32xf32, #tpu.memory_space<vmem>>, %arg2: memref<1x32xf32, #tpu.memory_space<vmem>>, %arg3: memref<1x32xf32, #tpu.memory_space<vmem>>, %arg4: memref<32x96xf32, #tpu.memory_space<vmem>>, %arg5: memref<4x4xf32, #tpu.memory_space<smem>>, %arg6: memref<4xf32, #tpu.memory_space<smem>>, %arg7: memref<4x4xf32, #tpu.memory_space<smem>>, %arg8: memref<4xf32, #tpu.memory_space<smem>>, %arg9: memref<32x32xf32, #tpu.memory_space<vmem>>, %arg10: memref<1x32xf32, #tpu.memory_space<vmem>>, %arg11: memref<32x128xf32, #tpu.memory_space<vmem>>, %arg12: memref<1x128xf32, #tpu.memory_space<vmem>>, %arg13: memref<128x32xf32, #tpu.memory_space<vmem>>, %arg14: memref<1x32xf32, #tpu.memory_space<vmem>>, %arg15: memref<2x8x32xf32, #tpu.memory_space<vmem>>) attributes {dimension_semantics = [#tpu.dimension_semantics<parallel>], iteration_bounds = array<i64: 2>, scalar_prefetch = 0 : i64, scratch_operands = 0 : i64, tpu.core_type = #tpu.core_type<tc>, window_params = [{transform_indices = @transform_0, window_bounds = array<i64: 2, 8, 32>}, {pipeline_mode = #tpu.pipeline_mode<synchronous>, transform_indices = @transform_1, window_bounds = array<i64: 1, 32>}, {pipeline_mode = #tpu.pipeline_mode<synchronous>, transform_indices = @transform_2, window_bounds = array<i64: 1, 32>}, {pipeline_mode = #tpu.pipeline_mode<synchronous>, transform_indices = @transform_3, window_bounds = array<i64: 32, 96>}, {transform_indices = @transform_4, window_bounds = array<i64: 4, 4>}, {transform_indices = @transform_5, window_bounds = array<i64: 4>}, {transform_indices = @transform_6, window_bounds = array<i64: 4, 4>}, {transform_indices = @transform_7, window_bounds = array<i64: 4>}, {pipeline_mode = #tpu.pipeline_mode<synchronous>, transform_indices = @transform_8, window_bounds = array<i64: 32, 32>}, {pipeline_mode = #tpu.pipeline_mode<synchronous>, transform_indices = @transform_9, window_bounds = array<i64: 1, 32>}, {pipeline_mode = #tpu.pipeline_mode<synchronous>, transform_indices = @transform_10, window_bounds = array<i64: 32, 128>}, {pipeline_mode = #tpu.pipeline_mode<synchronous>, transform_indices = @transform_11, window_bounds = array<i64: 1, 128>}, {pipeline_mode = #tpu.pipeline_mode<synchronous>, transform_indices = @transform_12, window_bounds = array<i64: 128, 32>}, {pipeline_mode = #tpu.pipeline_mode<synchronous>, transform_indices = @transform_13, window_bounds = array<i64: 1, 32>}, {transform_indices = @transform_14, window_bounds = array<i64: 2, 8, 32>}]} {
    %c0 = arith.constant 0 : index
    %c0_0 = arith.constant 0 : index
    %c0_1 = arith.constant 0 : index
    %0 = vector.load %arg1[%c0, %c0_0, %c0_1] : memref<2x8x32xf32, #tpu.memory_space<vmem>>, vector<2x8x32xf32>
    %1 = vector.shape_cast %0 : vector<2x8x32xf32> to vector<16x32xf32>
    %c0_2 = arith.constant 0 : index
    %c0_3 = arith.constant 0 : index
    %2 = vector.load %arg2[%c0_2, %c0_3] : memref<1x32xf32, #tpu.memory_space<vmem>>, vector<1x32xf32>
    %c0_4 = arith.constant 0 : index
    %c0_5 = arith.constant 0 : index
    %3 = vector.load %arg3[%c0_4, %c0_5] : memref<1x32xf32, #tpu.memory_space<vmem>>, vector<1x32xf32>
    %cst = arith.constant dense<0.000000e+00> : vector<16xf32>
    %4 = vector.multi_reduction <add>, %1, %cst [1] : vector<16x32xf32> to vector<16xf32>
    %5 = vector.shape_cast %4 : vector<16xf32> to vector<16x1xf32>
    %cst_6 = arith.constant 3.200000e+01 : f32
    %6 = vector.broadcast %cst_6 : f32 to vector<16x1xf32>
    %7 = arith.divf %5, %6 : vector<16x1xf32>
    %8 = vector.broadcast %7 : vector<16x1xf32> to vector<16x32xf32>
    %9 = arith.subf %1, %8 : vector<16x32xf32>
    %10 = arith.mulf %9, %9 : vector<16x32xf32>
    %cst_7 = arith.constant dense<0.000000e+00> : vector<16xf32>
    %11 = vector.multi_reduction <add>, %10, %cst_7 [1] : vector<16x32xf32> to vector<16xf32>
    %12 = vector.shape_cast %11 : vector<16xf32> to vector<16x1xf32>
    %cst_8 = arith.constant 3.200000e+01 : f32
    %13 = vector.broadcast %cst_8 : f32 to vector<16x1xf32>
    %14 = arith.divf %12, %13 : vector<16x1xf32>
    %15 = vector.broadcast %7 : vector<16x1xf32> to vector<16x32xf32>
    %16 = arith.subf %1, %15 : vector<16x32xf32>
    %cst_9 = arith.constant 9.99999974E-6 : f32
    %17 = vector.broadcast %cst_9 : f32 to vector<16x1xf32>
    %18 = arith.addf %14, %17 : vector<16x1xf32>
    %19 = math.rsqrt %18 : vector<16x1xf32>
    %20 = vector.broadcast %19 : vector<16x1xf32> to vector<16x32xf32>
    %21 = arith.mulf %16, %20 : vector<16x32xf32>
    %22 = vector.broadcast %2 : vector<1x32xf32> to vector<16x32xf32>
    %23 = arith.mulf %21, %22 : vector<16x32xf32>
    %24 = vector.broadcast %3 : vector<1x32xf32> to vector<16x32xf32>
    %25 = arith.addf %23, %24 : vector<16x32xf32>
    %c0_10 = arith.constant 0 : index
    %c0_11 = arith.constant 0 : index
    %26 = vector.load %arg4[%c0_10, %c0_11] : memref<32x96xf32, #tpu.memory_space<vmem>>, vector<32x96xf32>
    %cst_12 = arith.constant dense<0.000000e+00> : vector<16x96xf32>
    %27 = tpu.matmul %25, %26, %cst_12 {dimension_numbers = #tpu.dot_dimension_numbers<[1], [0], [0], [1], [0, 0, 1, 1], [], []>} : vector<16x32xf32>, vector<32x96xf32>, vector<16x96xf32> -> vector<16x96xf32>
    %28 = vector.shape_cast %27 : vector<16x96xf32> to vector<2x8x96xf32>
    %29 = vector.extract_strided_slice %28 {offsets = [0, 0, 0], sizes = [2, 8, 8], strides = [1, 1, 1]} : vector<2x8x96xf32> to vector<2x8x8xf32>
    %30 = vector.extract_strided_slice %28 {offsets = [0, 0, 8], sizes = [2, 8, 8], strides = [1, 1, 1]} : vector<2x8x96xf32> to vector<2x8x8xf32>
    %31 = vector.extract_strided_slice %28 {offsets = [0, 0, 16], sizes = [2, 8, 8], strides = [1, 1, 1]} : vector<2x8x96xf32> to vector<2x8x8xf32>
    %32 = vector.extract_strided_slice %28 {offsets = [0, 0, 24], sizes = [2, 8, 8], strides = [1, 1, 1]} : vector<2x8x96xf32> to vector<2x8x8xf32>
    %33 = vector.extract_strided_slice %28 {offsets = [0, 0, 32], sizes = [2, 8, 8], strides = [1, 1, 1]} : vector<2x8x96xf32> to vector<2x8x8xf32>
    %34 = vector.extract_strided_slice %28 {offsets = [0, 0, 40], sizes = [2, 8, 8], strides = [1, 1, 1]} : vector<2x8x96xf32> to vector<2x8x8xf32>
    %35 = vector.extract_strided_slice %28 {offsets = [0, 0, 48], sizes = [2, 8, 8], strides = [1, 1, 1]} : vector<2x8x96xf32> to vector<2x8x8xf32>
    %36 = vector.extract_strided_slice %28 {offsets = [0, 0, 56], sizes = [2, 8, 8], strides = [1, 1, 1]} : vector<2x8x96xf32> to vector<2x8x8xf32>
    %37 = vector.extract_strided_slice %28 {offsets = [0, 0, 64], sizes = [2, 8, 8], strides = [1, 1, 1]} : vector<2x8x96xf32> to vector<2x8x8xf32>
    %38 = vector.extract_strided_slice %28 {offsets = [0, 0, 72], sizes = [2, 8, 8], strides = [1, 1, 1]} : vector<2x8x96xf32> to vector<2x8x8xf32>
    %39 = vector.extract_strided_slice %28 {offsets = [0, 0, 80], sizes = [2, 8, 8], strides = [1, 1, 1]} : vector<2x8x96xf32> to vector<2x8x8xf32>
    %40 = vector.extract_strided_slice %28 {offsets = [0, 0, 88], sizes = [2, 8, 8], strides = [1, 1, 1]} : vector<2x8x96xf32> to vector<2x8x8xf32>
    "tpu.trace_start"() <{level = 10 : i32, message = "bqd,bkd->bqk"}> : () -> ()
    %cst_13 = arith.constant dense<0.000000e+00> : vector<2x8x8xf32>
    %41 = tpu.matmul %29, %33, %cst_13 {dimension_numbers = #tpu.dot_dimension_numbers<[2], [2], [1], [1], [0, 0, 0, 1, 1, 1], [0], [0]>} : vector<2x8x8xf32>, vector<2x8x8xf32>, vector<2x8x8xf32> -> vector<2x8x8xf32>
    %cst_14 = arith.constant dense<0.000000e+00> : vector<2x8x8xf32>
    %42 = tpu.matmul %30, %34, %cst_14 {dimension_numbers = #tpu.dot_dimension_numbers<[2], [2], [1], [1], [0, 0, 0, 1, 1, 1], [0], [0]>} : vector<2x8x8xf32>, vector<2x8x8xf32>, vector<2x8x8xf32> -> vector<2x8x8xf32>
    %cst_15 = arith.constant dense<0.000000e+00> : vector<2x8x8xf32>
    %43 = tpu.matmul %31, %35, %cst_15 {dimension_numbers = #tpu.dot_dimension_numbers<[2], [2], [1], [1], [0, 0, 0, 1, 1, 1], [0], [0]>} : vector<2x8x8xf32>, vector<2x8x8xf32>, vector<2x8x8xf32> -> vector<2x8x8xf32>
    %cst_16 = arith.constant dense<0.000000e+00> : vector<2x8x8xf32>
    %44 = tpu.matmul %32, %36, %cst_16 {dimension_numbers = #tpu.dot_dimension_numbers<[2], [2], [1], [1], [0, 0, 0, 1, 1, 1], [0], [0]>} : vector<2x8x8xf32>, vector<2x8x8xf32>, vector<2x8x8xf32> -> vector<2x8x8xf32>
    "tpu.trace_stop"() : () -> ()
    %c0_17 = arith.constant 0 : index
    %c0_18 = arith.constant 0 : index
    %45 = memref.load %arg5[%c0_17, %c0_18] : memref<4x4xf32, #tpu.memory_space<smem>>
    %46 = vector.broadcast %45 : f32 to vector<2x8x8xf32>
    %47 = arith.mulf %41, %46 : vector<2x8x8xf32>
    %c0_19 = arith.constant 0 : index
    %48 = memref.load %arg6[%c0_19] : memref<4xf32, #tpu.memory_space<smem>>
    %49 = vector.broadcast %48 : f32 to vector<2x8x8xf32>
    %50 = arith.addf %47, %49 : vector<2x8x8xf32>
    %c0_20 = arith.constant 0 : index
    %c1 = arith.constant 1 : index
    %51 = memref.load %arg5[%c0_20, %c1] : memref<4x4xf32, #tpu.memory_space<smem>>
    %52 = vector.broadcast %51 : f32 to vector<2x8x8xf32>
    %53 = arith.mulf %42, %52 : vector<2x8x8xf32>
    %54 = arith.addf %50, %53 : vector<2x8x8xf32>
    %c0_21 = arith.constant 0 : index
    %c2 = arith.constant 2 : index
    %55 = memref.load %arg5[%c0_21, %c2] : memref<4x4xf32, #tpu.memory_space<smem>>
    %56 = vector.broadcast %55 : f32 to vector<2x8x8xf32>
    %57 = arith.mulf %43, %56 : vector<2x8x8xf32>
    %58 = arith.addf %54, %57 : vector<2x8x8xf32>
    %c0_22 = arith.constant 0 : index
    %c3 = arith.constant 3 : index
    %59 = memref.load %arg5[%c0_22, %c3] : memref<4x4xf32, #tpu.memory_space<smem>>
    %60 = vector.broadcast %59 : f32 to vector<2x8x8xf32>
    %61 = arith.mulf %44, %60 : vector<2x8x8xf32>
    %62 = arith.addf %58, %61 : vector<2x8x8xf32>
    %c1_23 = arith.constant 1 : index
    %c0_24 = arith.constant 0 : index
    %63 = memref.load %arg5[%c1_23, %c0_24] : memref<4x4xf32, #tpu.memory_space<smem>>
    %64 = vector.broadcast %63 : f32 to vector<2x8x8xf32>
    %65 = arith.mulf %41, %64 : vector<2x8x8xf32>
    %c1_25 = arith.constant 1 : index
    %66 = memref.load %arg6[%c1_25] : memref<4xf32, #tpu.memory_space<smem>>
    %67 = vector.broadcast %66 : f32 to vector<2x8x8xf32>
    %68 = arith.addf %65, %67 : vector<2x8x8xf32>
    %c1_26 = arith.constant 1 : index
    %c1_27 = arith.constant 1 : index
    %69 = memref.load %arg5[%c1_26, %c1_27] : memref<4x4xf32, #tpu.memory_space<smem>>
    %70 = vector.broadcast %69 : f32 to vector<2x8x8xf32>
    %71 = arith.mulf %42, %70 : vector<2x8x8xf32>
    %72 = arith.addf %68, %71 : vector<2x8x8xf32>
    %c1_28 = arith.constant 1 : index
    %c2_29 = arith.constant 2 : index
    %73 = memref.load %arg5[%c1_28, %c2_29] : memref<4x4xf32, #tpu.memory_space<smem>>
    %74 = vector.broadcast %73 : f32 to vector<2x8x8xf32>
    %75 = arith.mulf %43, %74 : vector<2x8x8xf32>
    %76 = arith.addf %72, %75 : vector<2x8x8xf32>
    %c1_30 = arith.constant 1 : index
    %c3_31 = arith.constant 3 : index
    %77 = memref.load %arg5[%c1_30, %c3_31] : memref<4x4xf32, #tpu.memory_space<smem>>
    %78 = vector.broadcast %77 : f32 to vector<2x8x8xf32>
    %79 = arith.mulf %44, %78 : vector<2x8x8xf32>
    %80 = arith.addf %76, %79 : vector<2x8x8xf32>
    %c2_32 = arith.constant 2 : index
    %c0_33 = arith.constant 0 : index
    %81 = memref.load %arg5[%c2_32, %c0_33] : memref<4x4xf32, #tpu.memory_space<smem>>
    %82 = vector.broadcast %81 : f32 to vector<2x8x8xf32>
    %83 = arith.mulf %41, %82 : vector<2x8x8xf32>
    %c2_34 = arith.constant 2 : index
    %84 = memref.load %arg6[%c2_34] : memref<4xf32, #tpu.memory_space<smem>>
    %85 = vector.broadcast %84 : f32 to vector<2x8x8xf32>
    %86 = arith.addf %83, %85 : vector<2x8x8xf32>
    %c2_35 = arith.constant 2 : index
    %c1_36 = arith.constant 1 : index
    %87 = memref.load %arg5[%c2_35, %c1_36] : memref<4x4xf32, #tpu.memory_space<smem>>
    %88 = vector.broadcast %87 : f32 to vector<2x8x8xf32>
    %89 = arith.mulf %42, %88 : vector<2x8x8xf32>
    %90 = arith.addf %86, %89 : vector<2x8x8xf32>
    %c2_37 = arith.constant 2 : index
    %c2_38 = arith.constant 2 : index
    %91 = memref.load %arg5[%c2_37, %c2_38] : memref<4x4xf32, #tpu.memory_space<smem>>
    %92 = vector.broadcast %91 : f32 to vector<2x8x8xf32>
    %93 = arith.mulf %43, %92 : vector<2x8x8xf32>
    %94 = arith.addf %90, %93 : vector<2x8x8xf32>
    %c2_39 = arith.constant 2 : index
    %c3_40 = arith.constant 3 : index
    %95 = memref.load %arg5[%c2_39, %c3_40] : memref<4x4xf32, #tpu.memory_space<smem>>
    %96 = vector.broadcast %95 : f32 to vector<2x8x8xf32>
    %97 = arith.mulf %44, %96 : vector<2x8x8xf32>
    %98 = arith.addf %94, %97 : vector<2x8x8xf32>
    %c3_41 = arith.constant 3 : index
    %c0_42 = arith.constant 0 : index
    %99 = memref.load %arg5[%c3_41, %c0_42] : memref<4x4xf32, #tpu.memory_space<smem>>
    %100 = vector.broadcast %99 : f32 to vector<2x8x8xf32>
    %101 = arith.mulf %41, %100 : vector<2x8x8xf32>
    %c3_43 = arith.constant 3 : index
    %102 = memref.load %arg6[%c3_43] : memref<4xf32, #tpu.memory_space<smem>>
    %103 = vector.broadcast %102 : f32 to vector<2x8x8xf32>
    %104 = arith.addf %101, %103 : vector<2x8x8xf32>
    %c3_44 = arith.constant 3 : index
    %c1_45 = arith.constant 1 : index
    %105 = memref.load %arg5[%c3_44, %c1_45] : memref<4x4xf32, #tpu.memory_space<smem>>
    %106 = vector.broadcast %105 : f32 to vector<2x8x8xf32>
    %107 = arith.mulf %42, %106 : vector<2x8x8xf32>
    %108 = arith.addf %104, %107 : vector<2x8x8xf32>
    %c3_46 = arith.constant 3 : index
    %c2_47 = arith.constant 2 : index
    %109 = memref.load %arg5[%c3_46, %c2_47] : memref<4x4xf32, #tpu.memory_space<smem>>
    %110 = vector.broadcast %109 : f32 to vector<2x8x8xf32>
    %111 = arith.mulf %43, %110 : vector<2x8x8xf32>
    %112 = arith.addf %108, %111 : vector<2x8x8xf32>
    %c3_48 = arith.constant 3 : index
    %c3_49 = arith.constant 3 : index
    %113 = memref.load %arg5[%c3_48, %c3_49] : memref<4x4xf32, #tpu.memory_space<smem>>
    %114 = vector.broadcast %113 : f32 to vector<2x8x8xf32>
    %115 = arith.mulf %44, %114 : vector<2x8x8xf32>
    %116 = arith.addf %112, %115 : vector<2x8x8xf32>
    %cst_50 = arith.constant dense<0xFF800000> : vector<2x8xf32>
    %117 = vector.multi_reduction <maximumf>, %62, %cst_50 [2] : vector<2x8x8xf32> to vector<2x8xf32>
    %118 = vector.shape_cast %117 : vector<2x8xf32> to vector<2x8x1xf32>
    %119 = vector.broadcast %118 : vector<2x8x1xf32> to vector<2x8x8xf32>
    %120 = arith.subf %62, %119 : vector<2x8x8xf32>
    %121 = math.exp %120 : vector<2x8x8xf32>
    %cst_51 = arith.constant dense<0.000000e+00> : vector<2x8xf32>
    %122 = vector.multi_reduction <add>, %121, %cst_51 [2] : vector<2x8x8xf32> to vector<2x8xf32>
    %123 = vector.shape_cast %122 : vector<2x8xf32> to vector<2x8x1xf32>
    %124 = tpu.reciprocal %123 {approx = true} : vector<2x8x1xf32> -> vector<2x8x1xf32>
    %125 = vector.broadcast %124 : vector<2x8x1xf32> to vector<2x8x8xf32>
    %126 = arith.mulf %121, %125 : vector<2x8x8xf32>
    %cst_52 = arith.constant dense<0xFF800000> : vector<2x8xf32>
    %127 = vector.multi_reduction <maximumf>, %80, %cst_52 [2] : vector<2x8x8xf32> to vector<2x8xf32>
    %128 = vector.shape_cast %127 : vector<2x8xf32> to vector<2x8x1xf32>
    %129 = vector.broadcast %128 : vector<2x8x1xf32> to vector<2x8x8xf32>
    %130 = arith.subf %80, %129 : vector<2x8x8xf32>
    %131 = math.exp %130 : vector<2x8x8xf32>
    %cst_53 = arith.constant dense<0.000000e+00> : vector<2x8xf32>
    %132 = vector.multi_reduction <add>, %131, %cst_53 [2] : vector<2x8x8xf32> to vector<2x8xf32>
    %133 = vector.shape_cast %132 : vector<2x8xf32> to vector<2x8x1xf32>
    %134 = tpu.reciprocal %133 {approx = true} : vector<2x8x1xf32> -> vector<2x8x1xf32>
    %135 = vector.broadcast %134 : vector<2x8x1xf32> to vector<2x8x8xf32>
    %136 = arith.mulf %131, %135 : vector<2x8x8xf32>
    %cst_54 = arith.constant dense<0xFF800000> : vector<2x8xf32>
    %137 = vector.multi_reduction <maximumf>, %98, %cst_54 [2] : vector<2x8x8xf32> to vector<2x8xf32>
    %138 = vector.shape_cast %137 : vector<2x8xf32> to vector<2x8x1xf32>
    %139 = vector.broadcast %138 : vector<2x8x1xf32> to vector<2x8x8xf32>
    %140 = arith.subf %98, %139 : vector<2x8x8xf32>
    %141 = math.exp %140 : vector<2x8x8xf32>
    %cst_55 = arith.constant dense<0.000000e+00> : vector<2x8xf32>
    %142 = vector.multi_reduction <add>, %141, %cst_55 [2] : vector<2x8x8xf32> to vector<2x8xf32>
    %143 = vector.shape_cast %142 : vector<2x8xf32> to vector<2x8x1xf32>
    %144 = tpu.reciprocal %143 {approx = true} : vector<2x8x1xf32> -> vector<2x8x1xf32>
    %145 = vector.broadcast %144 : vector<2x8x1xf32> to vector<2x8x8xf32>
    %146 = arith.mulf %141, %145 : vector<2x8x8xf32>
    %cst_56 = arith.constant dense<0xFF800000> : vector<2x8xf32>
    %147 = vector.multi_reduction <maximumf>, %116, %cst_56 [2] : vector<2x8x8xf32> to vector<2x8xf32>
    %148 = vector.shape_cast %147 : vector<2x8xf32> to vector<2x8x1xf32>
    %149 = vector.broadcast %148 : vector<2x8x1xf32> to vector<2x8x8xf32>
    %150 = arith.subf %116, %149 : vector<2x8x8xf32>
    %151 = math.exp %150 : vector<2x8x8xf32>
    %cst_57 = arith.constant dense<0.000000e+00> : vector<2x8xf32>
    %152 = vector.multi_reduction <add>, %151, %cst_57 [2] : vector<2x8x8xf32> to vector<2x8xf32>
    %153 = vector.shape_cast %152 : vector<2x8xf32> to vector<2x8x1xf32>
    %154 = tpu.reciprocal %153 {approx = true} : vector<2x8x1xf32> -> vector<2x8x1xf32>
    %155 = vector.broadcast %154 : vector<2x8x1xf32> to vector<2x8x8xf32>
    %156 = arith.mulf %151, %155 : vector<2x8x8xf32>
    %c0_58 = arith.constant 0 : index
    %c0_59 = arith.constant 0 : index
    %157 = memref.load %arg7[%c0_58, %c0_59] : memref<4x4xf32, #tpu.memory_space<smem>>
    %158 = vector.broadcast %157 : f32 to vector<2x8x8xf32>
    %159 = arith.mulf %126, %158 : vector<2x8x8xf32>
    %c0_60 = arith.constant 0 : index
    %160 = memref.load %arg8[%c0_60] : memref<4xf32, #tpu.memory_space<smem>>
    %161 = vector.broadcast %160 : f32 to vector<2x8x8xf32>
    %162 = arith.addf %159, %161 : vector<2x8x8xf32>
    %c0_61 = arith.constant 0 : index
    %c1_62 = arith.constant 1 : index
    %163 = memref.load %arg7[%c0_61, %c1_62] : memref<4x4xf32, #tpu.memory_space<smem>>
    %164 = vector.broadcast %163 : f32 to vector<2x8x8xf32>
    %165 = arith.mulf %136, %164 : vector<2x8x8xf32>
    %166 = arith.addf %162, %165 : vector<2x8x8xf32>
    %c0_63 = arith.constant 0 : index
    %c2_64 = arith.constant 2 : index
    %167 = memref.load %arg7[%c0_63, %c2_64] : memref<4x4xf32, #tpu.memory_space<smem>>
    %168 = vector.broadcast %167 : f32 to vector<2x8x8xf32>
    %169 = arith.mulf %146, %168 : vector<2x8x8xf32>
    %170 = arith.addf %166, %169 : vector<2x8x8xf32>
    %c0_65 = arith.constant 0 : index
    %c3_66 = arith.constant 3 : index
    %171 = memref.load %arg7[%c0_65, %c3_66] : memref<4x4xf32, #tpu.memory_space<smem>>
    %172 = vector.broadcast %171 : f32 to vector<2x8x8xf32>
    %173 = arith.mulf %156, %172 : vector<2x8x8xf32>
    %174 = arith.addf %170, %173 : vector<2x8x8xf32>
    %c1_67 = arith.constant 1 : index
    %c0_68 = arith.constant 0 : index
    %175 = memref.load %arg7[%c1_67, %c0_68] : memref<4x4xf32, #tpu.memory_space<smem>>
    %176 = vector.broadcast %175 : f32 to vector<2x8x8xf32>
    %177 = arith.mulf %126, %176 : vector<2x8x8xf32>
    %c1_69 = arith.constant 1 : index
    %178 = memref.load %arg8[%c1_69] : memref<4xf32, #tpu.memory_space<smem>>
    %179 = vector.broadcast %178 : f32 to vector<2x8x8xf32>
    %180 = arith.addf %177, %179 : vector<2x8x8xf32>
    %c1_70 = arith.constant 1 : index
    %c1_71 = arith.constant 1 : index
    %181 = memref.load %arg7[%c1_70, %c1_71] : memref<4x4xf32, #tpu.memory_space<smem>>
    %182 = vector.broadcast %181 : f32 to vector<2x8x8xf32>
    %183 = arith.mulf %136, %182 : vector<2x8x8xf32>
    %184 = arith.addf %180, %183 : vector<2x8x8xf32>
    %c1_72 = arith.constant 1 : index
    %c2_73 = arith.constant 2 : index
    %185 = memref.load %arg7[%c1_72, %c2_73] : memref<4x4xf32, #tpu.memory_space<smem>>
    %186 = vector.broadcast %185 : f32 to vector<2x8x8xf32>
    %187 = arith.mulf %146, %186 : vector<2x8x8xf32>
    %188 = arith.addf %184, %187 : vector<2x8x8xf32>
    %c1_74 = arith.constant 1 : index
    %c3_75 = arith.constant 3 : index
    %189 = memref.load %arg7[%c1_74, %c3_75] : memref<4x4xf32, #tpu.memory_space<smem>>
    %190 = vector.broadcast %189 : f32 to vector<2x8x8xf32>
    %191 = arith.mulf %156, %190 : vector<2x8x8xf32>
    %192 = arith.addf %188, %191 : vector<2x8x8xf32>
    %c2_76 = arith.constant 2 : index
    %c0_77 = arith.constant 0 : index
    %193 = memref.load %arg7[%c2_76, %c0_77] : memref<4x4xf32, #tpu.memory_space<smem>>
    %194 = vector.broadcast %193 : f32 to vector<2x8x8xf32>
    %195 = arith.mulf %126, %194 : vector<2x8x8xf32>
    %c2_78 = arith.constant 2 : index
    %196 = memref.load %arg8[%c2_78] : memref<4xf32, #tpu.memory_space<smem>>
    %197 = vector.broadcast %196 : f32 to vector<2x8x8xf32>
    %198 = arith.addf %195, %197 : vector<2x8x8xf32>
    %c2_79 = arith.constant 2 : index
    %c1_80 = arith.constant 1 : index
    %199 = memref.load %arg7[%c2_79, %c1_80] : memref<4x4xf32, #tpu.memory_space<smem>>
    %200 = vector.broadcast %199 : f32 to vector<2x8x8xf32>
    %201 = arith.mulf %136, %200 : vector<2x8x8xf32>
    %202 = arith.addf %198, %201 : vector<2x8x8xf32>
    %c2_81 = arith.constant 2 : index
    %c2_82 = arith.constant 2 : index
    %203 = memref.load %arg7[%c2_81, %c2_82] : memref<4x4xf32, #tpu.memory_space<smem>>
    %204 = vector.broadcast %203 : f32 to vector<2x8x8xf32>
    %205 = arith.mulf %146, %204 : vector<2x8x8xf32>
    %206 = arith.addf %202, %205 : vector<2x8x8xf32>
    %c2_83 = arith.constant 2 : index
    %c3_84 = arith.constant 3 : index
    %207 = memref.load %arg7[%c2_83, %c3_84] : memref<4x4xf32, #tpu.memory_space<smem>>
    %208 = vector.broadcast %207 : f32 to vector<2x8x8xf32>
    %209 = arith.mulf %156, %208 : vector<2x8x8xf32>
    %210 = arith.addf %206, %209 : vector<2x8x8xf32>
    %c3_85 = arith.constant 3 : index
    %c0_86 = arith.constant 0 : index
    %211 = memref.load %arg7[%c3_85, %c0_86] : memref<4x4xf32, #tpu.memory_space<smem>>
    %212 = vector.broadcast %211 : f32 to vector<2x8x8xf32>
    %213 = arith.mulf %126, %212 : vector<2x8x8xf32>
    %c3_87 = arith.constant 3 : index
    %214 = memref.load %arg8[%c3_87] : memref<4xf32, #tpu.memory_space<smem>>
    %215 = vector.broadcast %214 : f32 to vector<2x8x8xf32>
    %216 = arith.addf %213, %215 : vector<2x8x8xf32>
    %c3_88 = arith.constant 3 : index
    %c1_89 = arith.constant 1 : index
    %217 = memref.load %arg7[%c3_88, %c1_89] : memref<4x4xf32, #tpu.memory_space<smem>>
    %218 = vector.broadcast %217 : f32 to vector<2x8x8xf32>
    %219 = arith.mulf %136, %218 : vector<2x8x8xf32>
    %220 = arith.addf %216, %219 : vector<2x8x8xf32>
    %c3_90 = arith.constant 3 : index
    %c2_91 = arith.constant 2 : index
    %221 = memref.load %arg7[%c3_90, %c2_91] : memref<4x4xf32, #tpu.memory_space<smem>>
    %222 = vector.broadcast %221 : f32 to vector<2x8x8xf32>
    %223 = arith.mulf %146, %222 : vector<2x8x8xf32>
    %224 = arith.addf %220, %223 : vector<2x8x8xf32>
    %c3_92 = arith.constant 3 : index
    %c3_93 = arith.constant 3 : index
    %225 = memref.load %arg7[%c3_92, %c3_93] : memref<4x4xf32, #tpu.memory_space<smem>>
    %226 = vector.broadcast %225 : f32 to vector<2x8x8xf32>
    %227 = arith.mulf %156, %226 : vector<2x8x8xf32>
    %228 = arith.addf %224, %227 : vector<2x8x8xf32>
    "tpu.trace_start"() <{level = 10 : i32, message = "bqk,bkd->bqd"}> : () -> ()
    %cst_94 = arith.constant dense<0.000000e+00> : vector<2x8x8xf32>
    %229 = tpu.matmul %174, %37, %cst_94 {dimension_numbers = #tpu.dot_dimension_numbers<[2], [1], [1], [2], [0, 0, 0, 1, 1, 2], [0], [0]>} : vector<2x8x8xf32>, vector<2x8x8xf32>, vector<2x8x8xf32> -> vector<2x8x8xf32>
    %cst_95 = arith.constant dense<0.000000e+00> : vector<2x8x8xf32>
    %230 = tpu.matmul %192, %38, %cst_95 {dimension_numbers = #tpu.dot_dimension_numbers<[2], [1], [1], [2], [0, 0, 0, 1, 1, 2], [0], [0]>} : vector<2x8x8xf32>, vector<2x8x8xf32>, vector<2x8x8xf32> -> vector<2x8x8xf32>
    %cst_96 = arith.constant dense<0.000000e+00> : vector<2x8x8xf32>
    %231 = tpu.matmul %210, %39, %cst_96 {dimension_numbers = #tpu.dot_dimension_numbers<[2], [1], [1], [2], [0, 0, 0, 1, 1, 2], [0], [0]>} : vector<2x8x8xf32>, vector<2x8x8xf32>, vector<2x8x8xf32> -> vector<2x8x8xf32>
    %cst_97 = arith.constant dense<0.000000e+00> : vector<2x8x8xf32>
    %232 = tpu.matmul %228, %40, %cst_97 {dimension_numbers = #tpu.dot_dimension_numbers<[2], [1], [1], [2], [0, 0, 0, 1, 1, 2], [0], [0]>} : vector<2x8x8xf32>, vector<2x8x8xf32>, vector<2x8x8xf32> -> vector<2x8x8xf32>
    "tpu.trace_stop"() : () -> ()
    %233 = tpu.concatenate %229, %230, %231, %232 in 2 : vector<2x8x8xf32>, vector<2x8x8xf32>, vector<2x8x8xf32>, vector<2x8x8xf32> -> vector<2x8x32xf32>
    %234 = vector.shape_cast %233 : vector<2x8x32xf32> to vector<16x32xf32>
    %c0_98 = arith.constant 0 : index
    %c0_99 = arith.constant 0 : index
    %235 = vector.load %arg9[%c0_98, %c0_99] : memref<32x32xf32, #tpu.memory_space<vmem>>, vector<32x32xf32>
    %cst_100 = arith.constant dense<0.000000e+00> : vector<16x32xf32>
    %236 = tpu.matmul %234, %235, %cst_100 {dimension_numbers = #tpu.dot_dimension_numbers<[1], [0], [0], [1], [0, 0, 1, 1], [], []>} : vector<16x32xf32>, vector<32x32xf32>, vector<16x32xf32> -> vector<16x32xf32>
    %c0_101 = arith.constant 0 : index
    %c0_102 = arith.constant 0 : index
    %237 = vector.load %arg10[%c0_101, %c0_102] : memref<1x32xf32, #tpu.memory_space<vmem>>, vector<1x32xf32>
    %238 = vector.broadcast %237 : vector<1x32xf32> to vector<16x32xf32>
    %239 = arith.addf %236, %238 : vector<16x32xf32>
    %240 = arith.addf %1, %239 : vector<16x32xf32>
    %cst_103 = arith.constant dense<0.000000e+00> : vector<16xf32>
    %241 = vector.multi_reduction <add>, %240, %cst_103 [1] : vector<16x32xf32> to vector<16xf32>
    %242 = vector.shape_cast %241 : vector<16xf32> to vector<16x1xf32>
    %cst_104 = arith.constant 3.200000e+01 : f32
    %243 = vector.broadcast %cst_104 : f32 to vector<16x1xf32>
    %244 = arith.divf %242, %243 : vector<16x1xf32>
    %245 = vector.broadcast %244 : vector<16x1xf32> to vector<16x32xf32>
    %246 = arith.subf %240, %245 : vector<16x32xf32>
    %247 = arith.mulf %246, %246 : vector<16x32xf32>
    %cst_105 = arith.constant dense<0.000000e+00> : vector<16xf32>
    %248 = vector.multi_reduction <add>, %247, %cst_105 [1] : vector<16x32xf32> to vector<16xf32>
    %249 = vector.shape_cast %248 : vector<16xf32> to vector<16x1xf32>
    %cst_106 = arith.constant 3.200000e+01 : f32
    %250 = vector.broadcast %cst_106 : f32 to vector<16x1xf32>
    %251 = arith.divf %249, %250 : vector<16x1xf32>
    %252 = vector.broadcast %244 : vector<16x1xf32> to vector<16x32xf32>
    %253 = arith.subf %240, %252 : vector<16x32xf32>
    %cst_107 = arith.constant 9.99999974E-6 : f32
    %254 = vector.broadcast %cst_107 : f32 to vector<16x1xf32>
    %255 = arith.addf %251, %254 : vector<16x1xf32>
    %256 = math.rsqrt %255 : vector<16x1xf32>
    %257 = vector.broadcast %256 : vector<16x1xf32> to vector<16x32xf32>
    %258 = arith.mulf %253, %257 : vector<16x32xf32>
    %c0_108 = arith.constant 0 : index
    %c0_109 = arith.constant 0 : index
    %259 = vector.load %arg11[%c0_108, %c0_109] : memref<32x128xf32, #tpu.memory_space<vmem>>, vector<32x128xf32>
    %cst_110 = arith.constant dense<0.000000e+00> : vector<16x128xf32>
    %260 = tpu.matmul %258, %259, %cst_110 {dimension_numbers = #tpu.dot_dimension_numbers<[1], [0], [0], [1], [0, 0, 1, 1], [], []>} : vector<16x32xf32>, vector<32x128xf32>, vector<16x128xf32> -> vector<16x128xf32>
    %c0_111 = arith.constant 0 : index
    %c0_112 = arith.constant 0 : index
    %261 = vector.load %arg12[%c0_111, %c0_112] : memref<1x128xf32, #tpu.memory_space<vmem>>, vector<1x128xf32>
    %262 = vector.broadcast %261 : vector<1x128xf32> to vector<16x128xf32>
    %263 = arith.addf %260, %262 : vector<16x128xf32>
    %cst_113 = arith.constant 5.000000e-01 : f32
    %264 = vector.broadcast %cst_113 : f32 to vector<16x128xf32>
    %265 = arith.mulf %264, %263 : vector<16x128xf32>
    %cst_114 = arith.constant 0.707106769 : f32
    %266 = vector.broadcast %cst_114 : f32 to vector<16x128xf32>
    %267 = arith.mulf %263, %266 : vector<16x128xf32>
    %268 = math.erf %267 : vector<16x128xf32>
    %cst_115 = arith.constant 1.000000e+00 : f32
    %269 = vector.broadcast %cst_115 : f32 to vector<16x128xf32>
    %270 = arith.addf %269, %268 : vector<16x128xf32>
    %271 = arith.mulf %265, %270 : vector<16x128xf32>
    %c0_116 = arith.constant 0 : index
    %c0_117 = arith.constant 0 : index
    %272 = vector.load %arg13[%c0_116, %c0_117] : memref<128x32xf32, #tpu.memory_space<vmem>>, vector<128x32xf32>
    %cst_118 = arith.constant dense<0.000000e+00> : vector<16x32xf32>
    %273 = tpu.matmul %271, %272, %cst_118 {dimension_numbers = #tpu.dot_dimension_numbers<[1], [0], [0], [1], [0, 0, 1, 1], [], []>} : vector<16x128xf32>, vector<128x32xf32>, vector<16x32xf32> -> vector<16x32xf32>
    %c0_119 = arith.constant 0 : index
    %c0_120 = arith.constant 0 : index
    %274 = vector.load %arg14[%c0_119, %c0_120] : memref<1x32xf32, #tpu.memory_space<vmem>>, vector<1x32xf32>
    %275 = vector.broadcast %274 : vector<1x32xf32> to vector<16x32xf32>
    %276 = arith.addf %273, %275 : vector<16x32xf32>
    %277 = arith.addf %240, %276 : vector<16x32xf32>
    %278 = vector.shape_cast %277 : vector<16x32xf32> to vector<2x8x32xf32>
    %c0_121 = arith.constant 0 : index
    %c0_122 = arith.constant 0 : index
    %c0_123 = arith.constant 0 : index
    %279 = vector.load %arg15[%c0_121, %c0_122, %c0_123] : memref<2x8x32xf32, #tpu.memory_space<vmem>>, vector<2x8x32xf32>
    tpu.vector_store %arg15[%c0_121, %c0_122, %c0_123], %278 {strides = array<i32>} : memref<2x8x32xf32, #tpu.memory_space<vmem>>, vector<2x8x32xf32>,
    return
  }
  func.func @transform_0(%arg0: i32) -> (i32, i32, i32) {
    %c0_i32 = arith.constant 0 : i32
    %c0_i32_0 = arith.constant 0 : i32
    %c0_i32_1 = arith.constant 0 : i32
    return %arg0, %c0_i32, %c0_i32_0 : i32, i32, i32
  }
  func.func @transform_1(%arg0: i32) -> (i32, i32) {
    %c0_i32 = arith.constant 0 : i32
    %c0_i32_0 = arith.constant 0 : i32
    %c0_i32_1 = arith.constant 0 : i32
    return %c0_i32, %c0_i32_0 : i32, i32
  }
  func.func @transform_2(%arg0: i32) -> (i32, i32) {
    %c0_i32 = arith.constant 0 : i32
    %c0_i32_0 = arith.constant 0 : i32
    %c0_i32_1 = arith.constant 0 : i32
    return %c0_i32, %c0_i32_0 : i32, i32
  }
  func.func @transform_3(%arg0: i32) -> (i32, i32) {
    %c0_i32 = arith.constant 0 : i32
    %c0_i32_0 = arith.constant 0 : i32
    %c0_i32_1 = arith.constant 0 : i32
    return %c0_i32, %c0_i32_0 : i32, i32
  }
  func.func @transform_4(%arg0: i32) -> (i32, i32) {
    %c0_i32 = arith.constant 0 : i32
    %c0_i32_0 = arith.constant 0 : i32
    %c0_i32_1 = arith.constant 0 : i32
    return %c0_i32, %c0_i32_0 : i32, i32
  }
  func.func @transform_5(%arg0: i32) -> i32 {
    %c0_i32 = arith.constant 0 : i32
    %c0_i32_0 = arith.constant 0 : i32
    return %c0_i32 : i32
  }
  func.func @transform_6(%arg0: i32) -> (i32, i32) {
    %c0_i32 = arith.constant 0 : i32
    %c0_i32_0 = arith.constant 0 : i32
    %c0_i32_1 = arith.constant 0 : i32
    return %c0_i32, %c0_i32_0 : i32, i32
  }
  func.func @transform_7(%arg0: i32) -> i32 {
    %c0_i32 = arith.constant 0 : i32
    %c0_i32_0 = arith.constant 0 : i32
    return %c0_i32 : i32
  }
  func.func @transform_8(%arg0: i32) -> (i32, i32) {
    %c0_i32 = arith.constant 0 : i32
    %c0_i32_0 = arith.constant 0 : i32
    %c0_i32_1 = arith.constant 0 : i32
    return %c0_i32, %c0_i32_0 : i32, i32
  }
  func.func @transform_9(%arg0: i32) -> (i32, i32) {
    %c0_i32 = arith.constant 0 : i32
    %c0_i32_0 = arith.constant 0 : i32
    %c0_i32_1 = arith.constant 0 : i32
    return %c0_i32, %c0_i32_0 : i32, i32
  }
  func.func @transform_10(%arg0: i32) -> (i32, i32) {
    %c0_i32 = arith.constant 0 : i32
    %c0_i32_0 = arith.constant 0 : i32
    %c0_i32_1 = arith.constant 0 : i32
    return %c0_i32, %c0_i32_0 : i32, i32
  }
  func.func @transform_11(%arg0: i32) -> (i32, i32) {
    %c0_i32 = arith.constant 0 : i32
    %c0_i32_0 = arith.constant 0 : i32
    %c0_i32_1 = arith.constant 0 : i32
    return %c0_i32, %c0_i32_0 : i32, i32
  }
  func.func @transform_12(%arg0: i32) -> (i32, i32) {
    %c0_i32 = arith.constant 0 : i32
    %c0_i32_0 = arith.constant 0 : i32
    %c0_i32_1 = arith.constant 0 : i32
    return %c0_i32, %c0_i32_0 : i32, i32
  }
  func.func @transform_13(%arg0: i32) -> (i32, i32) {
    %c0_i32 = arith.constant 0 : i32
    %c0_i32_0 = arith.constant 0 : i32
    %c0_i32_1 = arith.constant 0 : i32
    return %c0_i32, %c0_i32_0 : i32, i32
  }
  func.func @transform_14(%arg0: i32) -> (i32, i32, i32) {
    %c0_i32 = arith.constant 0 : i32
    %c0_i32_0 = arith.constant 0 : i32
    %c0_i32_1 = arith.constant 0 : i32
    return %arg0, %c0_i32, %c0_i32_0 : i32, i32, i32
  }
}

</mosaic_0001>

<llo_original>
// kernel: tpu_custom_call.1
$region0: #{tpu_custom_call.1}
  #allocation0 [shape = 'u32[]', space=smem, size = 0x4, offset = 0x4, fixed_abs, tag = 'smem constant byte address 0x4 - core index']
  #allocation1 [shape = 'u32[144,128]{1,0:T(1,128)}', space=vmem, size = 0x12000, scoped, tag = 'internal scratch']
  %s0 = inlined_call_operand.vmem [shape: f32[4,8,32], index: 0, kind: input, shape index: {}]
  %s1 = inlined_call_operand.vmem [shape: f32[1,32], index: 1, kind: input, shape index: {}]
  %s2 = inlined_call_operand.vmem [shape: f32[1,32], index: 2, kind: input, shape index: {}]
  %s3 = inlined_call_operand.vmem [shape: f32[32,96], index: 3, kind: input, shape index: {}]
  %s4 = inlined_call_operand.vmem [shape: f32[4,4], index: 4, kind: input, shape index: {}]
  %s5 = inlined_call_operand.vmem [shape: f32[4], index: 5, kind: input, shape index: {}]
  %s6 = inlined_call_operand.vmem [shape: f32[4,4], index: 6, kind: input, shape index: {}]
  %s7 = inlined_call_operand.vmem [shape: f32[4], index: 7, kind: input, shape index: {}]
  %s8 = inlined_call_operand.vmem [shape: f32[32,32], index: 8, kind: input, shape index: {}]
  %s9 = inlined_call_operand.vmem [shape: f32[1,32], index: 9, kind: input, shape index: {}]
  %s10 = inlined_call_operand.vmem [shape: f32[32,128], index: 10, kind: input, shape index: {}]
  %s11 = inlined_call_operand.vmem [shape: f32[1,128], index: 11, kind: input, shape index: {}]
  %s12 = inlined_call_operand.vmem [shape: f32[128,32], index: 12, kind: input, shape index: {}]
  %s13 = inlined_call_operand.vmem [shape: f32[1,32], index: 13, kind: input, shape index: {}]
  %s14 = inlined_call_operand.hbm [shape: f32[4,8,32], index: 14, kind: output, shape index: {}]
  %s15 = sld [smem:[#allocation0]]
  $region105: #{tpu_custom_call.1} parent=0
    _
  %s17 = ssub.s32 1, %s15
  %s18 = scalar_select 0, %s17, %s15
  $region1: #{tpu_custom_call.1} parent=0
    #allocation2 [shape = 'u8[2048]{0}', space=smem, size = 0x800, scoped, tag = 'input window, operand 4, single buffered']
    #allocation3 [shape = 's32[2]{0}', space=sflag, size = 0x8, scoped, tag = 'scoped memory for tpu_custom_call.1']
    #allocation4 [shape = 's32[2]{0}', space=sflag, size = 0x8, scoped, tag = 'scoped memory for tpu_custom_call.1']
    #allocation5 [shape = 'u8[512]{0}', space=smem, size = 0x200, scoped, tag = 'input window, operand 5, single buffered']
    #allocation6 [shape = 's32[1]{0}', space=sflag, size = 0x4, scoped, tag = 'scoped memory for tpu_custom_call.1']
    #allocation7 [shape = 'u8[2048]{0}', space=smem, size = 0x800, scoped, tag = 'input window, operand 6, single buffered']
    #allocation8 [shape = 'u8[512]{0}', space=smem, size = 0x200, scoped, tag = 'input window, operand 7, single buffered']
    #allocation9 [shape = 's32[1]{0}', space=sflag, size = 0x4, scoped, tag = 'scoped memory for tpu_custom_call.1']
    #allocation10 [shape = 'u8[16384]{0}', space=vmem, size = 0x4000, scoped, tag = 'output window, operand 0']
    %19 = vsyncpa [#allocation4], 0
    %20 = vsyncpa [#allocation6], 0
    %21 = vsyncpa [#allocation9], 0
    %22 = vsyncpa [#allocation3], 0
    %s23 = scalar_lea.sflag [#allocation3], 1
    %24 = vsyncpa %s23, 0
    loop: start=0, step=1, limit=4
    $region2: #{tpu_custom_call.1} parent=1 // loop_pre_header
      _
    $region3: #{tpu_custom_call.1} parent=1 // loop_header
      %s26 = sphi 0, %s30
      %p27 = scmp.ge.s32.totalorder %s26, 4
      %s36 = sphi 0, %s38
      %s39 = sphi 0, %s36
      %s40 = sphi 0, %s39
      %s56 = sphi 0, %s40
      %s60 = sphi 0, %s60
      %s62 = sphi 0, %s60
      %s63 = sphi 0, %s62
      %s77 = sphi 0, %s63
      %s81 = sphi 0, %s81
      %s83 = sphi 0, %s81
      %s84 = sphi 0, %s83
      %s98 = sphi 0, %s84
      %s102 = sphi 0, %s102
      %s104 = sphi 0, %s102
      %s105 = sphi 0, %s104
      %s119 = sphi 0, %s105
      %s123 = sphi 0, %s123
      %s125 = sphi 0, %s123
      %s126 = sphi 0, %s125
      %s140 = sphi 0, %s126
      %s144 = sphi 0, %s144
      %s146 = sphi 0, %s144
      %s147 = sphi 0, %s146
      %s161 = sphi 0, %s147
      %s165 = sphi 0, %s165
      %s167 = sphi 0, %s165
      %s168 = sphi 0, %s167
      %s182 = sphi 0, %s168
      %s186 = sphi 0, %s186
      %s188 = sphi 0, %s186
      %s189 = sphi 0, %s188
      %s203 = sphi 0, %s189
      %s207 = sphi 0, %s207
      %s209 = sphi 0, %s207
      %s210 = sphi 0, %s209
      %s224 = sphi 0, %s210
      %s228 = sphi 0, %s228
      %s230 = sphi 0, %s228
      %s231 = sphi 0, %s230
      %s245 = sphi 0, %s231
      %s249 = sphi 0, %s249
      %s251 = sphi 0, %s249
      %s252 = sphi 0, %s251
      %s266 = sphi 0, %s252
      %s270 = sphi 0, %s270
      %s272 = sphi 0, %s270
      %s273 = sphi 0, %s272
      %s287 = sphi 0, %s273
      %s291 = sphi 0, %s291
      %s293 = sphi 0, %s291
      %s294 = sphi 0, %s293
      %s308 = sphi 0, %s294
      %s312 = sphi 0, %s312
      %s314 = sphi 0, %s312
      %s315 = sphi 0, %s314
      %s329 = sphi 0, %s315
      %s335 = sphi 0, %s337
      %s338 = sphi 0, %s335
      %s339 = sphi 0, %s338
      %s355 = sphi 0, %s339
    $region4: #{tpu_custom_call.1} parent=1 // loop_header_branch
      %29 = sbr.rel (%p27) target = $region8
    $region5: #{tpu_custom_call.1} parent=1 // loop_body
      %s31 = ssub.s32 %s26, 1
      %s32 = ssub.s32 %s26, 2
      %s33 = sadd.s32 %s26, 1
      %s34 = ssub.s32 %s26, %s33
      %p35 = scmp.eq.s32.totalorder %s34, 0
      %s37 = sadd.s32 %s36, 1
      %s38 = scalar_select %p35, %s36, %s37
      %p41 = pneg %p35
      %p42 = scmp.eq.s32.totalorder %s26, 1
      %p43 = por %p41, %p42
      %p44 = scmp.ne.s32.totalorder %s36, %s39
      %p45 = scmp.eq.s32.totalorder %s26, 0
      %p46 = por %p44, %p45
      %p47 = scmp.ne.s32.totalorder %s36, %s39
      %p48 = scmp.eq.s32.totalorder %s31, 1
      %p49 = por %p47, %p48
      %p50 = scmp.ne.s32.totalorder %s39, %s40
      %p51 = scmp.eq.s32.totalorder %s31, 0
      %p52 = por %p50, %p51
      %p53 = scmp.ne.s32.totalorder %s39, %s40
      %p54 = scmp.eq.s32.totalorder %s32, 1
      %p55 = por %p53, %p54
      %p57 = scmp.ne.s32.totalorder %s40, %s56
      %p58 = scmp.eq.s32.totalorder %s32, 0
      %p59 = por %p57, %p58
      %s61 = sadd.s32 %s60, 1
      %p64 = scmp.eq.s32.totalorder %s26, 1
      %p65 = scmp.ne.s32.totalorder %s60, %s62
      %p66 = scmp.eq.s32.totalorder %s26, 0
      %p67 = por %p65, %p66
      %p68 = scmp.ne.s32.totalorder %s60, %s62
      %p69 = scmp.eq.s32.totalorder %s31, 1
      %p70 = por %p68, %p69
      %p71 = scmp.ne.s32.totalorder %s62, %s63
      %p72 = scmp.eq.s32.totalorder %s31, 0
      %p73 = por %p71, %p72
      %p74 = scmp.ne.s32.totalorder %s62, %s63
      %p75 = scmp.eq.s32.totalorder %s32, 1
      %p76 = por %p74, %p75
      %p78 = scmp.ne.s32.totalorder %s63, %s77
      %p79 = scmp.eq.s32.totalorder %s32, 0
      %p80 = por %p78, %p79
      %s82 = sadd.s32 %s81, 1
      %p85 = scmp.eq.s32.totalorder %s26, 1
      %p86 = scmp.ne.s32.totalorder %s81, %s83
      %p87 = scmp.eq.s32.totalorder %s26, 0
      %p88 = por %p86, %p87
      %p89 = scmp.ne.s32.totalorder %s81, %s83
      %p90 = scmp.eq.s32.totalorder %s31, 1
      %p91 = por %p89, %p90
      %p92 = scmp.ne.s32.totalorder %s83, %s84
      %p93 = scmp.eq.s32.totalorder %s31, 0
      %p94 = por %p92, %p93
      %p95 = scmp.ne.s32.totalorder %s83, %s84
      %p96 = scmp.eq.s32.totalorder %s32, 1
      %p97 = por %p95, %p96
      %p99 = scmp.ne.s32.totalorder %s84, %s98
      %p100 = scmp.eq.s32.totalorder %s32, 0
      %p101 = por %p99, %p100
      %s103 = sadd.s32 %s102, 1
      %p106 = scmp.eq.s32.totalorder %s26, 1
      %p107 = scmp.ne.s32.totalorder %s102, %s104
      %p108 = scmp.eq.s32.totalorder %s26, 0
      %p109 = por %p107, %p108
      %p110 = scmp.ne.s32.totalorder %s102, %s104
      %p111 = scmp.eq.s32.totalorder %s31, 1
      %p112 = por %p110, %p111
      %p113 = scmp.ne.s32.totalorder %s104, %s105
      %p114 = scmp.eq.s32.totalorder %s31, 0
      %p115 = por %p113, %p114
      %p116 = scmp.ne.s32.totalorder %s104, %s105
      %p117 = scmp.eq.s32.totalorder %s32, 1
      %p118 = por %p116, %p117
      %p120 = scmp.ne.s32.totalorder %s105, %s119
      %p121 = scmp.eq.s32.totalorder %s32, 0
      %p122 = por %p120, %p121
      %s124 = sadd.s32 %s123, 1
      %p127 = scmp.eq.s32.totalorder %s26, 1
      %p128 = scmp.ne.s32.totalorder %s123, %s125
      %p129 = scmp.eq.s32.totalorder %s26, 0
      %p130 = por %p128, %p129
      %p131 = scmp.ne.s32.totalorder %s123, %s125
      %p132 = scmp.eq.s32.totalorder %s31, 1
      %p133 = por %p131, %p132
      %p134 = scmp.ne.s32.totalorder %s125, %s126
      %p135 = scmp.eq.s32.totalorder %s31, 0
      %p136 = por %p134, %p135
      %p137 = scmp.ne.s32.totalorder %s125, %s126
      %p138 = scmp.eq.s32.totalorder %s32, 1
      %p139 = por %p137, %p138
      %p141 = scmp.ne.s32.totalorder %s126, %s140
      %p142 = scmp.eq.s32.totalorder %s32, 0
      %p143 = por %p141, %p142
      %s145 = sadd.s32 %s144, 1
      %p148 = scmp.eq.s32.totalorder %s26, 1
      %p149 = scmp.ne.s32.totalorder %s144, %s146
      %p150 = scmp.eq.s32.totalorder %s26, 0
      %p151 = por %p149, %p150
      %p152 = scmp.ne.s32.totalorder %s144, %s146
      %p153 = scmp.eq.s32.totalorder %s31, 1
      %p154 = por %p152, %p153
      %p155 = scmp.ne.s32.totalorder %s146, %s147
      %p156 = scmp.eq.s32.totalorder %s31, 0
      %p157 = por %p155, %p156
      %p158 = scmp.ne.s32.totalorder %s146, %s147
      %p159 = scmp.eq.s32.totalorder %s32, 1
      %p160 = por %p158, %p159
      %p162 = scmp.ne.s32.totalorder %s147, %s161
      %p163 = scmp.eq.s32.totalorder %s32, 0
      %p164 = por %p162, %p163
      %s166 = sadd.s32 %s165, 1
      %p169 = scmp.eq.s32.totalorder %s26, 1
      %p170 = scmp.ne.s32.totalorder %s165, %s167
      %p171 = scmp.eq.s32.totalorder %s26, 0
      %p172 = por %p170, %p171
      %p173 = scmp.ne.s32.totalorder %s165, %s167
      %p174 = scmp.eq.s32.totalorder %s31, 1
      %p175 = por %p173, %p174
      %p176 = scmp.ne.s32.totalorder %s167, %s168
      %p177 = scmp.eq.s32.totalorder %s31, 0
      %p178 = por %p176, %p177
      %p179 = scmp.ne.s32.totalorder %s167, %s168
      %p180 = scmp.eq.s32.totalorder %s32, 1
      %p181 = por %p179, %p180
      %p183 = scmp.ne.s32.totalorder %s168, %s182
      %p184 = scmp.eq.s32.totalorder %s32, 0
      %p185 = por %p183, %p184
      %s187 = sadd.s32 %s186, 1
      %p190 = scmp.eq.s32.totalorder %s26, 1
      %p191 = scmp.ne.s32.totalorder %s186, %s188
      %p192 = scmp.eq.s32.totalorder %s26, 0
      %p193 = por %p191, %p192
      %p194 = scmp.ne.s32.totalorder %s186, %s188
      %p195 = scmp.eq.s32.totalorder %s31, 1
      %p196 = por %p194, %p195
      %p197 = scmp.ne.s32.totalorder %s188, %s189
      %p198 = scmp.eq.s32.totalorder %s31, 0
      %p199 = por %p197, %p198
      %p200 = scmp.ne.s32.totalorder %s188, %s189
      %p201 = scmp.eq.s32.totalorder %s32, 1
      %p202 = por %p200, %p201
      %p204 = scmp.ne.s32.totalorder %s189, %s203
      %p205 = scmp.eq.s32.totalorder %s32, 0
      %p206 = por %p204, %p205
      %s208 = sadd.s32 %s207, 1
      %p211 = scmp.eq.s32.totalorder %s26, 1
      %p212 = scmp.ne.s32.totalorder %s207, %s209
      %p213 = scmp.eq.s32.totalorder %s26, 0
      %p214 = por %p212, %p213
      %p215 = scmp.ne.s32.totalorder %s207, %s209
      %p216 = scmp.eq.s32.totalorder %s31, 1
      %p217 = por %p215, %p216
      %p218 = scmp.ne.s32.totalorder %s209, %s210
      %p219 = scmp.eq.s32.totalorder %s31, 0
      %p220 = por %p218, %p219
      %p221 = scmp.ne.s32.totalorder %s209, %s210
      %p222 = scmp.eq.s32.totalorder %s32, 1
      %p223 = por %p221, %p222
      %p225 = scmp.ne.s32.totalorder %s210, %s224
      %p226 = scmp.eq.s32.totalorder %s32, 0
      %p227 = por %p225, %p226
      %s229 = sadd.s32 %s228, 1
      %p232 = scmp.eq.s32.totalorder %s26, 1
      %p233 = scmp.ne.s32.totalorder %s228, %s230
      %p234 = scmp.eq.s32.totalorder %s26, 0
      %p235 = por %p233, %p234
      %p236 = scmp.ne.s32.totalorder %s228, %s230
      %p237 = scmp.eq.s32.totalorder %s31, 1
      %p238 = por %p236, %p237
      %p239 = scmp.ne.s32.totalorder %s230, %s231
      %p240 = scmp.eq.s32.totalorder %s31, 0
      %p241 = por %p239, %p240
      %p242 = scmp.ne.s32.totalorder %s230, %s231
      %p243 = scmp.eq.s32.totalorder %s32, 1
      %p244 = por %p242, %p243
      %p246 = scmp.ne.s32.totalorder %s231, %s245
      %p247 = scmp.eq.s32.totalorder %s32, 0
      %p248 = por %p246, %p247
      %s250 = sadd.s32 %s249, 1
      %p253 = scmp.eq.s32.totalorder %s26, 1
      %p254 = scmp.ne.s32.totalorder %s249, %s251
      %p255 = scmp.eq.s32.totalorder %s26, 0
      %p256 = por %p254, %p255
      %p257 = scmp.ne.s32.totalorder %s249, %s251
      %p258 = scmp.eq.s32.totalorder %s31, 1
      %p259 = por %p257, %p258
      %p260 = scmp.ne.s32.totalorder %s251, %s252
      %p261 = scmp.eq.s32.totalorder %s31, 0
      %p262 = por %p260, %p261
      %p263 = scmp.ne.s32.totalorder %s251, %s252
      %p264 = scmp.eq.s32.totalorder %s32, 1
      %p265 = por %p263, %p264
      %p267 = scmp.ne.s32.totalorder %s252, %s266
      %p268 = scmp.eq.s32.totalorder %s32, 0
      %p269 = por %p267, %p268
      %s271 = sadd.s32 %s270, 1
      %p274 = scmp.eq.s32.totalorder %s26, 1
      %p275 = scmp.ne.s32.totalorder %s270, %s272
      %p276 = scmp.eq.s32.totalorder %s26, 0
      %p277 = por %p275, %p276
      %p278 = scmp.ne.s32.totalorder %s270, %s272
      %p279 = scmp.eq.s32.totalorder %s31, 1
      %p280 = por %p278, %p279
      %p281 = scmp.ne.s32.totalorder %s272, %s273
      %p282 = scmp.eq.s32.totalorder %s31, 0
      %p283 = por %p281, %p282
      %p284 = scmp.ne.s32.totalorder %s272, %s273
      %p285 = scmp.eq.s32.totalorder %s32, 1
      %p286 = por %p284, %p285
      %p288 = scmp.ne.s32.totalorder %s273, %s287
      %p289 = scmp.eq.s32.totalorder %s32, 0
      %p290 = por %p288, %p289
      %s292 = sadd.s32 %s291, 1
      %p295 = scmp.eq.s32.totalorder %s26, 1
      %p296 = scmp.ne.s32.totalorder %s291, %s293
      %p297 = scmp.eq.s32.totalorder %s26, 0
      %p298 = por %p296, %p297
      %p299 = scmp.ne.s32.totalorder %s291, %s293
      %p300 = scmp.eq.s32.totalorder %s31, 1
      %p301 = por %p299, %p300
      %p302 = scmp.ne.s32.totalorder %s293, %s294
      %p303 = scmp.eq.s32.totalorder %s31, 0
      %p304 = por %p302, %p303
      %p305 = scmp.ne.s32.totalorder %s293, %s294
      %p306 = scmp.eq.s32.totalorder %s32, 1
      %p307 = por %p305, %p306
      %p309 = scmp.ne.s32.totalorder %s294, %s308
      %p310 = scmp.eq.s32.totalorder %s32, 0
      %p311 = por %p309, %p310
      %s313 = sadd.s32 %s312, 1
      %p316 = scmp.eq.s32.totalorder %s26, 1
      %p317 = scmp.ne.s32.totalorder %s312, %s314
      %p318 = scmp.eq.s32.totalorder %s26, 0
      %p319 = por %p317, %p318
      %p320 = scmp.ne.s32.totalorder %s312, %s314
      %p321 = scmp.eq.s32.totalorder %s31, 1
      %p322 = por %p320, %p321
      %p323 = scmp.ne.s32.totalorder %s314, %s315
      %p324 = scmp.eq.s32.totalorder %s31, 0
      %p325 = por %p323, %p324
      %p326 = scmp.ne.s32.totalorder %s314, %s315
      %p327 = scmp.eq.s32.totalorder %s32, 1
      %p328 = por %p326, %p327
      %p330 = scmp.ne.s32.totalorder %s315, %s329
      %p331 = scmp.eq.s32.totalorder %s32, 0
      %p332 = por %p330, %p331
      %s333 = ssub.s32 %s26, %s33
      %p334 = scmp.eq.s32.totalorder %s333, 0
      %s336 = sadd.s32 %s335, 1
      %s337 = scalar_select %p334, %s335, %s336
      %p340 = pneg %p334
      %p341 = scmp.eq.s32.totalorder %s26, 1
      %p342 = por %p340, %p341
      %p343 = scmp.ne.s32.totalorder %s335, %s338
      %p344 = scmp.eq.s32.totalorder %s26, 0
      %p345 = por %p343, %p344
      %p346 = scmp.ne.s32.totalorder %s335, %s338
      %p347 = scmp.eq.s32.totalorder %s31, 1
      %p348 = por %p346, %p347
      %p349 = scmp.ne.s32.totalorder %s338, %s339
      %p350 = scmp.eq.s32.totalorder %s31, 0
      %p351 = por %p349, %p350
      %p352 = scmp.ne.s32.totalorder %s338, %s339
      %p353 = scmp.eq.s32.totalorder %s32, 1
      %p354 = por %p352, %p353
      %p356 = scmp.ne.s32.totalorder %s339, %s355
      %p357 = scmp.eq.s32.totalorder %s32, 0
      %p358 = por %p356, %p357
      %p359 = scmp.le.s32.totalorder 1, %s26
      %p360 = scmp.lt.s32.totalorder %s26, 3
      %p361 = pnand %p359, %p360
      %p362 = pneg %p361
      // Predicated region
      $region9: #{tpu_custom_call.1} parent=5 // pred_check
        _
      $region10: #{tpu_custom_call.1} parent=5 // pred_check_branch
        %364 = sbr.rel (%p361) target = $region12
      $region11: #{tpu_custom_call.1} parent=5 // pred_region
        %s365 = ssub.s32 %s26, 1
        // Predicated region
        $region13: #{tpu_custom_call.1} parent=11 // pred_check
          %p366 = pneg %p73
        $region14: #{tpu_custom_call.1} parent=11 // pred_check_branch
          %368 = sbr.rel (%p366) target = $region16
        $region15: #{tpu_custom_call.1} parent=11 // pred_region
          _
        $region16: #{tpu_custom_call.1} parent=11 // pred_fallthru
          _
        // Predicated region
        $region17: #{tpu_custom_call.1} parent=11 // pred_check
          %p369 = pneg %p94
        $region18: #{tpu_custom_call.1} parent=11 // pred_check_branch
          %371 = sbr.rel (%p369) target = $region20
        $region19: #{tpu_custom_call.1} parent=11 // pred_region
          _
        $region20: #{tpu_custom_call.1} parent=11 // pred_fallthru
          _
        // Predicated region
        $region21: #{tpu_custom_call.1} parent=11 // pred_check
          %p372 = pneg %p115
        $region22: #{tpu_custom_call.1} parent=11 // pred_check_branch
          %374 = sbr.rel (%p372) target = $region24
        $region23: #{tpu_custom_call.1} parent=11 // pred_region
          _
        $region24: #{tpu_custom_call.1} parent=11 // pred_fallthru
          _
        // Predicated region
        $region25: #{tpu_custom_call.1} parent=11 // pred_check
          %p375 = pneg %p136
        $region26: #{tpu_custom_call.1} parent=11 // pred_check_branch
          %377 = sbr.rel (%p375) target = $region28
        $region27: #{tpu_custom_call.1} parent=11 // pred_region
          %s379 = ssub.s32 64, 64
          %380 = vsyncadd [#allocation4], %s379
          %s382 = sshll.u32 %s4, 4
          %s383 = int_to_ptr.vmem [resolvable:$true] %s382
          %385 = dma.vmem_to_smem %s383, 64, [#allocation2], [#allocation4]
        $region28: #{tpu_custom_call.1} parent=11 // pred_fallthru
          _
        // Predicated region
        $region29: #{tpu_custom_call.1} parent=11 // pred_check
          %p386 = pneg %p157
        $region30: #{tpu_custom_call.1} parent=11 // pred_check_branch
          %388 = sbr.rel (%p386) target = $region32
        $region31: #{tpu_custom_call.1} parent=11 // pred_region
          %s390 = ssub.s32 16, 16
          %391 = vsyncadd [#allocation6], %s390
          %s393 = sshll.u32 %s5, 4
          %s394 = int_to_ptr.vmem [resolvable:$true] %s393
          %396 = dma.vmem_to_smem %s394, 16, [#allocation5], [#allocation6]
        $region32: #{tpu_custom_call.1} parent=11 // pred_fallthru
          _
        // Predicated region
        $region33: #{tpu_custom_call.1} parent=11 // pred_check
          %p397 = pneg %p178
        $region34: #{tpu_custom_call.1} parent=11 // pred_check_branch
          %399 = sbr.rel (%p397) target = $region36
        $region35: #{tpu_custom_call.1} parent=11 // pred_region
          %s401 = ssub.s32 64, 64
          %402 = vsyncadd [#allocation6], %s401
          %s404 = sshll.u32 %s6, 4
          %s405 = int_to_ptr.vmem [resolvable:$true] %s404
          %407 = dma.vmem_to_smem %s405, 64, [#allocation7], [#allocation6]
        $region36: #{tpu_custom_call.1} parent=11 // pred_fallthru
          _
        // Predicated region
        $region37: #{tpu_custom_call.1} parent=11 // pred_check
          %p408 = pneg %p199
        $region38: #{tpu_custom_call.1} parent=11 // pred_check_branch
          %410 = sbr.rel (%p408) target = $region40
        $region39: #{tpu_custom_call.1} parent=11 // pred_region
          %s412 = ssub.s32 16, 16
          %413 = vsyncadd [#allocation9], %s412
          %s415 = sshll.u32 %s7, 4
          %s416 = int_to_ptr.vmem [resolvable:$true] %s415
          %418 = dma.vmem_to_smem %s416, 16, [#allocation8], [#allocation9]
        $region40: #{tpu_custom_call.1} parent=11 // pred_fallthru
          _
        // Predicated region
        $region41: #{tpu_custom_call.1} parent=11 // pred_check
          %p419 = pneg %p220
        $region42: #{tpu_custom_call.1} parent=11 // pred_check_branch
          %421 = sbr.rel (%p419) target = $region44
        $region43: #{tpu_custom_call.1} parent=11 // pred_region
          _
        $region44: #{tpu_custom_call.1} parent=11 // pred_fallthru
          _
        // Predicated region
        $region45: #{tpu_custom_call.1} parent=11 // pred_check
          %p422 = pneg %p241
        $region46: #{tpu_custom_call.1} parent=11 // pred_check_branch
          %424 = sbr.rel (%p422) target = $region48
        $region47: #{tpu_custom_call.1} parent=11 // pred_region
          _
        $region48: #{tpu_custom_call.1} parent=11 // pred_fallthru
          _
        // Predicated region
        $region49: #{tpu_custom_call.1} parent=11 // pred_check
          %p425 = pneg %p262
        $region50: #{tpu_custom_call.1} parent=11 // pred_check_branch
          %427 = sbr.rel (%p425) target = $region52
        $region51: #{tpu_custom_call.1} parent=11 // pred_region
          _
        $region52: #{tpu_custom_call.1} parent=11 // pred_fallthru
          _
        // Predicated region
        $region53: #{tpu_custom_call.1} parent=11 // pred_check
          %p428 = pneg %p283
        $region54: #{tpu_custom_call.1} parent=11 // pred_check_branch
          %430 = sbr.rel (%p428) target = $region56
        $region55: #{tpu_custom_call.1} parent=11 // pred_region
          _
        $region56: #{tpu_custom_call.1} parent=11 // pred_fallthru
          _
        // Predicated region
        $region57: #{tpu_custom_call.1} parent=11 // pred_check
          %p431 = pneg %p304
        $region58: #{tpu_custom_call.1} parent=11 // pred_check_branch
          %433 = sbr.rel (%p431) target = $region60
        $region59: #{tpu_custom_call.1} parent=11 // pred_region
          _
        $region60: #{tpu_custom_call.1} parent=11 // pred_fallthru
          _
        // Predicated region
        $region61: #{tpu_custom_call.1} parent=11 // pred_check
          %p434 = pneg %p325
        $region62: #{tpu_custom_call.1} parent=11 // pred_check_branch
          %436 = sbr.rel (%p434) target = $region64
        $region63: #{tpu_custom_call.1} parent=11 // pred_region
          _
        $region64: #{tpu_custom_call.1} parent=11 // pred_fallthru
          _
      $region12: #{tpu_custom_call.1} parent=5 // pred_fallthru
        _
      %p437 = scmp.lt.s32.totalorder %s26, 2
      // Predicated region
      $region65: #{tpu_custom_call.1} parent=5 // pred_check
        %p438 = pneg %p437
      $region66: #{tpu_custom_call.1} parent=5 // pred_check_branch
        %440 = sbr.rel (%p438) target = $region68
      $region67: #{tpu_custom_call.1} parent=5 // pred_region
        // Predicated region
        $region69: #{tpu_custom_call.1} parent=67 // pred_check
          %p441 = pneg %p46
        $region70: #{tpu_custom_call.1} parent=67 // pred_check_branch
          %443 = sbr.rel (%p441) target = $region72
        $region71: #{tpu_custom_call.1} parent=67 // pred_region
          %s444 = smul.u32 2, %s26
          %p445 = scmp.lt.s32.totalorder %s444, 3
          %s446 = scalar_select %p445, %s444, 3
          %s447 = smul.addr %s446, 8
          %s448 = scalar_lea.vmem %s0, %s447
          %s449 = smul.u32 2, %s26
        $region72: #{tpu_custom_call.1} parent=67 // pred_fallthru
          _
      $region68: #{tpu_custom_call.1} parent=5 // pred_fallthru
        _
      %p450 = scmp.le.s32.totalorder 1, %s26
      %p451 = scmp.lt.s32.totalorder %s26, 3
      %p452 = pnand %p450, %p451
      %p453 = pneg %p452
      // Predicated region
      $region73: #{tpu_custom_call.1} parent=5 // pred_check
        _
      $region74: #{tpu_custom_call.1} parent=5 // pred_check_branch
        %455 = sbr.rel (%p452) target = $region76
      $region75: #{tpu_custom_call.1} parent=5 // pred_region
        %s456 = ssub.s32 %s26, 1
        // Predicated region
        $region77: #{tpu_custom_call.1} parent=75 // pred_check
          %p457 = pneg %p136
        $region78: #{tpu_custom_call.1} parent=75 // pred_check_branch
          %459 = sbr.rel (%p457) target = $region80
        $region79: #{tpu_custom_call.1} parent=75 // pred_region
          %460 = dma.done [#allocation4], 64
        $region80: #{tpu_custom_call.1} parent=75 // pred_fallthru
          _
        // Predicated region
        $region81: #{tpu_custom_call.1} parent=75 // pred_check
          %p461 = pneg %p157
        $region82: #{tpu_custom_call.1} parent=75 // pred_check_branch
          %463 = sbr.rel (%p461) target = $region84
        $region83: #{tpu_custom_call.1} parent=75 // pred_region
          %464 = dma.done [#allocation6], 16
        $region84: #{tpu_custom_call.1} parent=75 // pred_fallthru
          _
        // Predicated region
        $region85: #{tpu_custom_call.1} parent=75 // pred_check
          %p465 = pneg %p178
        $region86: #{tpu_custom_call.1} parent=75 // pred_check_branch
          %467 = sbr.rel (%p465) target = $region88
        $region87: #{tpu_custom_call.1} parent=75 // pred_region
          %468 = dma.done [#allocation6], 64
        $region88: #{tpu_custom_call.1} parent=75 // pred_fallthru
          _
        // Predicated region
        $region89: #{tpu_custom_call.1} parent=75 // pred_check
          %p469 = pneg %p199
        $region90: #{tpu_custom_call.1} parent=75 // pred_check_branch
          %471 = sbr.rel (%p469) target = $region92
        $region91: #{tpu_custom_call.1} parent=75 // pred_region
          %472 = dma.done [#allocation9], 16
        $region92: #{tpu_custom_call.1} parent=75 // pred_fallthru
          _
        %473 = sfence
        %s474 = smul.u32 2, %s31
        %p475 = scmp.lt.s32.totalorder %s474, 3
        %s476 = scalar_select %p475, %s474, 3
        %s477 = smul.addr %s476, 8
        %s478 = scalar_lea.vmem %s0, %s477
        %p479 = pneg %p52
        %p480 = pneg %p49
        %p481 = pneg %p73
        %p482 = pneg %p70
        %p483 = pneg %p94
        %p484 = pneg %p91
        %p485 = pneg %p115
        %p486 = pneg %p112
        %p487 = pneg %p136
        %p488 = pneg %p133
        %p489 = pneg %p157
        %p490 = pneg %p154
        %p491 = pneg %p178
        %p492 = pneg %p175
        %p493 = pneg %p199
        %p494 = pneg %p196
        %p495 = pneg %p220
        %p496 = pneg %p217
        %p497 = pneg %p241
        %p498 = pneg %p238
        %p499 = pneg %p262
        %p500 = pneg %p259
        %p501 = pneg %p283
        %p502 = pneg %p280
        %p503 = pneg %p304
        %p504 = pneg %p301
        %p505 = pneg %p325
        %p506 = pneg %p322
        %p507 = pneg %p351
        %p508 = pneg %p348
        %s509 = sand.u32 %s338, 1
        %s510 = scalar_lea.sflag [#allocation3], %s509
        %s511 = sand.u32 %s338, 1
        %s512 = smul.addr %s511, 16
        %s513 = scalar_lea.vmem [#allocation10], %s512
        %s514 = smul.u32 2, %s31
        %p515 = scmp.lt.s32.totalorder %s514, 3
        %s516 = scalar_select %p515, %s514, 3
        %s517 = smul.addr %s516, 8
        %s518 = scalar_lea.vmem %s0, %s517
        %s519 = smul.u32 2, %s31
        %s520 = smul.u32 2, %s31
        %v521 = vld [vmem:[%s518] sm:$0xff]
        %v522 = vld [vmem:[%s518 + $0x8] sm:$0xff]
        %v523 = vld [vmem:[%s1] sm:$0x1]
        %v524 = vld [vmem:[%s2] sm:$0x1]
        %vm525 = vcmask 261120
        %v526 = vsel %vm525, %v521, 0.0
        %527 = vadd.xlane.f32.xlu0 %v526
        %v528 = vpop.xlane.xlu0 %527
        %v529 = vsel %vm525, %v522, 0.0
        %530 = vadd.xlane.f32.xlu0 %v529
        %v531 = vpop.xlane.xlu0 %530
        %v532 = vrcp.pop 32.0
        %v533 = vmul.f32 %v528, %v532
        %v534 = vmul.f32 %v531, %v532
        %v535 = vsub.f32 %v521, %v533
        %v536 = vsub.f32 %v522, %v534
        %v537 = vmul.f32 %v535, %v535
        %v538 = vmul.f32 %v536, %v536
        %v539 = vsel %vm525, %v537, 0.0
        %540 = vadd.xlane.f32.xlu0 %v539
        %v541 = vpop.xlane.xlu0 %540
        %v542 = vsel %vm525, %v538, 0.0
        %543 = vadd.xlane.f32.xlu0 %v542
        %v544 = vpop.xlane.xlu0 %543
        %v545 = vmul.f32 %v541, %v532
        %v546 = vmul.f32 %v544, %v532
        %v547 = vadd.f32 %v545, 1e-05
        %v548 = vadd.f32 %v546, 1e-05
        %v549 = vrsqrt.pop %v547
        %v550 = vrsqrt.pop %v548
        %v551 = vmul.f32 %v535, %v549
        %v552 = vmul.f32 %v536, %v550
        %v554 = vlaneseq
        %v555 = vshrl.u32 %v554, 7
        %v556 = vsub.s32 0, %v555
        %v557 = vrot.slane %v523, %v556
        %v559 = vmul.f32 %v551, %v557
        %v560 = vmul.f32 %v552, %v557
        %v562 = vlaneseq
        %v563 = vshrl.u32 %v562, 7
        %v564 = vsub.s32 0, %v563
        %v565 = vrot.slane %v524, %v564
        %v567 = vadd.f32 %v559, %v565
        %v568 = vadd.f32 %v560, %v565
        %v569 = vld [vmem:[%s3] sm:$0xff]
        %v570 = vld [vmem:[%s3 + $0x8] sm:$0xff]
        %v571 = vld [vmem:[%s3 + $0x10] sm:$0xff]
        %v572 = vld [vmem:[%s3 + $0x18] sm:$0xff]
        %v574 = vsel %vm525, %v567, 0
        %v577 = vsel %vm525, %v568, 0
        %579 = vmatprep.subr.mxu0 0.0
        %580 = vmatpush1.msra.mxu0 0.0
        %581 = vmatprep.subr.mxu0 0.0
        %582 = vmatpush1.msra.mxu0 0.0
        %583 = vmatprep.subr.mxu0 0.0
        %584 = vmatpush1.msra.mxu0 0.0
        %585 = vmatprep.subr.mxu0 0.0
        %586 = vmatpush1.msra.mxu0 0.0
        %587 = vmatprep.subr.mxu0 0.0
        %588 = vmatpush1.msra.mxu0 0.0
        %589 = vmatprep.subr.mxu0 0.0
        %590 = vmatpush1.msra.mxu0 0.0
        %591 = vmatprep.subr.mxu0 0.0
        %592 = vmatpush1.msra.mxu0 0.0
        %593 = vmatprep.subr.mxu0 0.0
        %594 = vmatpush1.msra.mxu0 0.0
        %595 = vmatprep.subr.mxu0 0.0
        %596 = vmatpush1.msra.mxu0 0.0
        %597 = vmatprep.subr.mxu0 0.0
        %598 = vmatpush1.msra.mxu0 0.0
        %599 = vmatprep.subr.mxu0 0.0
        %600 = vmatpush1.msra.mxu0 0.0
        %601 = vmatprep.subr.mxu0 0.0
        %602 = vmatpush1.msra.mxu0 0.0
        %603 = vmatprep.subr.mxu0 0.0
        %604 = vmatpush1.msra.mxu0 %v572
        %605 = vmatprep.subr.mxu0 0.0
        %606 = vmatpush1.msra.mxu0 %v571
        %607 = vmatprep.subr.mxu0 0.0
        %608 = vmatpush1.msra.mxu0 %v570
        %609 = vmatprep.subr.mxu0 0.0
        %610 = vmatpush1.msra.mxu0 %v569
        %611 = vmatprep.subr.mxu0 0.0
        %612 = vmatpush2.msra.mxu0 0.0
        %613 = vmatprep.subr.mxu0 0.0
        %614 = vmatpush2.msra.mxu0 0.0
        %615 = vmatprep.subr.mxu0 0.0
        %616 = vmatpush2.msra.mxu0 0.0
        %617 = vmatprep.subr.mxu0 0.0
        %618 = vmatpush2.msra.mxu0 0.0
        %619 = vmatprep.subr.mxu0 0.0
        %620 = vmatpush2.msra.mxu0 0.0
        %621 = vmatprep.subr.mxu0 0.0
        %622 = vmatpush2.msra.mxu0 0.0
        %623 = vmatprep.subr.mxu0 0.0
        %624 = vmatpush2.msra.mxu0 0.0
        %625 = vmatprep.subr.mxu0 0.0
        %626 = vmatpush2.msra.mxu0 0.0
        %627 = vmatprep.subr.mxu0 0.0
        %628 = vmatpush2.msra.mxu0 0.0
        %629 = vmatprep.subr.mxu0 0.0
        %630 = vmatpush2.msra.mxu0 0.0
        %631 = vmatprep.subr.mxu0 0.0
        %632 = vmatpush2.msra.mxu0 0.0
        %633 = vmatprep.subr.mxu0 0.0
        %634 = vmatpush2.msra.mxu0 0.0
        %635 = vmatprep.subr.mxu0 0.0
        %636 = vmatpush2.msra.mxu0 0.0
        %637 = vmatprep.subr.mxu0 0.0
        %638 = vmatpush2.msra.mxu0 0.0
        %639 = vmatprep.subr.mxu0 0.0
        %640 = vmatpush2.msra.mxu0 0.0
        %641 = vmatprep.subr.mxu0 0.0
        %642 = vmatpush2.msra.mxu0 0.0
        %643 = vmatprep.mubr.f32.mxu0 0.0
        %644 = vmatmul.mubr.f32.gmra.mxu0 %v574
        %v645 = vpop.f32.mrf.mxu0
        %v646 = vadd.f32 0.0, %v645
        %v647 = vpop.f32.mrf.mxu0
        %648 = vmatprep.mubr.f32.mxu0 0.0
        %649 = vmatmul.mubr.f32.gmra.mxu0 %v577
        %v650 = vpop.f32.mrf.mxu0
        %v651 = vadd.f32 0.0, %v650
        %v652 = vpop.f32.mrf.mxu0
        %653 = vdwg.mxu0
        %655 = vrot.lane.b32.xlu0 %v646, 96
        %v656 = vpop.permute.xlu0 %655
        %vm657 = vcmask 64512
        %v658 = vsel %vm657, %v646, 0
        %v660 = vsel %vm657, %v656, 0
        %662 = vmatprep.subr.mxu0 0.0
        %663 = vmatpush1.xpose.msra.mxu0 0.0
        %664 = vmatprep.subr.mxu0 0.0
        %665 = vmatpush1.xpose.msra.mxu0 0.0
        %666 = vmatprep.subr.mxu0 0.0
        %667 = vmatpush1.xpose.msra.mxu0 0.0
        %668 = vmatprep.subr.mxu0 0.0
        %669 = vmatpush1.xpose.msra.mxu0 0.0
        %670 = vmatprep.subr.mxu0 0.0
        %671 = vmatpush1.xpose.msra.mxu0 0.0
        %672 = vmatprep.subr.mxu0 0.0
        %673 = vmatpush1.xpose.msra.mxu0 0.0
        %674 = vmatprep.subr.mxu0 0.0
        %675 = vmatpush1.xpose.msra.mxu0 0.0
        %676 = vmatprep.subr.mxu0 0.0
        %677 = vmatpush1.xpose.msra.mxu0 0.0
        %678 = vmatprep.subr.mxu0 0.0
        %679 = vmatpush1.xpose.msra.mxu0 0.0
        %680 = vmatprep.subr.mxu0 0.0
        %681 = vmatpush1.xpose.msra.mxu0 0.0
        %682 = vmatprep.subr.mxu0 0.0
        %683 = vmatpush1.xpose.msra.mxu0 0.0
        %684 = vmatprep.subr.mxu0 0.0
        %685 = vmatpush1.xpose.msra.mxu0 0.0
        %686 = vmatprep.subr.mxu0 0.0
        %687 = vmatpush1.xpose.msra.mxu0 0.0
        %688 = vmatprep.subr.mxu0 0.0
        %689 = vmatpush1.xpose.msra.mxu0 0.0
        %690 = vmatprep.subr.mxu0 0.0
        %691 = vmatpush1.xpose.msra.mxu0 0.0
        %692 = vmatprep.subr.mxu0 0.0
        %693 = vmatpush1.xpose.msra.mxu0 %v660
        %694 = vmatprep.subr.mxu0 0.0
        %695 = vmatpush2.xpose.msra.mxu0 0.0
        %696 = vmatprep.subr.mxu0 0.0
        %697 = vmatpush2.xpose.msra.mxu0 0.0
        %698 = vmatprep.subr.mxu0 0.0
        %699 = vmatpush2.xpose.msra.mxu0 0.0
        %700 = vmatprep.subr.mxu0 0.0
        %701 = vmatpush2.xpose.msra.mxu0 0.0
        %702 = vmatprep.subr.mxu0 0.0
        %703 = vmatpush2.xpose.msra.mxu0 0.0
        %704 = vmatprep.subr.mxu0 0.0
        %705 = vmatpush2.xpose.msra.mxu0 0.0
        %706 = vmatprep.subr.mxu0 0.0
        %707 = vmatpush2.xpose.msra.mxu0 0.0
        %708 = vmatprep.subr.mxu0 0.0
        %709 = vmatpush2.xpose.msra.mxu0 0.0
        %710 = vmatprep.subr.mxu0 0.0
        %711 = vmatpush2.xpose.msra.mxu0 0.0
        %712 = vmatprep.subr.mxu0 0.0
        %713 = vmatpush2.xpose.msra.mxu0 0.0
        %714 = vmatprep.subr.mxu0 0.0
        %715 = vmatpush2.xpose.msra.mxu0 0.0
        %716 = vmatprep.subr.mxu0 0.0
        %717 = vmatpush2.xpose.msra.mxu0 0.0
        %718 = vmatprep.subr.mxu0 0.0
        %719 = vmatpush2.xpose.msra.mxu0 0.0
        %720 = vmatprep.subr.mxu0 0.0
        %721 = vmatpush2.xpose.msra.mxu0 0.0
        %722 = vmatprep.subr.mxu0 0.0
        %723 = vmatpush2.xpose.msra.mxu0 0.0
        %724 = vmatprep.subr.mxu0 0.0
        %725 = vmatpush2.xpose.msra.mxu0 0.0
        %726 = vmatprep.mubr.f32.mxu0 0.0
        %727 = vmatmul.mubr.f32.gmra.mxu0 %v658
        %v728 = vpop.f32.mrf.mxu0
        %v729 = vadd.f32 0.0, %v728
        %v730 = vpop.f32.mrf.mxu0
        %731 = vdwg.mxu0
        %733 = vrot.lane.b32.xlu0 %v651, 96
        %v734 = vpop.permute.xlu0 %733
        %v735 = vsel %vm657, %v651, 0
        %v737 = vsel %vm657, %v734, 0
        %739 = vmatprep.subr.mxu0 0.0
        %740 = vmatpush1.xpose.msra.mxu0 0.0
        %741 = vmatprep.subr.mxu0 0.0
        %742 = vmatpush1.xpose.msra.mxu0 0.0
        %743 = vmatprep.subr.mxu0 0.0
        %744 = vmatpush1.xpose.msra.mxu0 0.0
        %745 = vmatprep.subr.mxu0 0.0
        %746 = vmatpush1.xpose.msra.mxu0 0.0
        %747 = vmatprep.subr.mxu0 0.0
        %748 = vmatpush1.xpose.msra.mxu0 0.0
        %749 = vmatprep.subr.mxu0 0.0
        %750 = vmatpush1.xpose.msra.mxu0 0.0
        %751 = vmatprep.subr.mxu0 0.0
        %752 = vmatpush1.xpose.msra.mxu0 0.0
        %753 = vmatprep.subr.mxu0 0.0
        %754 = vmatpush1.xpose.msra.mxu0 0.0
        %755 = vmatprep.subr.mxu0 0.0
        %756 = vmatpush1.xpose.msra.mxu0 0.0
        %757 = vmatprep.subr.mxu0 0.0
        %758 = vmatpush1.xpose.msra.mxu0 0.0
        %759 = vmatprep.subr.mxu0 0.0
        %760 = vmatpush1.xpose.msra.mxu0 0.0
        %761 = vmatprep.subr.mxu0 0.0
        %762 = vmatpush1.xpose.msra.mxu0 0.0
        %763 = vmatprep.subr.mxu0 0.0
        %764 = vmatpush1.xpose.msra.mxu0 0.0
        %765 = vmatprep.subr.mxu0 0.0
        %766 = vmatpush1.xpose.msra.mxu0 0.0
        %767 = vmatprep.subr.mxu0 0.0
        %768 = vmatpush1.xpose.msra.mxu0 0.0
        %769 = vmatprep.subr.mxu0 0.0
        %770 = vmatpush1.xpose.msra.mxu0 %v737
        %771 = vmatprep.subr.mxu0 0.0
        %772 = vmatpush2.xpose.msra.mxu0 0.0
        %773 = vmatprep.subr.mxu0 0.0
        %774 = vmatpush2.xpose.msra.mxu0 0.0
        %775 = vmatprep.subr.mxu0 0.0
        %776 = vmatpush2.xpose.msra.mxu0 0.0
        %777 = vmatprep.subr.mxu0 0.0
        %778 = vmatpush2.xpose.msra.mxu0 0.0
        %779 = vmatprep.subr.mxu0 0.0
        %780 = vmatpush2.xpose.msra.mxu0 0.0
        %781 = vmatprep.subr.mxu0 0.0
        %782 = vmatpush2.xpose.msra.mxu0 0.0
        %783 = vmatprep.subr.mxu0 0.0
        %784 = vmatpush2.xpose.msra.mxu0 0.0
        %785 = vmatprep.subr.mxu0 0.0
        %786 = vmatpush2.xpose.msra.mxu0 0.0
        %787 = vmatprep.subr.mxu0 0.0
        %788 = vmatpush2.xpose.msra.mxu0 0.0
        %789 = vmatprep.subr.mxu0 0.0
        %790 = vmatpush2.xpose.msra.mxu0 0.0
        %791 = vmatprep.subr.mxu0 0.0
        %792 = vmatpush2.xpose.msra.mxu0 0.0
        %793 = vmatprep.subr.mxu0 0.0
        %794 = vmatpush2.xpose.msra.mxu0 0.0
        %795 = vmatprep.subr.mxu0 0.0
        %796 = vmatpush2.xpose.msra.mxu0 0.0
        %797 = vmatprep.subr.mxu0 0.0
        %798 = vmatpush2.xpose.msra.mxu0 0.0
        %799 = vmatprep.subr.mxu0 0.0
        %800 = vmatpush2.xpose.msra.mxu0 0.0
        %801 = vmatprep.subr.mxu0 0.0
        %802 = vmatpush2.xpose.msra.mxu0 0.0
        %803 = vmatprep.mubr.f32.mxu0 0.0
        %804 = vmatmul.mubr.f32.gmra.mxu0 %v735
        %v805 = vpop.f32.mrf.mxu0
        %v806 = vadd.f32 0.0, %v805
        %v807 = vpop.f32.mrf.mxu0
        %808 = vdwg.mxu0
        %809 = vrot.lane.b32.xlu0 %v646, 120
        %v810 = vpop.permute.xlu0 %809
        %811 = vrot.lane.b32.xlu0 %v646, 88
        %v812 = vpop.permute.xlu0 %811
        %v813 = vsel %vm657, %v810, 0
        %v815 = vsel %vm657, %v812, 0
        %817 = vmatprep.subr.mxu0 0.0
        %818 = vmatpush1.xpose.msra.mxu0 0.0
        %819 = vmatprep.subr.mxu0 0.0
        %820 = vmatpush1.xpose.msra.mxu0 0.0
        %821 = vmatprep.subr.mxu0 0.0
        %822 = vmatpush1.xpose.msra.mxu0 0.0
        %823 = vmatprep.subr.mxu0 0.0
        %824 = vmatpush1.xpose.msra.mxu0 0.0
        %825 = vmatprep.subr.mxu0 0.0
        %826 = vmatpush1.xpose.msra.mxu0 0.0
        %827 = vmatprep.subr.mxu0 0.0
        %828 = vmatpush1.xpose.msra.mxu0 0.0
        %829 = vmatprep.subr.mxu0 0.0
        %830 = vmatpush1.xpose.msra.mxu0 0.0
        %831 = vmatprep.subr.mxu0 0.0
        %832 = vmatpush1.xpose.msra.mxu0 0.0
        %833 = vmatprep.subr.mxu0 0.0
        %834 = vmatpush1.xpose.msra.mxu0 0.0
        %835 = vmatprep.subr.mxu0 0.0
        %836 = vmatpush1.xpose.msra.mxu0 0.0
        %837 = vmatprep.subr.mxu0 0.0
        %838 = vmatpush1.xpose.msra.mxu0 0.0
        %839 = vmatprep.subr.mxu0 0.0
        %840 = vmatpush1.xpose.msra.mxu0 0.0
        %841 = vmatprep.subr.mxu0 0.0
        %842 = vmatpush1.xpose.msra.mxu0 0.0
        %843 = vmatprep.subr.mxu0 0.0
        %844 = vmatpush1.xpose.msra.mxu0 0.0
        %845 = vmatprep.subr.mxu0 0.0
        %846 = vmatpush1.xpose.msra.mxu0 0.0
        %847 = vmatprep.subr.mxu0 0.0
        %848 = vmatpush1.xpose.msra.mxu0 %v815
        %849 = vmatprep.subr.mxu0 0.0
        %850 = vmatpush2.xpose.msra.mxu0 0.0
        %851 = vmatprep.subr.mxu0 0.0
        %852 = vmatpush2.xpose.msra.mxu0 0.0
        %853 = vmatprep.subr.mxu0 0.0
        %854 = vmatpush2.xpose.msra.mxu0 0.0
        %855 = vmatprep.subr.mxu0 0.0
        %856 = vmatpush2.xpose.msra.mxu0 0.0
        %857 = vmatprep.subr.mxu0 0.0
        %858 = vmatpush2.xpose.msra.mxu0 0.0
        %859 = vmatprep.subr.mxu0 0.0
        %860 = vmatpush2.xpose.msra.mxu0 0.0
        %861 = vmatprep.subr.mxu0 0.0
        %862 = vmatpush2.xpose.msra.mxu0 0.0
        %863 = vmatprep.subr.mxu0 0.0
        %864 = vmatpush2.xpose.msra.mxu0 0.0
        %865 = vmatprep.subr.mxu0 0.0
        %866 = vmatpush2.xpose.msra.mxu0 0.0
        %867 = vmatprep.subr.mxu0 0.0
        %868 = vmatpush2.xpose.msra.mxu0 0.0
        %869 = vmatprep.subr.mxu0 0.0
        %870 = vmatpush2.xpose.msra.mxu0 0.0
        %871 = vmatprep.subr.mxu0 0.0
        %872 = vmatpush2.xpose.msra.mxu0 0.0
        %873 = vmatprep.subr.mxu0 0.0
        %874 = vmatpush2.xpose.msra.mxu0 0.0
        %875 = vmatprep.subr.mxu0 0.0
        %876 = vmatpush2.xpose.msra.mxu0 0.0
        %877 = vmatprep.subr.mxu0 0.0
        %878 = vmatpush2.xpose.msra.mxu0 0.0
        %879 = vmatprep.subr.mxu0 0.0
        %880 = vmatpush2.xpose.msra.mxu0 0.0
        %881 = vmatprep.mubr.f32.mxu0 0.0
        %882 = vmatmul.mubr.f32.gmra.mxu0 %v813
        %v883 = vpop.f32.mrf.mxu0
        %v884 = vadd.f32 0.0, %v883
        %v885 = vpop.f32.mrf.mxu0
        %886 = vdwg.mxu0
        %887 = vrot.lane.b32.xlu0 %v651, 120
        %v888 = vpop.permute.xlu0 %887
        %889 = vrot.lane.b32.xlu0 %v651, 88
        %v890 = vpop.permute.xlu0 %889
        %v891 = vsel %vm657, %v888, 0
        %v893 = vsel %vm657, %v890, 0
        %895 = vmatprep.subr.mxu0 0.0
        %896 = vmatpush1.xpose.msra.mxu0 0.0
        %897 = vmatprep.subr.mxu0 0.0
        %898 = vmatpush1.xpose.msra.mxu0 0.0
        %899 = vmatprep.subr.mxu0 0.0
        %900 = vmatpush1.xpose.msra.mxu0 0.0
        %901 = vmatprep.subr.mxu0 0.0
        %902 = vmatpush1.xpose.msra.mxu0 0.0
        %903 = vmatprep.subr.mxu0 0.0
        %904 = vmatpush1.xpose.msra.mxu0 0.0
        %905 = vmatprep.subr.mxu0 0.0
        %906 = vmatpush1.xpose.msra.mxu0 0.0
        %907 = vmatprep.subr.mxu0 0.0
        %908 = vmatpush1.xpose.msra.mxu0 0.0
        %909 = vmatprep.subr.mxu0 0.0
        %910 = vmatpush1.xpose.msra.mxu0 0.0
        %911 = vmatprep.subr.mxu0 0.0
        %912 = vmatpush1.xpose.msra.mxu0 0.0
        %913 = vmatprep.subr.mxu0 0.0
        %914 = vmatpush1.xpose.msra.mxu0 0.0
        %915 = vmatprep.subr.mxu0 0.0
        %916 = vmatpush1.xpose.msra.mxu0 0.0
        %917 = vmatprep.subr.mxu0 0.0
        %918 = vmatpush1.xpose.msra.mxu0 0.0
        %919 = vmatprep.subr.mxu0 0.0
        %920 = vmatpush1.xpose.msra.mxu0 0.0
        %921 = vmatprep.subr.mxu0 0.0
        %922 = vmatpush1.xpose.msra.mxu0 0.0
        %923 = vmatprep.subr.mxu0 0.0
        %924 = vmatpush1.xpose.msra.mxu0 0.0
        %925 = vmatprep.subr.mxu0 0.0
        %926 = vmatpush1.xpose.msra.mxu0 %v893
        %927 = vmatprep.subr.mxu0 0.0
        %928 = vmatpush2.xpose.msra.mxu0 0.0
        %929 = vmatprep.subr.mxu0 0.0
        %930 = vmatpush2.xpose.msra.mxu0 0.0
        %931 = vmatprep.subr.mxu0 0.0
        %932 = vmatpush2.xpose.msra.mxu0 0.0
        %933 = vmatprep.subr.mxu0 0.0
        %934 = vmatpush2.xpose.msra.mxu0 0.0
        %935 = vmatprep.subr.mxu0 0.0
        %936 = vmatpush2.xpose.msra.mxu0 0.0
        %937 = vmatprep.subr.mxu0 0.0
        %938 = vmatpush2.xpose.msra.mxu0 0.0
        %939 = vmatprep.subr.mxu0 0.0
        %940 = vmatpush2.xpose.msra.mxu0 0.0
        %941 = vmatprep.subr.mxu0 0.0
        %942 = vmatpush2.xpose.msra.mxu0 0.0
        %943 = vmatprep.subr.mxu0 0.0
        %944 = vmatpush2.xpose.msra.mxu0 0.0
        %945 = vmatprep.subr.mxu0 0.0
        %946 = vmatpush2.xpose.msra.mxu0 0.0
        %947 = vmatprep.subr.mxu0 0.0
        %948 = vmatpush2.xpose.msra.mxu0 0.0
        %949 = vmatprep.subr.mxu0 0.0
        %950 = vmatpush2.xpose.msra.mxu0 0.0
        %951 = vmatprep.subr.mxu0 0.0
        %952 = vmatpush2.xpose.msra.mxu0 0.0
        %953 = vmatprep.subr.mxu0 0.0
        %954 = vmatpush2.xpose.msra.mxu0 0.0
        %955 = vmatprep.subr.mxu0 0.0
        %956 = vmatpush2.xpose.msra.mxu0 0.0
        %957 = vmatprep.subr.mxu0 0.0
        %958 = vmatpush2.xpose.msra.mxu0 0.0
        %959 = vmatprep.mubr.f32.mxu0 0.0
        %960 = vmatmul.mubr.f32.gmra.mxu0 %v891
        %v961 = vpop.f32.mrf.mxu0
        %v962 = vadd.f32 0.0, %v961
        %v963 = vpop.f32.mrf.mxu0
        %964 = vdwg.mxu0
        %965 = vrot.lane.b32.xlu0 %v646, 112
        %v966 = vpop.permute.xlu0 %965
        %967 = vrot.lane.b32.xlu0 %v646, 80
        %v968 = vpop.permute.xlu0 %967
        %v969 = vsel %vm657, %v966, 0
        %v971 = vsel %vm657, %v968, 0
        %973 = vmatprep.subr.mxu0 0.0
        %974 = vmatpush1.xpose.msra.mxu0 0.0
        %975 = vmatprep.subr.mxu0 0.0
        %976 = vmatpush1.xpose.msra.mxu0 0.0
        %977 = vmatprep.subr.mxu0 0.0
        %978 = vmatpush1.xpose.msra.mxu0 0.0
        %979 = vmatprep.subr.mxu0 0.0
        %980 = vmatpush1.xpose.msra.mxu0 0.0
        %981 = vmatprep.subr.mxu0 0.0
        %982 = vmatpush1.xpose.msra.mxu0 0.0
        %983 = vmatprep.subr.mxu0 0.0
        %984 = vmatpush1.xpose.msra.mxu0 0.0
        %985 = vmatprep.subr.mxu0 0.0
        %986 = vmatpush1.xpose.msra.mxu0 0.0
        %987 = vmatprep.subr.mxu0 0.0
        %988 = vmatpush1.xpose.msra.mxu0 0.0
        %989 = vmatprep.subr.mxu0 0.0
        %990 = vmatpush1.xpose.msra.mxu0 0.0
        %991 = vmatprep.subr.mxu0 0.0
        %992 = vmatpush1.xpose.msra.mxu0 0.0
        %993 = vmatprep.subr.mxu0 0.0
        %994 = vmatpush1.xpose.msra.mxu0 0.0
        %995 = vmatprep.subr.mxu0 0.0
        %996 = vmatpush1.xpose.msra.mxu0 0.0
        %997 = vmatprep.subr.mxu0 0.0
        %998 = vmatpush1.xpose.msra.mxu0 0.0
        %999 = vmatprep.subr.mxu0 0.0
        %1000 = vmatpush1.xpose.msra.mxu0 0.0
        %1001 = vmatprep.subr.mxu0 0.0
        %1002 = vmatpush1.xpose.msra.mxu0 0.0
        %1003 = vmatprep.subr.mxu0 0.0
        %1004 = vmatpush1.xpose.msra.mxu0 %v971
        %1005 = vmatprep.subr.mxu0 0.0
        %1006 = vmatpush2.xpose.msra.mxu0 0.0
        %1007 = vmatprep.subr.mxu0 0.0
        %1008 = vmatpush2.xpose.msra.mxu0 0.0
        %1009 = vmatprep.subr.mxu0 0.0
        %1010 = vmatpush2.xpose.msra.mxu0 0.0
        %1011 = vmatprep.subr.mxu0 0.0
        %1012 = vmatpush2.xpose.msra.mxu0 0.0
        %1013 = vmatprep.subr.mxu0 0.0
        %1014 = vmatpush2.xpose.msra.mxu0 0.0
        %1015 = vmatprep.subr.mxu0 0.0
        %1016 = vmatpush2.xpose.msra.mxu0 0.0
        %1017 = vmatprep.subr.mxu0 0.0
        %1018 = vmatpush2.xpose.msra.mxu0 0.0
        %1019 = vmatprep.subr.mxu0 0.0
        %1020 = vmatpush2.xpose.msra.mxu0 0.0
        %1021 = vmatprep.subr.mxu0 0.0
        %1022 = vmatpush2.xpose.msra.mxu0 0.0
        %1023 = vmatprep.subr.mxu0 0.0
        %1024 = vmatpush2.xpose.msra.mxu0 0.0
        %1025 = vmatprep.subr.mxu0 0.0
        %1026 = vmatpush2.xpose.msra.mxu0 0.0
        %1027 = vmatprep.subr.mxu0 0.0
        %1028 = vmatpush2.xpose.msra.mxu0 0.0
        %1029 = vmatprep.subr.mxu0 0.0
        %1030 = vmatpush2.xpose.msra.mxu0 0.0
        %1031 = vmatprep.subr.mxu0 0.0
        %1032 = vmatpush2.xpose.msra.mxu0 0.0
        %1033 = vmatprep.subr.mxu0 0.0
        %1034 = vmatpush2.xpose.msra.mxu0 0.0
        %1035 = vmatprep.subr.mxu0 0.0
        %1036 = vmatpush2.xpose.msra.mxu0 0.0
        %1037 = vmatprep.mubr.f32.mxu0 0.0
        %1038 = vmatmul.mubr.f32.gmra.mxu0 %v969
        %v1039 = vpop.f32.mrf.mxu0
        %v1040 = vadd.f32 0.0, %v1039
        %v1041 = vpop.f32.mrf.mxu0
        %1042 = vdwg.mxu0
        %1043 = vrot.lane.b32.xlu0 %v651, 112
        %v1044 = vpop.permute.xlu0 %1043
        %1045 = vrot.lane.b32.xlu0 %v651, 80
        %v1046 = vpop.permute.xlu0 %1045
        %v1047 = vsel %vm657, %v1044, 0
        %v1049 = vsel %vm657, %v1046, 0
        %1051 = vmatprep.subr.mxu0 0.0
        %1052 = vmatpush1.xpose.msra.mxu0 0.0
        %1053 = vmatprep.subr.mxu0 0.0
        %1054 = vmatpush1.xpose.msra.mxu0 0.0
        %1055 = vmatprep.subr.mxu0 0.0
        %1056 = vmatpush1.xpose.msra.mxu0 0.0
        %1057 = vmatprep.subr.mxu0 0.0
        %1058 = vmatpush1.xpose.msra.mxu0 0.0
        %1059 = vmatprep.subr.mxu0 0.0
        %1060 = vmatpush1.xpose.msra.mxu0 0.0
        %1061 = vmatprep.subr.mxu0 0.0
        %1062 = vmatpush1.xpose.msra.mxu0 0.0
        %1063 = vmatprep.subr.mxu0 0.0
        %1064 = vmatpush1.xpose.msra.mxu0 0.0
        %1065 = vmatprep.subr.mxu0 0.0
        %1066 = vmatpush1.xpose.msra.mxu0 0.0
        %1067 = vmatprep.subr.mxu0 0.0
        %1068 = vmatpush1.xpose.msra.mxu0 0.0
        %1069 = vmatprep.subr.mxu0 0.0
        %1070 = vmatpush1.xpose.msra.mxu0 0.0
        %1071 = vmatprep.subr.mxu0 0.0
        %1072 = vmatpush1.xpose.msra.mxu0 0.0
        %1073 = vmatprep.subr.mxu0 0.0
        %1074 = vmatpush1.xpose.msra.mxu0 0.0
        %1075 = vmatprep.subr.mxu0 0.0
        %1076 = vmatpush1.xpose.msra.mxu0 0.0
        %1077 = vmatprep.subr.mxu0 0.0
        %1078 = vmatpush1.xpose.msra.mxu0 0.0
        %1079 = vmatprep.subr.mxu0 0.0
        %1080 = vmatpush1.xpose.msra.mxu0 0.0
        %1081 = vmatprep.subr.mxu0 0.0
        %1082 = vmatpush1.xpose.msra.mxu0 %v1049
        %1083 = vmatprep.subr.mxu0 0.0
        %1084 = vmatpush2.xpose.msra.mxu0 0.0
        %1085 = vmatprep.subr.mxu0 0.0
        %1086 = vmatpush2.xpose.msra.mxu0 0.0
        %1087 = vmatprep.subr.mxu0 0.0
        %1088 = vmatpush2.xpose.msra.mxu0 0.0
        %1089 = vmatprep.subr.mxu0 0.0
        %1090 = vmatpush2.xpose.msra.mxu0 0.0
        %1091 = vmatprep.subr.mxu0 0.0
        %1092 = vmatpush2.xpose.msra.mxu0 0.0
        %1093 = vmatprep.subr.mxu0 0.0
        %1094 = vmatpush2.xpose.msra.mxu0 0.0
        %1095 = vmatprep.subr.mxu0 0.0
        %1096 = vmatpush2.xpose.msra.mxu0 0.0
        %1097 = vmatprep.subr.mxu0 0.0
        %1098 = vmatpush2.xpose.msra.mxu0 0.0
        %1099 = vmatprep.subr.mxu0 0.0
        %1100 = vmatpush2.xpose.msra.mxu0 0.0
        %1101 = vmatprep.subr.mxu0 0.0
        %1102 = vmatpush2.xpose.msra.mxu0 0.0
        %1103 = vmatprep.subr.mxu0 0.0
        %1104 = vmatpush2.xpose.msra.mxu0 0.0
        %1105 = vmatprep.subr.mxu0 0.0
        %1106 = vmatpush2.xpose.msra.mxu0 0.0
        %1107 = vmatprep.subr.mxu0 0.0
        %1108 = vmatpush2.xpose.msra.mxu0 0.0
        %1109 = vmatprep.subr.mxu0 0.0
        %1110 = vmatpush2.xpose.msra.mxu0 0.0
        %1111 = vmatprep.subr.mxu0 0.0
        %1112 = vmatpush2.xpose.msra.mxu0 0.0
        %1113 = vmatprep.subr.mxu0 0.0
        %1114 = vmatpush2.xpose.msra.mxu0 0.0
        %1115 = vmatprep.mubr.f32.mxu0 0.0
        %1116 = vmatmul.mubr.f32.gmra.mxu0 %v1047
        %v1117 = vpop.f32.mrf.mxu0
        %v1118 = vadd.f32 0.0, %v1117
        %v1119 = vpop.f32.mrf.mxu0
        %1120 = vdwg.mxu0
        %1121 = vrot.lane.b32.xlu0 %v646, 104
        %v1122 = vpop.permute.xlu0 %1121
        %1123 = vrot.lane.b32.xlu0 %v646, 72
        %v1124 = vpop.permute.xlu0 %1123
        %v1125 = vsel %vm657, %v1122, 0
        %v1127 = vsel %vm657, %v1124, 0
        %1129 = vmatprep.subr.mxu0 0.0
        %1130 = vmatpush1.xpose.msra.mxu0 0.0
        %1131 = vmatprep.subr.mxu0 0.0
        %1132 = vmatpush1.xpose.msra.mxu0 0.0
        %1133 = vmatprep.subr.mxu0 0.0
        %1134 = vmatpush1.xpose.msra.mxu0 0.0
        %1135 = vmatprep.subr.mxu0 0.0
        %1136 = vmatpush1.xpose.msra.mxu0 0.0
        %1137 = vmatprep.subr.mxu0 0.0
        %1138 = vmatpush1.xpose.msra.mxu0 0.0
        %1139 = vmatprep.subr.mxu0 0.0
        %1140 = vmatpush1.xpose.msra.mxu0 0.0
        %1141 = vmatprep.subr.mxu0 0.0
        %1142 = vmatpush1.xpose.msra.mxu0 0.0
        %1143 = vmatprep.subr.mxu0 0.0
        %1144 = vmatpush1.xpose.msra.mxu0 0.0
        %1145 = vmatprep.subr.mxu0 0.0
        %1146 = vmatpush1.xpose.msra.mxu0 0.0
        %1147 = vmatprep.subr.mxu0 0.0
        %1148 = vmatpush1.xpose.msra.mxu0 0.0
        %1149 = vmatprep.subr.mxu0 0.0
        %1150 = vmatpush1.xpose.msra.mxu0 0.0
        %1151 = vmatprep.subr.mxu0 0.0
        %1152 = vmatpush1.xpose.msra.mxu0 0.0
        %1153 = vmatprep.subr.mxu0 0.0
        %1154 = vmatpush1.xpose.msra.mxu0 0.0
        %1155 = vmatprep.subr.mxu0 0.0
        %1156 = vmatpush1.xpose.msra.mxu0 0.0
        %1157 = vmatprep.subr.mxu0 0.0
        %1158 = vmatpush1.xpose.msra.mxu0 0.0
        %1159 = vmatprep.subr.mxu0 0.0
        %1160 = vmatpush1.xpose.msra.mxu0 %v1127
        %1161 = vmatprep.subr.mxu0 0.0
        %1162 = vmatpush2.xpose.msra.mxu0 0.0
        %1163 = vmatprep.subr.mxu0 0.0
        %1164 = vmatpush2.xpose.msra.mxu0 0.0
        %1165 = vmatprep.subr.mxu0 0.0
        %1166 = vmatpush2.xpose.msra.mxu0 0.0
        %1167 = vmatprep.subr.mxu0 0.0
        %1168 = vmatpush2.xpose.msra.mxu0 0.0
        %1169 = vmatprep.subr.mxu0 0.0
        %1170 = vmatpush2.xpose.msra.mxu0 0.0
        %1171 = vmatprep.subr.mxu0 0.0
        %1172 = vmatpush2.xpose.msra.mxu0 0.0
        %1173 = vmatprep.subr.mxu0 0.0
        %1174 = vmatpush2.xpose.msra.mxu0 0.0
        %1175 = vmatprep.subr.mxu0 0.0
        %1176 = vmatpush2.xpose.msra.mxu0 0.0
        %1177 = vmatprep.subr.mxu0 0.0
        %1178 = vmatpush2.xpose.msra.mxu0 0.0
        %1179 = vmatprep.subr.mxu0 0.0
        %1180 = vmatpush2.xpose.msra.mxu0 0.0
        %1181 = vmatprep.subr.mxu0 0.0
        %1182 = vmatpush2.xpose.msra.mxu0 0.0
        %1183 = vmatprep.subr.mxu0 0.0
        %1184 = vmatpush2.xpose.msra.mxu0 0.0
        %1185 = vmatprep.subr.mxu0 0.0
        %1186 = vmatpush2.xpose.msra.mxu0 0.0
        %1187 = vmatprep.subr.mxu0 0.0
        %1188 = vmatpush2.xpose.msra.mxu0 0.0
        %1189 = vmatprep.subr.mxu0 0.0
        %1190 = vmatpush2.xpose.msra.mxu0 0.0
        %1191 = vmatprep.subr.mxu0 0.0
        %1192 = vmatpush2.xpose.msra.mxu0 0.0
        %1193 = vmatprep.mubr.f32.mxu0 0.0
        %1194 = vmatmul.mubr.f32.gmra.mxu0 %v1125
        %v1195 = vpop.f32.mrf.mxu0
        %v1196 = vadd.f32 0.0, %v1195
        %v1197 = vpop.f32.mrf.mxu0
        %1198 = vdwg.mxu0
        %1199 = vrot.lane.b32.xlu0 %v651, 104
        %v1200 = vpop.permute.xlu0 %1199
        %1201 = vrot.lane.b32.xlu0 %v651, 72
        %v1202 = vpop.permute.xlu0 %1201
        %v1203 = vsel %vm657, %v1200, 0
        %v1205 = vsel %vm657, %v1202, 0
        %1207 = vmatprep.subr.mxu0 0.0
        %1208 = vmatpush1.xpose.msra.mxu0 0.0
        %1209 = vmatprep.subr.mxu0 0.0
        %1210 = vmatpush1.xpose.msra.mxu0 0.0
        %1211 = vmatprep.subr.mxu0 0.0
        %1212 = vmatpush1.xpose.msra.mxu0 0.0
        %1213 = vmatprep.subr.mxu0 0.0
        %1214 = vmatpush1.xpose.msra.mxu0 0.0
        %1215 = vmatprep.subr.mxu0 0.0
        %1216 = vmatpush1.xpose.msra.mxu0 0.0
        %1217 = vmatprep.subr.mxu0 0.0
        %1218 = vmatpush1.xpose.msra.mxu0 0.0
        %1219 = vmatprep.subr.mxu0 0.0
        %1220 = vmatpush1.xpose.msra.mxu0 0.0
        %1221 = vmatprep.subr.mxu0 0.0
        %1222 = vmatpush1.xpose.msra.mxu0 0.0
        %1223 = vmatprep.subr.mxu0 0.0
        %1224 = vmatpush1.xpose.msra.mxu0 0.0
        %1225 = vmatprep.subr.mxu0 0.0
        %1226 = vmatpush1.xpose.msra.mxu0 0.0
        %1227 = vmatprep.subr.mxu0 0.0
        %1228 = vmatpush1.xpose.msra.mxu0 0.0
        %1229 = vmatprep.subr.mxu0 0.0
        %1230 = vmatpush1.xpose.msra.mxu0 0.0
        %1231 = vmatprep.subr.mxu0 0.0
        %1232 = vmatpush1.xpose.msra.mxu0 0.0
        %1233 = vmatprep.subr.mxu0 0.0
        %1234 = vmatpush1.xpose.msra.mxu0 0.0
        %1235 = vmatprep.subr.mxu0 0.0
        %1236 = vmatpush1.xpose.msra.mxu0 0.0
        %1237 = vmatprep.subr.mxu0 0.0
        %1238 = vmatpush1.xpose.msra.mxu0 %v1205
        %1239 = vmatprep.subr.mxu0 0.0
        %1240 = vmatpush2.xpose.msra.mxu0 0.0
        %1241 = vmatprep.subr.mxu0 0.0
        %1242 = vmatpush2.xpose.msra.mxu0 0.0
        %1243 = vmatprep.subr.mxu0 0.0
        %1244 = vmatpush2.xpose.msra.mxu0 0.0
        %1245 = vmatprep.subr.mxu0 0.0
        %1246 = vmatpush2.xpose.msra.mxu0 0.0
        %1247 = vmatprep.subr.mxu0 0.0
        %1248 = vmatpush2.xpose.msra.mxu0 0.0
        %1249 = vmatprep.subr.mxu0 0.0
        %1250 = vmatpush2.xpose.msra.mxu0 0.0
        %1251 = vmatprep.subr.mxu0 0.0
        %1252 = vmatpush2.xpose.msra.mxu0 0.0
        %1253 = vmatprep.subr.mxu0 0.0
        %1254 = vmatpush2.xpose.msra.mxu0 0.0
        %1255 = vmatprep.subr.mxu0 0.0
        %1256 = vmatpush2.xpose.msra.mxu0 0.0
        %1257 = vmatprep.subr.mxu0 0.0
        %1258 = vmatpush2.xpose.msra.mxu0 0.0
        %1259 = vmatprep.subr.mxu0 0.0
        %1260 = vmatpush2.xpose.msra.mxu0 0.0
        %1261 = vmatprep.subr.mxu0 0.0
        %1262 = vmatpush2.xpose.msra.mxu0 0.0
        %1263 = vmatprep.subr.mxu0 0.0
        %1264 = vmatpush2.xpose.msra.mxu0 0.0
        %1265 = vmatprep.subr.mxu0 0.0
        %1266 = vmatpush2.xpose.msra.mxu0 0.0
        %1267 = vmatprep.subr.mxu0 0.0
        %1268 = vmatpush2.xpose.msra.mxu0 0.0
        %1269 = vmatprep.subr.mxu0 0.0
        %1270 = vmatpush2.xpose.msra.mxu0 0.0
        %1271 = vmatprep.mubr.f32.mxu0 0.0
        %1272 = vmatmul.mubr.f32.gmra.mxu0 %v1203
        %v1273 = vpop.f32.mrf.mxu0
        %v1274 = vadd.f32 0.0, %v1273
        %v1275 = vpop.f32.mrf.mxu0
        %1276 = vdwg.mxu0
        %s1277 = sld [smem:[#allocation2]]
        %v1278 = vstv %s1277
        %v1279 = vmul.f32 %v729, %v1278
        %v1280 = vmul.f32 %v806, %v1278
        %s1281 = sld [smem:[#allocation5]]
        %v1282 = vstv %s1281
        %v1283 = vadd.f32 %v1279, %v1282
        %v1284 = vadd.f32 %v1280, %v1282
        %s1285 = sld [smem:[#allocation2 + $0x1]]
        %v1286 = vstv %s1285
        %v1287 = vmul.f32 %v884, %v1286
        %v1288 = vmul.f32 %v962, %v1286
        %v1289 = vadd.f32 %v1283, %v1287
        %v1290 = vadd.f32 %v1284, %v1288
        %s1291 = sld [smem:[#allocation2 + $0x2]]
        %v1292 = vstv %s1291
        %v1293 = vmul.f32 %v1040, %v1292
        %v1294 = vmul.f32 %v1118, %v1292
        %v1295 = vadd.f32 %v1289, %v1293
        %v1296 = vadd.f32 %v1290, %v1294
        %s1297 = sld [smem:[#allocation2 + $0x3]]
        %v1298 = vstv %s1297
        %v1299 = vmul.f32 %v1196, %v1298
        %v1300 = vmul.f32 %v1274, %v1298
        %v1301 = vadd.f32 %v1295, %v1299
        %v1302 = vadd.f32 %v1296, %v1300
        %s1303 = sld [smem:[#allocation2 + $0x80]]
        %v1304 = vstv %s1303
        %v1305 = vmul.f32 %v729, %v1304
        %v1306 = vmul.f32 %v806, %v1304
        %s1307 = sld [smem:[#allocation5 + $0x1]]
        %v1308 = vstv %s1307
        %v1309 = vadd.f32 %v1305, %v1308
        %v1310 = vadd.f32 %v1306, %v1308
        %s1311 = sld [smem:[#allocation2 + $0x81]]
        %v1312 = vstv %s1311
        %v1313 = vmul.f32 %v884, %v1312
        %v1314 = vmul.f32 %v962, %v1312
        %v1315 = vadd.f32 %v1309, %v1313
        %v1316 = vadd.f32 %v1310, %v1314
        %s1317 = sld [smem:[#allocation2 + $0x82]]
        %v1318 = vstv %s1317
        %v1319 = vmul.f32 %v1040, %v1318
        %v1320 = vmul.f32 %v1118, %v1318
        %v1321 = vadd.f32 %v1315, %v1319
        %v1322 = vadd.f32 %v1316, %v1320
        %s1323 = sld [smem:[#allocation2 + $0x83]]
        %v1324 = vstv %s1323
        %v1325 = vmul.f32 %v1196, %v1324
        %v1326 = vmul.f32 %v1274, %v1324
        %v1327 = vadd.f32 %v1321, %v1325
        %v1328 = vadd.f32 %v1322, %v1326
        %s1329 = sld [smem:[#allocation2 + $0x100]]
        %v1330 = vstv %s1329
        %v1331 = vmul.f32 %v729, %v1330
        %v1332 = vmul.f32 %v806, %v1330
        %s1333 = sld [smem:[#allocation5 + $0x2]]
        %v1334 = vstv %s1333
        %v1335 = vadd.f32 %v1331, %v1334
        %v1336 = vadd.f32 %v1332, %v1334
        %s1337 = sld [smem:[#allocation2 + $0x101]]
        %v1338 = vstv %s1337
        %v1339 = vmul.f32 %v884, %v1338
        %v1340 = vmul.f32 %v962, %v1338
        %v1341 = vadd.f32 %v1335, %v1339
        %v1342 = vadd.f32 %v1336, %v1340
        %s1343 = sld [smem:[#allocation2 + $0x102]]
        %v1344 = vstv %s1343
        %v1345 = vmul.f32 %v1040, %v1344
        %v1346 = vmul.f32 %v1118, %v1344
        %v1347 = vadd.f32 %v1341, %v1345
        %v1348 = vadd.f32 %v1342, %v1346
        %s1349 = sld [smem:[#allocation2 + $0x103]]
        %v1350 = vstv %s1349
        %v1351 = vmul.f32 %v1196, %v1350
        %v1352 = vmul.f32 %v1274, %v1350
        %v1353 = vadd.f32 %v1347, %v1351
        %v1354 = vadd.f32 %v1348, %v1352
        %s1355 = sld [smem:[#allocation2 + $0x180]]
        %v1356 = vstv %s1355
        %v1357 = vmul.f32 %v729, %v1356
        %v1358 = vmul.f32 %v806, %v1356
        %s1359 = sld [smem:[#allocation5 + $0x3]]
        %v1360 = vstv %s1359
        %v1361 = vadd.f32 %v1357, %v1360
        %v1362 = vadd.f32 %v1358, %v1360
        %s1363 = sld [smem:[#allocation2 + $0x181]]
        %v1364 = vstv %s1363
        %v1365 = vmul.f32 %v884, %v1364
        %v1366 = vmul.f32 %v962, %v1364
        %v1367 = vadd.f32 %v1361, %v1365
        %v1368 = vadd.f32 %v1362, %v1366
        %s1369 = sld [smem:[#allocation2 + $0x182]]
        %v1370 = vstv %s1369
        %v1371 = vmul.f32 %v1040, %v1370
        %v1372 = vmul.f32 %v1118, %v1370
        %v1373 = vadd.f32 %v1367, %v1371
        %v1374 = vadd.f32 %v1368, %v1372
        %s1375 = sld [smem:[#allocation2 + $0x183]]
        %v1376 = vstv %s1375
        %v1377 = vmul.f32 %v1196, %v1376
        %v1378 = vmul.f32 %v1274, %v1376
        %v1379 = vadd.f32 %v1373, %v1377
        %v1380 = vadd.f32 %v1374, %v1378
        %v1381 = vsel %vm657, %v1301, -inf
        %1382 = vmax.xlane.f32.xlu0 %v1381
        %v1383 = vpop.xlane.xlu0 %1382
        %v1384 = vsel %vm657, %v1302, -inf
        %1385 = vmax.xlane.f32.xlu0 %v1384
        %v1386 = vpop.xlane.xlu0 %1385
        %v1387 = vsub.f32 %v1301, %v1383
        %v1388 = vsub.f32 %v1302, %v1386
        %v1389 = vmul.f32 %v1387, 1.442695
        %v1390 = vpow.pop %v1389
        %v1391 = vmul.f32 %v1388, 1.442695
        %v1392 = vpow.pop %v1391
        %v1393 = vsel %vm657, %v1390, 0.0
        %1394 = vadd.xlane.f32.xlu0 %v1393
        %v1395 = vpop.xlane.xlu0 %1394
        %v1396 = vsel %vm657, %v1392, 0.0
        %1397 = vadd.xlane.f32.xlu0 %v1396
        %v1398 = vpop.xlane.xlu0 %1397
        %v1399 = vrcp.pop %v1395
        %v1400 = vrcp.pop %v1398
        %v1401 = vmul.f32 %v1390, %v1399
        %v1402 = vmul.f32 %v1392, %v1400
        %v1403 = vsel %vm657, %v1327, -inf
        %1404 = vmax.xlane.f32.xlu0 %v1403
        %v1405 = vpop.xlane.xlu0 %1404
        %v1406 = vsel %vm657, %v1328, -inf
        %1407 = vmax.xlane.f32.xlu0 %v1406
        %v1408 = vpop.xlane.xlu0 %1407
        %v1409 = vsub.f32 %v1327, %v1405
        %v1410 = vsub.f32 %v1328, %v1408
        %v1411 = vmul.f32 %v1409, 1.442695
        %v1412 = vpow.pop %v1411
        %v1413 = vmul.f32 %v1410, 1.442695
        %v1414 = vpow.pop %v1413
        %v1415 = vsel %vm657, %v1412, 0.0
        %1416 = vadd.xlane.f32.xlu0 %v1415
        %v1417 = vpop.xlane.xlu0 %1416
        %v1418 = vsel %vm657, %v1414, 0.0
        %1419 = vadd.xlane.f32.xlu0 %v1418
        %v1420 = vpop.xlane.xlu0 %1419
        %v1421 = vrcp.pop %v1417
        %v1422 = vrcp.pop %v1420
        %v1423 = vmul.f32 %v1412, %v1421
        %v1424 = vmul.f32 %v1414, %v1422
        %v1425 = vsel %vm657, %v1353, -inf
        %1426 = vmax.xlane.f32.xlu0 %v1425
        %v1427 = vpop.xlane.xlu0 %1426
        %v1428 = vsel %vm657, %v1354, -inf
        %1429 = vmax.xlane.f32.xlu0 %v1428
        %v1430 = vpop.xlane.xlu0 %1429
        %v1431 = vsub.f32 %v1353, %v1427
        %v1432 = vsub.f32 %v1354, %v1430
        %v1433 = vmul.f32 %v1431, 1.442695
        %v1434 = vpow.pop %v1433
        %v1435 = vmul.f32 %v1432, 1.442695
        %v1436 = vpow.pop %v1435
        %v1437 = vsel %vm657, %v1434, 0.0
        %1438 = vadd.xlane.f32.xlu0 %v1437
        %v1439 = vpop.xlane.xlu0 %1438
        %v1440 = vsel %vm657, %v1436, 0.0
        %1441 = vadd.xlane.f32.xlu0 %v1440
        %v1442 = vpop.xlane.xlu0 %1441
        %v1443 = vrcp.pop %v1439
        %v1444 = vrcp.pop %v1442
        %v1445 = vmul.f32 %v1434, %v1443
        %v1446 = vmul.f32 %v1436, %v1444
        %v1447 = vsel %vm657, %v1379, -inf
        %1448 = vmax.xlane.f32.xlu0 %v1447
        %v1449 = vpop.xlane.xlu0 %1448
        %v1450 = vsel %vm657, %v1380, -inf
        %1451 = vmax.xlane.f32.xlu0 %v1450
        %v1452 = vpop.xlane.xlu0 %1451
        %v1453 = vsub.f32 %v1379, %v1449
        %v1454 = vsub.f32 %v1380, %v1452
        %v1455 = vmul.f32 %v1453, 1.442695
        %v1456 = vpow.pop %v1455
        %v1457 = vmul.f32 %v1454, 1.442695
        %v1458 = vpow.pop %v1457
        %v1459 = vsel %vm657, %v1456, 0.0
        %1460 = vadd.xlane.f32.xlu0 %v1459
        %v1461 = vpop.xlane.xlu0 %1460
        %v1462 = vsel %vm657, %v1458, 0.0
        %1463 = vadd.xlane.f32.xlu0 %v1462
        %v1464 = vpop.xlane.xlu0 %1463
        %v1465 = vrcp.pop %v1461
        %v1466 = vrcp.pop %v1464
        %v1467 = vmul.f32 %v1456, %v1465
        %v1468 = vmul.f32 %v1458, %v1466
        %s1469 = sld [smem:[#allocation7]]
        %v1470 = vstv %s1469
        %v1471 = vmul.f32 %v1401, %v1470
        %v1472 = vmul.f32 %v1402, %v1470
        %s1473 = sld [smem:[#allocation8]]
        %v1474 = vstv %s1473
        %v1475 = vadd.f32 %v1471, %v1474
        %v1476 = vadd.f32 %v1472, %v1474
        %s1477 = sld [smem:[#allocation7 + $0x1]]
        %v1478 = vstv %s1477
        %v1479 = vmul.f32 %v1423, %v1478
        %v1480 = vmul.f32 %v1424, %v1478
        %v1481 = vadd.f32 %v1475, %v1479
        %v1482 = vadd.f32 %v1476, %v1480
        %s1483 = sld [smem:[#allocation7 + $0x2]]
        %v1484 = vstv %s1483
        %v1485 = vmul.f32 %v1445, %v1484
        %v1486 = vmul.f32 %v1446, %v1484
        %v1487 = vadd.f32 %v1481, %v1485
        %v1488 = vadd.f32 %v1482, %v1486
        %s1489 = sld [smem:[#allocation7 + $0x3]]
        %v1490 = vstv %s1489
        %v1491 = vmul.f32 %v1467, %v1490
        %v1492 = vmul.f32 %v1468, %v1490
        %v1493 = vadd.f32 %v1487, %v1491
        %v1494 = vadd.f32 %v1488, %v1492
        %s1495 = sld [smem:[#allocation7 + $0x80]]
        %v1496 = vstv %s1495
        %v1497 = vmul.f32 %v1401, %v1496
        %v1498 = vmul.f32 %v1402, %v1496
        %s1499 = sld [smem:[#allocation8 + $0x1]]
        %v1500 = vstv %s1499
        %v1501 = vadd.f32 %v1497, %v1500
        %v1502 = vadd.f32 %v1498, %v1500
        %s1503 = sld [smem:[#allocation7 + $0x81]]
        %v1504 = vstv %s1503
        %v1505 = vmul.f32 %v1423, %v1504
        %v1506 = vmul.f32 %v1424, %v1504
        %v1507 = vadd.f32 %v1501, %v1505
        %v1508 = vadd.f32 %v1502, %v1506
        %s1509 = sld [smem:[#allocation7 + $0x82]]
        %v1510 = vstv %s1509
        %v1511 = vmul.f32 %v1445, %v1510
        %v1512 = vmul.f32 %v1446, %v1510
        %v1513 = vadd.f32 %v1507, %v1511
        %v1514 = vadd.f32 %v1508, %v1512
        %s1515 = sld [smem:[#allocation7 + $0x83]]
        %v1516 = vstv %s1515
        %v1517 = vmul.f32 %v1467, %v1516
        %v1518 = vmul.f32 %v1468, %v1516
        %v1519 = vadd.f32 %v1513, %v1517
        %v1520 = vadd.f32 %v1514, %v1518
        %s1521 = sld [smem:[#allocation7 + $0x100]]
        %v1522 = vstv %s1521
        %v1523 = vmul.f32 %v1401, %v1522
        %v1524 = vmul.f32 %v1402, %v1522
        %s1525 = sld [smem:[#allocation8 + $0x2]]
        %v1526 = vstv %s1525
        %v1527 = vadd.f32 %v1523, %v1526
        %v1528 = vadd.f32 %v1524, %v1526
        %s1529 = sld [smem:[#allocation7 + $0x101]]
        %v1530 = vstv %s1529
        %v1531 = vmul.f32 %v1423, %v1530
        %v1532 = vmul.f32 %v1424, %v1530
        %v1533 = vadd.f32 %v1527, %v1531
        %v1534 = vadd.f32 %v1528, %v1532
        %s1535 = sld [smem:[#allocation7 + $0x102]]
        %v1536 = vstv %s1535
        %v1537 = vmul.f32 %v1445, %v1536
        %v1538 = vmul.f32 %v1446, %v1536
        %v1539 = vadd.f32 %v1533, %v1537
        %v1540 = vadd.f32 %v1534, %v1538
        %s1541 = sld [smem:[#allocation7 + $0x103]]
        %v1542 = vstv %s1541
        %v1543 = vmul.f32 %v1467, %v1542
        %v1544 = vmul.f32 %v1468, %v1542
        %v1545 = vadd.f32 %v1539, %v1543
        %v1546 = vadd.f32 %v1540, %v1544
        %s1547 = sld [smem:[#allocation7 + $0x180]]
        %v1548 = vstv %s1547
        %v1549 = vmul.f32 %v1401, %v1548
        %v1550 = vmul.f32 %v1402, %v1548
        %s1551 = sld [smem:[#allocation8 + $0x3]]
        %v1552 = vstv %s1551
        %v1553 = vadd.f32 %v1549, %v1552
        %v1554 = vadd.f32 %v1550, %v1552
        %s1555 = sld [smem:[#allocation7 + $0x181]]
        %v1556 = vstv %s1555
        %v1557 = vmul.f32 %v1423, %v1556
        %v1558 = vmul.f32 %v1424, %v1556
        %v1559 = vadd.f32 %v1553, %v1557
        %v1560 = vadd.f32 %v1554, %v1558
        %s1561 = sld [smem:[#allocation7 + $0x182]]
        %v1562 = vstv %s1561
        %v1563 = vmul.f32 %v1445, %v1562
        %v1564 = vmul.f32 %v1446, %v1562
        %v1565 = vadd.f32 %v1559, %v1563
        %v1566 = vadd.f32 %v1560, %v1564
        %s1567 = sld [smem:[#allocation7 + $0x183]]
        %v1568 = vstv %s1567
        %v1569 = vmul.f32 %v1467, %v1568
        %v1570 = vmul.f32 %v1468, %v1568
        %v1571 = vadd.f32 %v1565, %v1569
        %v1572 = vadd.f32 %v1566, %v1570
        %1573 = vrot.lane.b32.xlu0 %v646, 64
        %v1574 = vpop.permute.xlu0 %1573
        %v1577 = vsel %vm657, %v1493, 0
        %1579 = vmatprep.subr.mxu0 0.0
        %1580 = vmatpush1.msra.mxu0 0.0
        %1581 = vmatprep.subr.mxu0 0.0
        %1582 = vmatpush1.msra.mxu0 0.0
        %1583 = vmatprep.subr.mxu0 0.0
        %1584 = vmatpush1.msra.mxu0 0.0
        %1585 = vmatprep.subr.mxu0 0.0
        %1586 = vmatpush1.msra.mxu0 0.0
        %1587 = vmatprep.subr.mxu0 0.0
        %1588 = vmatpush1.msra.mxu0 0.0
        %1589 = vmatprep.subr.mxu0 0.0
        %1590 = vmatpush1.msra.mxu0 0.0
        %1591 = vmatprep.subr.mxu0 0.0
        %1592 = vmatpush1.msra.mxu0 0.0
        %1593 = vmatprep.subr.mxu0 0.0
        %1594 = vmatpush1.msra.mxu0 0.0
        %1595 = vmatprep.subr.mxu0 0.0
        %1596 = vmatpush1.msra.mxu0 0.0
        %1597 = vmatprep.subr.mxu0 0.0
        %1598 = vmatpush1.msra.mxu0 0.0
        %1599 = vmatprep.subr.mxu0 0.0
        %1600 = vmatpush1.msra.mxu0 0.0
        %1601 = vmatprep.subr.mxu0 0.0
        %1602 = vmatpush1.msra.mxu0 0.0
        %1603 = vmatprep.subr.mxu0 0.0
        %1604 = vmatpush1.msra.mxu0 0.0
        %1605 = vmatprep.subr.mxu0 0.0
        %1606 = vmatpush1.msra.mxu0 0.0
        %1607 = vmatprep.subr.mxu0 0.0
        %1608 = vmatpush1.msra.mxu0 0.0
        %1609 = vmatprep.subr.mxu0 0.0
        %1610 = vmatpush1.msra.mxu0 %v1574
        %1611 = vmatprep.subr.mxu0 0.0
        %1612 = vmatpush2.msra.mxu0 0.0
        %1613 = vmatprep.subr.mxu0 0.0
        %1614 = vmatpush2.msra.mxu0 0.0
        %1615 = vmatprep.subr.mxu0 0.0
        %1616 = vmatpush2.msra.mxu0 0.0
        %1617 = vmatprep.subr.mxu0 0.0
        %1618 = vmatpush2.msra.mxu0 0.0
        %1619 = vmatprep.subr.mxu0 0.0
        %1620 = vmatpush2.msra.mxu0 0.0
        %1621 = vmatprep.subr.mxu0 0.0
        %1622 = vmatpush2.msra.mxu0 0.0
        %1623 = vmatprep.subr.mxu0 0.0
        %1624 = vmatpush2.msra.mxu0 0.0
        %1625 = vmatprep.subr.mxu0 0.0
        %1626 = vmatpush2.msra.mxu0 0.0
        %1627 = vmatprep.subr.mxu0 0.0
        %1628 = vmatpush2.msra.mxu0 0.0
        %1629 = vmatprep.subr.mxu0 0.0
        %1630 = vmatpush2.msra.mxu0 0.0
        %1631 = vmatprep.subr.mxu0 0.0
        %1632 = vmatpush2.msra.mxu0 0.0
        %1633 = vmatprep.subr.mxu0 0.0
        %1634 = vmatpush2.msra.mxu0 0.0
        %1635 = vmatprep.subr.mxu0 0.0
        %1636 = vmatpush2.msra.mxu0 0.0
        %1637 = vmatprep.subr.mxu0 0.0
        %1638 = vmatpush2.msra.mxu0 0.0
        %1639 = vmatprep.subr.mxu0 0.0
        %1640 = vmatpush2.msra.mxu0 0.0
        %1641 = vmatprep.subr.mxu0 0.0
        %1642 = vmatpush2.msra.mxu0 0.0
        %1643 = vmatprep.mubr.f32.mxu0 0.0
        %1644 = vmatmul.mubr.f32.gmra.mxu0 %v1577
        %v1645 = vpop.f32.mrf.mxu0
        %v1646 = vadd.f32 0.0, %v1645
        %v1647 = vpop.f32.mrf.mxu0
        %1648 = vdwg.mxu0
        %1649 = vrot.lane.b32.xlu0 %v651, 64
        %v1650 = vpop.permute.xlu0 %1649
        %v1653 = vsel %vm657, %v1494, 0
        %1655 = vmatprep.subr.mxu0 0.0
        %1656 = vmatpush1.msra.mxu0 0.0
        %1657 = vmatprep.subr.mxu0 0.0
        %1658 = vmatpush1.msra.mxu0 0.0
        %1659 = vmatprep.subr.mxu0 0.0
        %1660 = vmatpush1.msra.mxu0 0.0
        %1661 = vmatprep.subr.mxu0 0.0
        %1662 = vmatpush1.msra.mxu0 0.0
        %1663 = vmatprep.subr.mxu0 0.0
        %1664 = vmatpush1.msra.mxu0 0.0
        %1665 = vmatprep.subr.mxu0 0.0
        %1666 = vmatpush1.msra.mxu0 0.0
        %1667 = vmatprep.subr.mxu0 0.0
        %1668 = vmatpush1.msra.mxu0 0.0
        %1669 = vmatprep.subr.mxu0 0.0
        %1670 = vmatpush1.msra.mxu0 0.0
        %1671 = vmatprep.subr.mxu0 0.0
        %1672 = vmatpush1.msra.mxu0 0.0
        %1673 = vmatprep.subr.mxu0 0.0
        %1674 = vmatpush1.msra.mxu0 0.0
        %1675 = vmatprep.subr.mxu0 0.0
        %1676 = vmatpush1.msra.mxu0 0.0
        %1677 = vmatprep.subr.mxu0 0.0
        %1678 = vmatpush1.msra.mxu0 0.0
        %1679 = vmatprep.subr.mxu0 0.0
        %1680 = vmatpush1.msra.mxu0 0.0
        %1681 = vmatprep.subr.mxu0 0.0
        %1682 = vmatpush1.msra.mxu0 0.0
        %1683 = vmatprep.subr.mxu0 0.0
        %1684 = vmatpush1.msra.mxu0 0.0
        %1685 = vmatprep.subr.mxu0 0.0
        %1686 = vmatpush1.msra.mxu0 %v1650
        %1687 = vmatprep.subr.mxu0 0.0
        %1688 = vmatpush2.msra.mxu0 0.0
        %1689 = vmatprep.subr.mxu0 0.0
        %1690 = vmatpush2.msra.mxu0 0.0
        %1691 = vmatprep.subr.mxu0 0.0
        %1692 = vmatpush2.msra.mxu0 0.0
        %1693 = vmatprep.subr.mxu0 0.0
        %1694 = vmatpush2.msra.mxu0 0.0
        %1695 = vmatprep.subr.mxu0 0.0
        %1696 = vmatpush2.msra.mxu0 0.0
        %1697 = vmatprep.subr.mxu0 0.0
        %1698 = vmatpush2.msra.mxu0 0.0
        %1699 = vmatprep.subr.mxu0 0.0
        %1700 = vmatpush2.msra.mxu0 0.0
        %1701 = vmatprep.subr.mxu0 0.0
        %1702 = vmatpush2.msra.mxu0 0.0
        %1703 = vmatprep.subr.mxu0 0.0
        %1704 = vmatpush2.msra.mxu0 0.0
        %1705 = vmatprep.subr.mxu0 0.0
        %1706 = vmatpush2.msra.mxu0 0.0
        %1707 = vmatprep.subr.mxu0 0.0
        %1708 = vmatpush2.msra.mxu0 0.0
        %1709 = vmatprep.subr.mxu0 0.0
        %1710 = vmatpush2.msra.mxu0 0.0
        %1711 = vmatprep.subr.mxu0 0.0
        %1712 = vmatpush2.msra.mxu0 0.0
        %1713 = vmatprep.subr.mxu0 0.0
        %1714 = vmatpush2.msra.mxu0 0.0
        %1715 = vmatprep.subr.mxu0 0.0
        %1716 = vmatpush2.msra.mxu0 0.0
        %1717 = vmatprep.subr.mxu0 0.0
        %1718 = vmatpush2.msra.mxu0 0.0
        %1719 = vmatprep.mubr.f32.mxu0 0.0
        %1720 = vmatmul.mubr.f32.gmra.mxu0 %v1653
        %v1721 = vpop.f32.mrf.mxu0
        %v1722 = vadd.f32 0.0, %v1721
        %v1723 = vpop.f32.mrf.mxu0
        %1724 = vdwg.mxu0
        %1725 = vrot.lane.b32.xlu0 %v646, 56
        %v1726 = vpop.permute.xlu0 %1725
        %v1729 = vsel %vm657, %v1519, 0
        %1731 = vmatprep.subr.mxu0 0.0
        %1732 = vmatpush1.msra.mxu0 0.0
        %1733 = vmatprep.subr.mxu0 0.0
        %1734 = vmatpush1.msra.mxu0 0.0
        %1735 = vmatprep.subr.mxu0 0.0
        %1736 = vmatpush1.msra.mxu0 0.0
        %1737 = vmatprep.subr.mxu0 0.0
        %1738 = vmatpush1.msra.mxu0 0.0
        %1739 = vmatprep.subr.mxu0 0.0
        %1740 = vmatpush1.msra.mxu0 0.0
        %1741 = vmatprep.subr.mxu0 0.0
        %1742 = vmatpush1.msra.mxu0 0.0
        %1743 = vmatprep.subr.mxu0 0.0
        %1744 = vmatpush1.msra.mxu0 0.0
        %1745 = vmatprep.subr.mxu0 0.0
        %1746 = vmatpush1.msra.mxu0 0.0
        %1747 = vmatprep.subr.mxu0 0.0
        %1748 = vmatpush1.msra.mxu0 0.0
        %1749 = vmatprep.subr.mxu0 0.0
        %1750 = vmatpush1.msra.mxu0 0.0
        %1751 = vmatprep.subr.mxu0 0.0
        %1752 = vmatpush1.msra.mxu0 0.0
        %1753 = vmatprep.subr.mxu0 0.0
        %1754 = vmatpush1.msra.mxu0 0.0
        %1755 = vmatprep.subr.mxu0 0.0
        %1756 = vmatpush1.msra.mxu0 0.0
        %1757 = vmatprep.subr.mxu0 0.0
        %1758 = vmatpush1.msra.mxu0 0.0
        %1759 = vmatprep.subr.mxu0 0.0
        %1760 = vmatpush1.msra.mxu0 0.0
        %1761 = vmatprep.subr.mxu0 0.0
        %1762 = vmatpush1.msra.mxu0 %v1726
        %1763 = vmatprep.subr.mxu0 0.0
        %1764 = vmatpush2.msra.mxu0 0.0
        %1765 = vmatprep.subr.mxu0 0.0
        %1766 = vmatpush2.msra.mxu0 0.0
        %1767 = vmatprep.subr.mxu0 0.0
        %1768 = vmatpush2.msra.mxu0 0.0
        %1769 = vmatprep.subr.mxu0 0.0
        %1770 = vmatpush2.msra.mxu0 0.0
        %1771 = vmatprep.subr.mxu0 0.0
        %1772 = vmatpush2.msra.mxu0 0.0
        %1773 = vmatprep.subr.mxu0 0.0
        %1774 = vmatpush2.msra.mxu0 0.0
        %1775 = vmatprep.subr.mxu0 0.0
        %1776 = vmatpush2.msra.mxu0 0.0
        %1777 = vmatprep.subr.mxu0 0.0
        %1778 = vmatpush2.msra.mxu0 0.0
        %1779 = vmatprep.subr.mxu0 0.0
        %1780 = vmatpush2.msra.mxu0 0.0
        %1781 = vmatprep.subr.mxu0 0.0
        %1782 = vmatpush2.msra.mxu0 0.0
        %1783 = vmatprep.subr.mxu0 0.0
        %1784 = vmatpush2.msra.mxu0 0.0
        %1785 = vmatprep.subr.mxu0 0.0
        %1786 = vmatpush2.msra.mxu0 0.0
        %1787 = vmatprep.subr.mxu0 0.0
        %1788 = vmatpush2.msra.mxu0 0.0
        %1789 = vmatprep.subr.mxu0 0.0
        %1790 = vmatpush2.msra.mxu0 0.0
        %1791 = vmatprep.subr.mxu0 0.0
        %1792 = vmatpush2.msra.mxu0 0.0
        %1793 = vmatprep.subr.mxu0 0.0
        %1794 = vmatpush2.msra.mxu0 0.0
        %1795 = vmatprep.mubr.f32.mxu0 0.0
        %1796 = vmatmul.mubr.f32.gmra.mxu0 %v1729
        %v1797 = vpop.f32.mrf.mxu0
        %v1798 = vadd.f32 0.0, %v1797
        %v1799 = vpop.f32.mrf.mxu0
        %1800 = vdwg.mxu0
        %1801 = vrot.lane.b32.xlu0 %v651, 56
        %v1802 = vpop.permute.xlu0 %1801
        %v1805 = vsel %vm657, %v1520, 0
        %1807 = vmatprep.subr.mxu0 0.0
        %1808 = vmatpush1.msra.mxu0 0.0
        %1809 = vmatprep.subr.mxu0 0.0
        %1810 = vmatpush1.msra.mxu0 0.0
        %1811 = vmatprep.subr.mxu0 0.0
        %1812 = vmatpush1.msra.mxu0 0.0
        %1813 = vmatprep.subr.mxu0 0.0
        %1814 = vmatpush1.msra.mxu0 0.0
        %1815 = vmatprep.subr.mxu0 0.0
        %1816 = vmatpush1.msra.mxu0 0.0
        %1817 = vmatprep.subr.mxu0 0.0
        %1818 = vmatpush1.msra.mxu0 0.0
        %1819 = vmatprep.subr.mxu0 0.0
        %1820 = vmatpush1.msra.mxu0 0.0
        %1821 = vmatprep.subr.mxu0 0.0
        %1822 = vmatpush1.msra.mxu0 0.0
        %1823 = vmatprep.subr.mxu0 0.0
        %1824 = vmatpush1.msra.mxu0 0.0
        %1825 = vmatprep.subr.mxu0 0.0
        %1826 = vmatpush1.msra.mxu0 0.0
        %1827 = vmatprep.subr.mxu0 0.0
        %1828 = vmatpush1.msra.mxu0 0.0
        %1829 = vmatprep.subr.mxu0 0.0
        %1830 = vmatpush1.msra.mxu0 0.0
        %1831 = vmatprep.subr.mxu0 0.0
        %1832 = vmatpush1.msra.mxu0 0.0
        %1833 = vmatprep.subr.mxu0 0.0
        %1834 = vmatpush1.msra.mxu0 0.0
        %1835 = vmatprep.subr.mxu0 0.0
        %1836 = vmatpush1.msra.mxu0 0.0
        %1837 = vmatprep.subr.mxu0 0.0
        %1838 = vmatpush1.msra.mxu0 %v1802
        %1839 = vmatprep.subr.mxu0 0.0
        %1840 = vmatpush2.msra.mxu0 0.0
        %1841 = vmatprep.subr.mxu0 0.0
        %1842 = vmatpush2.msra.mxu0 0.0
        %1843 = vmatprep.subr.mxu0 0.0
        %1844 = vmatpush2.msra.mxu0 0.0
        %1845 = vmatprep.subr.mxu0 0.0
        %1846 = vmatpush2.msra.mxu0 0.0
        %1847 = vmatprep.subr.mxu0 0.0
        %1848 = vmatpush2.msra.mxu0 0.0
        %1849 = vmatprep.subr.mxu0 0.0
        %1850 = vmatpush2.msra.mxu0 0.0
        %1851 = vmatprep.subr.mxu0 0.0
        %1852 = vmatpush2.msra.mxu0 0.0
        %1853 = vmatprep.subr.mxu0 0.0
        %1854 = vmatpush2.msra.mxu0 0.0
        %1855 = vmatprep.subr.mxu0 0.0
        %1856 = vmatpush2.msra.mxu0 0.0
        %1857 = vmatprep.subr.mxu0 0.0
        %1858 = vmatpush2.msra.mxu0 0.0
        %1859 = vmatprep.subr.mxu0 0.0
        %1860 = vmatpush2.msra.mxu0 0.0
        %1861 = vmatprep.subr.mxu0 0.0
        %1862 = vmatpush2.msra.mxu0 0.0
        %1863 = vmatprep.subr.mxu0 0.0
        %1864 = vmatpush2.msra.mxu0 0.0
        %1865 = vmatprep.subr.mxu0 0.0
        %1866 = vmatpush2.msra.mxu0 0.0
        %1867 = vmatprep.subr.mxu0 0.0
        %1868 = vmatpush2.msra.mxu0 0.0
        %1869 = vmatprep.subr.mxu0 0.0
        %1870 = vmatpush2.msra.mxu0 0.0
        %1871 = vmatprep.mubr.f32.mxu0 0.0
        %1872 = vmatmul.mubr.f32.gmra.mxu0 %v1805
        %v1873 = vpop.f32.mrf.mxu0
        %v1874 = vadd.f32 0.0, %v1873
        %v1875 = vpop.f32.mrf.mxu0
        %1876 = vdwg.mxu0
        %1877 = vrot.lane.b32.xlu0 %v646, 48
        %v1878 = vpop.permute.xlu0 %1877
        %v1881 = vsel %vm657, %v1545, 0
        %1883 = vmatprep.subr.mxu0 0.0
        %1884 = vmatpush1.msra.mxu0 0.0
        %1885 = vmatprep.subr.mxu0 0.0
        %1886 = vmatpush1.msra.mxu0 0.0
        %1887 = vmatprep.subr.mxu0 0.0
        %1888 = vmatpush1.msra.mxu0 0.0
        %1889 = vmatprep.subr.mxu0 0.0
        %1890 = vmatpush1.msra.mxu0 0.0
        %1891 = vmatprep.subr.mxu0 0.0
        %1892 = vmatpush1.msra.mxu0 0.0
        %1893 = vmatprep.subr.mxu0 0.0
        %1894 = vmatpush1.msra.mxu0 0.0
        %1895 = vmatprep.subr.mxu0 0.0
        %1896 = vmatpush1.msra.mxu0 0.0
        %1897 = vmatprep.subr.mxu0 0.0
        %1898 = vmatpush1.msra.mxu0 0.0
        %1899 = vmatprep.subr.mxu0 0.0
        %1900 = vmatpush1.msra.mxu0 0.0
        %1901 = vmatprep.subr.mxu0 0.0
        %1902 = vmatpush1.msra.mxu0 0.0
        %1903 = vmatprep.subr.mxu0 0.0
        %1904 = vmatpush1.msra.mxu0 0.0
        %1905 = vmatprep.subr.mxu0 0.0
        %1906 = vmatpush1.msra.mxu0 0.0
        %1907 = vmatprep.subr.mxu0 0.0
        %1908 = vmatpush1.msra.mxu0 0.0
        %1909 = vmatprep.subr.mxu0 0.0
        %1910 = vmatpush1.msra.mxu0 0.0
        %1911 = vmatprep.subr.mxu0 0.0
        %1912 = vmatpush1.msra.mxu0 0.0
        %1913 = vmatprep.subr.mxu0 0.0
        %1914 = vmatpush1.msra.mxu0 %v1878
        %1915 = vmatprep.subr.mxu0 0.0
        %1916 = vmatpush2.msra.mxu0 0.0
        %1917 = vmatprep.subr.mxu0 0.0
        %1918 = vmatpush2.msra.mxu0 0.0
        %1919 = vmatprep.subr.mxu0 0.0
        %1920 = vmatpush2.msra.mxu0 0.0
        %1921 = vmatprep.subr.mxu0 0.0
        %1922 = vmatpush2.msra.mxu0 0.0
        %1923 = vmatprep.subr.mxu0 0.0
        %1924 = vmatpush2.msra.mxu0 0.0
        %1925 = vmatprep.subr.mxu0 0.0
        %1926 = vmatpush2.msra.mxu0 0.0
        %1927 = vmatprep.subr.mxu0 0.0
        %1928 = vmatpush2.msra.mxu0 0.0
        %1929 = vmatprep.subr.mxu0 0.0
        %1930 = vmatpush2.msra.mxu0 0.0
        %1931 = vmatprep.subr.mxu0 0.0
        %1932 = vmatpush2.msra.mxu0 0.0
        %1933 = vmatprep.subr.mxu0 0.0
        %1934 = vmatpush2.msra.mxu0 0.0
        %1935 = vmatprep.subr.mxu0 0.0
        %1936 = vmatpush2.msra.mxu0 0.0
        %1937 = vmatprep.subr.mxu0 0.0
        %1938 = vmatpush2.msra.mxu0 0.0
        %1939 = vmatprep.subr.mxu0 0.0
        %1940 = vmatpush2.msra.mxu0 0.0
        %1941 = vmatprep.subr.mxu0 0.0
        %1942 = vmatpush2.msra.mxu0 0.0
        %1943 = vmatprep.subr.mxu0 0.0
        %1944 = vmatpush2.msra.mxu0 0.0
        %1945 = vmatprep.subr.mxu0 0.0
        %1946 = vmatpush2.msra.mxu0 0.0
        %1947 = vmatprep.mubr.f32.mxu0 0.0
        %1948 = vmatmul.mubr.f32.gmra.mxu0 %v1881
        %v1949 = vpop.f32.mrf.mxu0
        %v1950 = vadd.f32 0.0, %v1949
        %v1951 = vpop.f32.mrf.mxu0
        %1952 = vdwg.mxu0
        %1953 = vrot.lane.b32.xlu0 %v651, 48
        %v1954 = vpop.permute.xlu0 %1953
        %v1957 = vsel %vm657, %v1546, 0
        %1959 = vmatprep.subr.mxu0 0.0
        %1960 = vmatpush1.msra.mxu0 0.0
        %1961 = vmatprep.subr.mxu0 0.0
        %1962 = vmatpush1.msra.mxu0 0.0
        %1963 = vmatprep.subr.mxu0 0.0
        %1964 = vmatpush1.msra.mxu0 0.0
        %1965 = vmatprep.subr.mxu0 0.0
        %1966 = vmatpush1.msra.mxu0 0.0
        %1967 = vmatprep.subr.mxu0 0.0
        %1968 = vmatpush1.msra.mxu0 0.0
        %1969 = vmatprep.subr.mxu0 0.0
        %1970 = vmatpush1.msra.mxu0 0.0
        %1971 = vmatprep.subr.mxu0 0.0
        %1972 = vmatpush1.msra.mxu0 0.0
        %1973 = vmatprep.subr.mxu0 0.0
        %1974 = vmatpush1.msra.mxu0 0.0
        %1975 = vmatprep.subr.mxu0 0.0
        %1976 = vmatpush1.msra.mxu0 0.0
        %1977 = vmatprep.subr.mxu0 0.0
        %1978 = vmatpush1.msra.mxu0 0.0
        %1979 = vmatprep.subr.mxu0 0.0
        %1980 = vmatpush1.msra.mxu0 0.0
        %1981 = vmatprep.subr.mxu0 0.0
        %1982 = vmatpush1.msra.mxu0 0.0
        %1983 = vmatprep.subr.mxu0 0.0
        %1984 = vmatpush1.msra.mxu0 0.0
        %1985 = vmatprep.subr.mxu0 0.0
        %1986 = vmatpush1.msra.mxu0 0.0
        %1987 = vmatprep.subr.mxu0 0.0
        %1988 = vmatpush1.msra.mxu0 0.0
        %1989 = vmatprep.subr.mxu0 0.0
        %1990 = vmatpush1.msra.mxu0 %v1954
        %1991 = vmatprep.subr.mxu0 0.0
        %1992 = vmatpush2.msra.mxu0 0.0
        %1993 = vmatprep.subr.mxu0 0.0
        %1994 = vmatpush2.msra.mxu0 0.0
        %1995 = vmatprep.subr.mxu0 0.0
        %1996 = vmatpush2.msra.mxu0 0.0
        %1997 = vmatprep.subr.mxu0 0.0
        %1998 = vmatpush2.msra.mxu0 0.0
        %1999 = vmatprep.subr.mxu0 0.0
        %2000 = vmatpush2.msra.mxu0 0.0
        %2001 = vmatprep.subr.mxu0 0.0
        %2002 = vmatpush2.msra.mxu0 0.0
        %2003 = vmatprep.subr.mxu0 0.0
        %2004 = vmatpush2.msra.mxu0 0.0
        %2005 = vmatprep.subr.mxu0 0.0
        %2006 = vmatpush2.msra.mxu0 0.0
        %2007 = vmatprep.subr.mxu0 0.0
        %2008 = vmatpush2.msra.mxu0 0.0
        %2009 = vmatprep.subr.mxu0 0.0
        %2010 = vmatpush2.msra.mxu0 0.0
        %2011 = vmatprep.subr.mxu0 0.0
        %2012 = vmatpush2.msra.mxu0 0.0
        %2013 = vmatprep.subr.mxu0 0.0
        %2014 = vmatpush2.msra.mxu0 0.0
        %2015 = vmatprep.subr.mxu0 0.0
        %2016 = vmatpush2.msra.mxu0 0.0
        %2017 = vmatprep.subr.mxu0 0.0
        %2018 = vmatpush2.msra.mxu0 0.0
        %2019 = vmatprep.subr.mxu0 0.0
        %2020 = vmatpush2.msra.mxu0 0.0
        %2021 = vmatprep.subr.mxu0 0.0
        %2022 = vmatpush2.msra.mxu0 0.0
        %2023 = vmatprep.mubr.f32.mxu0 0.0
        %2024 = vmatmul.mubr.f32.gmra.mxu0 %v1957
        %v2025 = vpop.f32.mrf.mxu0
        %v2026 = vadd.f32 0.0, %v2025
        %v2027 = vpop.f32.mrf.mxu0
        %2028 = vdwg.mxu0
        %2029 = vrot.lane.b32.xlu0 %v646, 40
        %v2030 = vpop.permute.xlu0 %2029
        %v2033 = vsel %vm657, %v1571, 0
        %2035 = vmatprep.subr.mxu0 0.0
        %2036 = vmatpush1.msra.mxu0 0.0
        %2037 = vmatprep.subr.mxu0 0.0
        %2038 = vmatpush1.msra.mxu0 0.0
        %2039 = vmatprep.subr.mxu0 0.0
        %2040 = vmatpush1.msra.mxu0 0.0
        %2041 = vmatprep.subr.mxu0 0.0
        %2042 = vmatpush1.msra.mxu0 0.0
        %2043 = vmatprep.subr.mxu0 0.0
        %2044 = vmatpush1.msra.mxu0 0.0
        %2045 = vmatprep.subr.mxu0 0.0
        %2046 = vmatpush1.msra.mxu0 0.0
        %2047 = vmatprep.subr.mxu0 0.0
        %2048 = vmatpush1.msra.mxu0 0.0
        %2049 = vmatprep.subr.mxu0 0.0
        %2050 = vmatpush1.msra.mxu0 0.0
        %2051 = vmatprep.subr.mxu0 0.0
        %2052 = vmatpush1.msra.mxu0 0.0
        %2053 = vmatprep.subr.mxu0 0.0
        %2054 = vmatpush1.msra.mxu0 0.0
        %2055 = vmatprep.subr.mxu0 0.0
        %2056 = vmatpush1.msra.mxu0 0.0
        %2057 = vmatprep.subr.mxu0 0.0
        %2058 = vmatpush1.msra.mxu0 0.0
        %2059 = vmatprep.subr.mxu0 0.0
        %2060 = vmatpush1.msra.mxu0 0.0
        %2061 = vmatprep.subr.mxu0 0.0
        %2062 = vmatpush1.msra.mxu0 0.0
        %2063 = vmatprep.subr.mxu0 0.0
        %2064 = vmatpush1.msra.mxu0 0.0
        %2065 = vmatprep.subr.mxu0 0.0
        %2066 = vmatpush1.msra.mxu0 %v2030
        %2067 = vmatprep.subr.mxu0 0.0
        %2068 = vmatpush2.msra.mxu0 0.0
        %2069 = vmatprep.subr.mxu0 0.0
        %2070 = vmatpush2.msra.mxu0 0.0
        %2071 = vmatprep.subr.mxu0 0.0
        %2072 = vmatpush2.msra.mxu0 0.0
        %2073 = vmatprep.subr.mxu0 0.0
        %2074 = vmatpush2.msra.mxu0 0.0
        %2075 = vmatprep.subr.mxu0 0.0
        %2076 = vmatpush2.msra.mxu0 0.0
        %2077 = vmatprep.subr.mxu0 0.0
        %2078 = vmatpush2.msra.mxu0 0.0
        %2079 = vmatprep.subr.mxu0 0.0
        %2080 = vmatpush2.msra.mxu0 0.0
        %2081 = vmatprep.subr.mxu0 0.0
        %2082 = vmatpush2.msra.mxu0 0.0
        %2083 = vmatprep.subr.mxu0 0.0
        %2084 = vmatpush2.msra.mxu0 0.0
        %2085 = vmatprep.subr.mxu0 0.0
        %2086 = vmatpush2.msra.mxu0 0.0
        %2087 = vmatprep.subr.mxu0 0.0
        %2088 = vmatpush2.msra.mxu0 0.0
        %2089 = vmatprep.subr.mxu0 0.0
        %2090 = vmatpush2.msra.mxu0 0.0
        %2091 = vmatprep.subr.mxu0 0.0
        %2092 = vmatpush2.msra.mxu0 0.0
        %2093 = vmatprep.subr.mxu0 0.0
        %2094 = vmatpush2.msra.mxu0 0.0
        %2095 = vmatprep.subr.mxu0 0.0
        %2096 = vmatpush2.msra.mxu0 0.0
        %2097 = vmatprep.subr.mxu0 0.0
        %2098 = vmatpush2.msra.mxu0 0.0
        %2099 = vmatprep.mubr.f32.mxu0 0.0
        %2100 = vmatmul.mubr.f32.gmra.mxu0 %v2033
        %v2101 = vpop.f32.mrf.mxu0
        %v2102 = vadd.f32 0.0, %v2101
        %v2103 = vpop.f32.mrf.mxu0
        %2104 = vdwg.mxu0
        %2105 = vrot.lane.b32.xlu0 %v651, 40
        %v2106 = vpop.permute.xlu0 %2105
        %v2109 = vsel %vm657, %v1572, 0
        %2111 = vmatprep.subr.mxu0 0.0
        %2112 = vmatpush1.msra.mxu0 0.0
        %2113 = vmatprep.subr.mxu0 0.0
        %2114 = vmatpush1.msra.mxu0 0.0
        %2115 = vmatprep.subr.mxu0 0.0
        %2116 = vmatpush1.msra.mxu0 0.0
        %2117 = vmatprep.subr.mxu0 0.0
        %2118 = vmatpush1.msra.mxu0 0.0
        %2119 = vmatprep.subr.mxu0 0.0
        %2120 = vmatpush1.msra.mxu0 0.0
        %2121 = vmatprep.subr.mxu0 0.0
        %2122 = vmatpush1.msra.mxu0 0.0
        %2123 = vmatprep.subr.mxu0 0.0
        %2124 = vmatpush1.msra.mxu0 0.0
        %2125 = vmatprep.subr.mxu0 0.0
        %2126 = vmatpush1.msra.mxu0 0.0
        %2127 = vmatprep.subr.mxu0 0.0
        %2128 = vmatpush1.msra.mxu0 0.0
        %2129 = vmatprep.subr.mxu0 0.0
        %2130 = vmatpush1.msra.mxu0 0.0
        %2131 = vmatprep.subr.mxu0 0.0
        %2132 = vmatpush1.msra.mxu0 0.0
        %2133 = vmatprep.subr.mxu0 0.0
        %2134 = vmatpush1.msra.mxu0 0.0
        %2135 = vmatprep.subr.mxu0 0.0
        %2136 = vmatpush1.msra.mxu0 0.0
        %2137 = vmatprep.subr.mxu0 0.0
        %2138 = vmatpush1.msra.mxu0 0.0
        %2139 = vmatprep.subr.mxu0 0.0
        %2140 = vmatpush1.msra.mxu0 0.0
        %2141 = vmatprep.subr.mxu0 0.0
        %2142 = vmatpush1.msra.mxu0 %v2106
        %2143 = vmatprep.subr.mxu0 0.0
        %2144 = vmatpush2.msra.mxu0 0.0
        %2145 = vmatprep.subr.mxu0 0.0
        %2146 = vmatpush2.msra.mxu0 0.0
        %2147 = vmatprep.subr.mxu0 0.0
        %2148 = vmatpush2.msra.mxu0 0.0
        %2149 = vmatprep.subr.mxu0 0.0
        %2150 = vmatpush2.msra.mxu0 0.0
        %2151 = vmatprep.subr.mxu0 0.0
        %2152 = vmatpush2.msra.mxu0 0.0
        %2153 = vmatprep.subr.mxu0 0.0
        %2154 = vmatpush2.msra.mxu0 0.0
        %2155 = vmatprep.subr.mxu0 0.0
        %2156 = vmatpush2.msra.mxu0 0.0
        %2157 = vmatprep.subr.mxu0 0.0
        %2158 = vmatpush2.msra.mxu0 0.0
        %2159 = vmatprep.subr.mxu0 0.0
        %2160 = vmatpush2.msra.mxu0 0.0
        %2161 = vmatprep.subr.mxu0 0.0
        %2162 = vmatpush2.msra.mxu0 0.0
        %2163 = vmatprep.subr.mxu0 0.0
        %2164 = vmatpush2.msra.mxu0 0.0
        %2165 = vmatprep.subr.mxu0 0.0
        %2166 = vmatpush2.msra.mxu0 0.0
        %2167 = vmatprep.subr.mxu0 0.0
        %2168 = vmatpush2.msra.mxu0 0.0
        %2169 = vmatprep.subr.mxu0 0.0
        %2170 = vmatpush2.msra.mxu0 0.0
        %2171 = vmatprep.subr.mxu0 0.0
        %2172 = vmatpush2.msra.mxu0 0.0
        %2173 = vmatprep.subr.mxu0 0.0
        %2174 = vmatpush2.msra.mxu0 0.0
        %2175 = vmatprep.mubr.f32.mxu0 0.0
        %2176 = vmatmul.mubr.f32.gmra.mxu0 %v2109
        %v2177 = vpop.f32.mrf.mxu0
        %v2178 = vadd.f32 0.0, %v2177
        %v2179 = vpop.f32.mrf.mxu0
        %2180 = vdwg.mxu0
        %2183 = vrot.lane.b32.xlu0 %v1798, 8
        %v2184 = vpop.permute.xlu0 %2183
        %2185 = vrot.lane.b32.xlu0 %v1874, 8
        %v2186 = vpop.permute.xlu0 %2185
        %2191 = vrot.lane.b32.xlu0 %v1950, 16
        %v2192 = vpop.permute.xlu0 %2191
        %2193 = vrot.lane.b32.xlu0 %v2026, 16
        %v2194 = vpop.permute.xlu0 %2193
        %2199 = vrot.lane.b32.xlu0 %v2102, 24
        %v2200 = vpop.permute.xlu0 %2199
        %2201 = vrot.lane.b32.xlu0 %v2178, 24
        %v2202 = vpop.permute.xlu0 %2201
        %v2205 = vsel %vm657, %v1646, %v2184
        %v2206 = vsel %vm657, %v1722, %v2186
        %vm2207 = vcmask 130048
        %v2208 = vsel %vm2207, %v2205, %v2192
        %v2209 = vsel %vm2207, %v2206, %v2194
        %vm2210 = vcmask 195584
        %v2211 = vsel %vm2210, %v2208, %v2200
        %v2212 = vsel %vm2210, %v2209, %v2202
        %v2213 = vld [vmem:[%s8] sm:$0xff]
        %v2214 = vld [vmem:[%s8 + $0x8] sm:$0xff]
        %v2215 = vld [vmem:[%s8 + $0x10] sm:$0xff]
        %v2216 = vld [vmem:[%s8 + $0x18] sm:$0xff]
        %v2217 = vld [vmem:[%s9] sm:$0x1]
        %v2219 = vlaneseq
        %v2220 = vshrl.u32 %v2219, 7
        %v2221 = vsub.s32 0, %v2220
        %v2222 = vrot.slane %v2217, %v2221
        %v2225 = vsel %vm525, %v2211, 0
        %v2228 = vsel %vm525, %v2212, 0
        %2230 = vmatprep.subr.mxu0 0.0
        %2231 = vmatpush1.msra.mxu0 0.0
        %2232 = vmatprep.subr.mxu0 0.0
        %2233 = vmatpush1.msra.mxu0 0.0
        %2234 = vmatprep.subr.mxu0 0.0
        %2235 = vmatpush1.msra.mxu0 0.0
        %2236 = vmatprep.subr.mxu0 0.0
        %2237 = vmatpush1.msra.mxu0 0.0
        %2238 = vmatprep.subr.mxu0 0.0
        %2239 = vmatpush1.msra.mxu0 0.0
        %2240 = vmatprep.subr.mxu0 0.0
        %2241 = vmatpush1.msra.mxu0 0.0
        %2242 = vmatprep.subr.mxu0 0.0
        %2243 = vmatpush1.msra.mxu0 0.0
        %2244 = vmatprep.subr.mxu0 0.0
        %2245 = vmatpush1.msra.mxu0 0.0
        %2246 = vmatprep.subr.mxu0 0.0
        %2247 = vmatpush1.msra.mxu0 0.0
        %2248 = vmatprep.subr.mxu0 0.0
        %2249 = vmatpush1.msra.mxu0 0.0
        %2250 = vmatprep.subr.mxu0 0.0
        %2251 = vmatpush1.msra.mxu0 0.0
        %2252 = vmatprep.subr.mxu0 0.0
        %2253 = vmatpush1.msra.mxu0 0.0
        %2254 = vmatprep.subr.mxu0 0.0
        %2255 = vmatpush1.msra.mxu0 %v2216
        %2256 = vmatprep.subr.mxu0 0.0
        %2257 = vmatpush1.msra.mxu0 %v2215
        %2258 = vmatprep.subr.mxu0 0.0
        %2259 = vmatpush1.msra.mxu0 %v2214
        %2260 = vmatprep.subr.mxu0 0.0
        %2261 = vmatpush1.msra.mxu0 %v2213
        %2262 = vmatprep.subr.mxu0 0.0
        %2263 = vmatpush2.msra.mxu0 0.0
        %2264 = vmatprep.subr.mxu0 0.0
        %2265 = vmatpush2.msra.mxu0 0.0
        %2266 = vmatprep.subr.mxu0 0.0
        %2267 = vmatpush2.msra.mxu0 0.0
        %2268 = vmatprep.subr.mxu0 0.0
        %2269 = vmatpush2.msra.mxu0 0.0
        %2270 = vmatprep.subr.mxu0 0.0
        %2271 = vmatpush2.msra.mxu0 0.0
        %2272 = vmatprep.subr.mxu0 0.0
        %2273 = vmatpush2.msra.mxu0 0.0
        %2274 = vmatprep.subr.mxu0 0.0
        %2275 = vmatpush2.msra.mxu0 0.0
        %2276 = vmatprep.subr.mxu0 0.0
        %2277 = vmatpush2.msra.mxu0 0.0
        %2278 = vmatprep.subr.mxu0 0.0
        %2279 = vmatpush2.msra.mxu0 0.0
        %2280 = vmatprep.subr.mxu0 0.0
        %2281 = vmatpush2.msra.mxu0 0.0
        %2282 = vmatprep.subr.mxu0 0.0
        %2283 = vmatpush2.msra.mxu0 0.0
        %2284 = vmatprep.subr.mxu0 0.0
        %2285 = vmatpush2.msra.mxu0 0.0
        %2286 = vmatprep.subr.mxu0 0.0
        %2287 = vmatpush2.msra.mxu0 0.0
        %2288 = vmatprep.subr.mxu0 0.0
        %2289 = vmatpush2.msra.mxu0 0.0
        %2290 = vmatprep.subr.mxu0 0.0
        %2291 = vmatpush2.msra.mxu0 0.0
        %2292 = vmatprep.subr.mxu0 0.0
        %2293 = vmatpush2.msra.mxu0 0.0
        %2294 = vmatprep.mubr.f32.mxu0 0.0
        %2295 = vmatmul.mubr.f32.gmra.mxu0 %v2225
        %v2296 = vpop.f32.mrf.mxu0
        %v2297 = vadd.f32 %v2222, %v2296
        %v2298 = vpop.f32.mrf.mxu0
        %2299 = vmatprep.mubr.f32.mxu0 0.0
        %2300 = vmatmul.mubr.f32.gmra.mxu0 %v2228
        %v2301 = vpop.f32.mrf.mxu0
        %v2302 = vadd.f32 %v2222, %v2301
        %v2303 = vpop.f32.mrf.mxu0
        %2304 = vdwg.mxu0
        %v2305 = vadd.f32 %v521, %v2297
        %v2306 = vadd.f32 %v522, %v2302
        %v2307 = vsel %vm525, %v2305, 0.0
        %2308 = vadd.xlane.f32.xlu0 %v2307
        %v2309 = vpop.xlane.xlu0 %2308
        %v2310 = vsel %vm525, %v2306, 0.0
        %2311 = vadd.xlane.f32.xlu0 %v2310
        %v2312 = vpop.xlane.xlu0 %2311
        %v2313 = vmul.f32 %v2309, %v532
        %v2314 = vmul.f32 %v2312, %v532
        %v2315 = vsub.f32 %v2305, %v2313
        %v2316 = vsub.f32 %v2306, %v2314
        %v2317 = vmul.f32 %v2315, %v2315
        %v2318 = vmul.f32 %v2316, %v2316
        %v2319 = vsel %vm525, %v2317, 0.0
        %2320 = vadd.xlane.f32.xlu0 %v2319
        %v2321 = vpop.xlane.xlu0 %2320
        %v2322 = vsel %vm525, %v2318, 0.0
        %2323 = vadd.xlane.f32.xlu0 %v2322
        %v2324 = vpop.xlane.xlu0 %2323
        %v2325 = vmul.f32 %v2321, %v532
        %v2326 = vmul.f32 %v2324, %v532
        %v2327 = vadd.f32 %v2325, 1e-05
        %v2328 = vadd.f32 %v2326, 1e-05
        %v2329 = vrsqrt.pop %v2327
        %v2330 = vrsqrt.pop %v2328
        %v2331 = vmul.f32 %v2315, %v2329
        %v2332 = vmul.f32 %v2316, %v2330
        %v2333 = vld [vmem:[%s10] sm:$0xff]
        %v2334 = vld [vmem:[%s10 + $0x8] sm:$0xff]
        %v2335 = vld [vmem:[%s10 + $0x10] sm:$0xff]
        %v2336 = vld [vmem:[%s10 + $0x18] sm:$0xff]
        %v2337 = vld [vmem:[%s11] sm:$0x1]
        %v2339 = vlaneseq
        %v2340 = vshrl.u32 %v2339, 7
        %v2341 = vsub.s32 0, %v2340
        %v2342 = vrot.slane %v2337, %v2341
        %v2345 = vsel %vm525, %v2331, 0
        %v2348 = vsel %vm525, %v2332, 0
        %2350 = vmatprep.subr.mxu0 0.0
        %2351 = vmatpush1.msra.mxu0 0.0
        %2352 = vmatprep.subr.mxu0 0.0
        %2353 = vmatpush1.msra.mxu0 0.0
        %2354 = vmatprep.subr.mxu0 0.0
        %2355 = vmatpush1.msra.mxu0 0.0
        %2356 = vmatprep.subr.mxu0 0.0
        %2357 = vmatpush1.msra.mxu0 0.0
        %2358 = vmatprep.subr.mxu0 0.0
        %2359 = vmatpush1.msra.mxu0 0.0
        %2360 = vmatprep.subr.mxu0 0.0
        %2361 = vmatpush1.msra.mxu0 0.0
        %2362 = vmatprep.subr.mxu0 0.0
        %2363 = vmatpush1.msra.mxu0 0.0
        %2364 = vmatprep.subr.mxu0 0.0
        %2365 = vmatpush1.msra.mxu0 0.0
        %2366 = vmatprep.subr.mxu0 0.0
        %2367 = vmatpush1.msra.mxu0 0.0
        %2368 = vmatprep.subr.mxu0 0.0
        %2369 = vmatpush1.msra.mxu0 0.0
        %2370 = vmatprep.subr.mxu0 0.0
        %2371 = vmatpush1.msra.mxu0 0.0
        %2372 = vmatprep.subr.mxu0 0.0
        %2373 = vmatpush1.msra.mxu0 0.0
        %2374 = vmatprep.subr.mxu0 0.0
        %2375 = vmatpush1.msra.mxu0 %v2336
        %2376 = vmatprep.subr.mxu0 0.0
        %2377 = vmatpush1.msra.mxu0 %v2335
        %2378 = vmatprep.subr.mxu0 0.0
        %2379 = vmatpush1.msra.mxu0 %v2334
        %2380 = vmatprep.subr.mxu0 0.0
        %2381 = vmatpush1.msra.mxu0 %v2333
        %2382 = vmatprep.subr.mxu0 0.0
        %2383 = vmatpush2.msra.mxu0 0.0
        %2384 = vmatprep.subr.mxu0 0.0
        %2385 = vmatpush2.msra.mxu0 0.0
        %2386 = vmatprep.subr.mxu0 0.0
        %2387 = vmatpush2.msra.mxu0 0.0
        %2388 = vmatprep.subr.mxu0 0.0
        %2389 = vmatpush2.msra.mxu0 0.0
        %2390 = vmatprep.subr.mxu0 0.0
        %2391 = vmatpush2.msra.mxu0 0.0
        %2392 = vmatprep.subr.mxu0 0.0
        %2393 = vmatpush2.msra.mxu0 0.0
        %2394 = vmatprep.subr.mxu0 0.0
        %2395 = vmatpush2.msra.mxu0 0.0
        %2396 = vmatprep.subr.mxu0 0.0
        %2397 = vmatpush2.msra.mxu0 0.0
        %2398 = vmatprep.subr.mxu0 0.0
        %2399 = vmatpush2.msra.mxu0 0.0
        %2400 = vmatprep.subr.mxu0 0.0
        %2401 = vmatpush2.msra.mxu0 0.0
        %2402 = vmatprep.subr.mxu0 0.0
        %2403 = vmatpush2.msra.mxu0 0.0
        %2404 = vmatprep.subr.mxu0 0.0
        %2405 = vmatpush2.msra.mxu0 0.0
        %2406 = vmatprep.subr.mxu0 0.0
        %2407 = vmatpush2.msra.mxu0 0.0
        %2408 = vmatprep.subr.mxu0 0.0
        %2409 = vmatpush2.msra.mxu0 0.0
        %2410 = vmatprep.subr.mxu0 0.0
        %2411 = vmatpush2.msra.mxu0 0.0
        %2412 = vmatprep.subr.mxu0 0.0
        %2413 = vmatpush2.msra.mxu0 0.0
        %2414 = vmatprep.mubr.f32.mxu0 0.0
        %2415 = vmatmul.mubr.f32.gmra.mxu0 %v2345
        %v2416 = vpop.f32.mrf.mxu0
        %v2417 = vadd.f32 %v2342, %v2416
        %v2418 = vpop.f32.mrf.mxu0
        %2419 = vmatprep.mubr.f32.mxu0 0.0
        %2420 = vmatmul.mubr.f32.gmra.mxu0 %v2348
        %v2421 = vpop.f32.mrf.mxu0
        %v2422 = vadd.f32 %v2342, %v2421
        %v2423 = vpop.f32.mrf.mxu0
        %2424 = vdwg.mxu0
        %v2425 = vmul.f32 %v2417, 0.5
        %v2426 = vmul.f32 %v2422, 0.5
        %v2427 = vmul.f32 %v2417, 0.70710677
        %v2428 = vmul.f32 %v2422, 0.70710677
        %v2429 = verf.f32.pop %v2427
        %v2430 = verf.f32.pop %v2428
        %v2431 = vadd.f32 %v2429, 1.0
        %v2432 = vadd.f32 %v2430, 1.0
        %v2433 = vmul.f32 %v2425, %v2431
        %v2434 = vmul.f32 %v2426, %v2432
        %v2435 = vld [vmem:[%s12] sm:$0xff]
        %v2436 = vld [vmem:[%s12 + $0x8] sm:$0xff]
        %v2437 = vld [vmem:[%s12 + $0x10] sm:$0xff]
        %v2438 = vld [vmem:[%s12 + $0x18] sm:$0xff]
        %v2439 = vld [vmem:[%s12 + $0x20] sm:$0xff]
        %v2440 = vld [vmem:[%s12 + $0x28] sm:$0xff]
        %v2441 = vld [vmem:[%s12 + $0x30] sm:$0xff]
        %v2442 = vld [vmem:[%s12 + $0x38] sm:$0xff]
        %v2443 = vld [vmem:[%s12 + $0x40] sm:$0xff]
        %v2444 = vld [vmem:[%s12 + $0x48] sm:$0xff]
        %v2445 = vld [vmem:[%s12 + $0x50] sm:$0xff]
        %v2446 = vld [vmem:[%s12 + $0x58] sm:$0xff]
        %v2447 = vld [vmem:[%s12 + $0x60] sm:$0xff]
        %v2448 = vld [vmem:[%s12 + $0x68] sm:$0xff]
        %v2449 = vld [vmem:[%s12 + $0x70] sm:$0xff]
        %v2450 = vld [vmem:[%s12 + $0x78] sm:$0xff]
        %v2451 = vld [vmem:[%s13] sm:$0x1]
        %v2453 = vlaneseq
        %v2454 = vshrl.u32 %v2453, 7
        %v2455 = vsub.s32 0, %v2454
        %v2456 = vrot.slane %v2451, %v2455
        %2458 = vmatprep.subr.mxu0 0.0
        %2459 = vmatpush1.msra.mxu0 %v2450
        %2460 = vmatprep.subr.mxu0 0.0
        %2461 = vmatpush1.msra.mxu0 %v2449
        %2462 = vmatprep.subr.mxu0 0.0
        %2463 = vmatpush1.msra.mxu0 %v2448
        %2464 = vmatprep.subr.mxu0 0.0
        %2465 = vmatpush1.msra.mxu0 %v2447
        %2466 = vmatprep.subr.mxu0 0.0
        %2467 = vmatpush1.msra.mxu0 %v2446
        %2468 = vmatprep.subr.mxu0 0.0
        %2469 = vmatpush1.msra.mxu0 %v2445
        %2470 = vmatprep.subr.mxu0 0.0
        %2471 = vmatpush1.msra.mxu0 %v2444
        %2472 = vmatprep.subr.mxu0 0.0
        %2473 = vmatpush1.msra.mxu0 %v2443
        %2474 = vmatprep.subr.mxu0 0.0
        %2475 = vmatpush1.msra.mxu0 %v2442
        %2476 = vmatprep.subr.mxu0 0.0
        %2477 = vmatpush1.msra.mxu0 %v2441
        %2478 = vmatprep.subr.mxu0 0.0
        %2479 = vmatpush1.msra.mxu0 %v2440
        %2480 = vmatprep.subr.mxu0 0.0
        %2481 = vmatpush1.msra.mxu0 %v2439
        %2482 = vmatprep.subr.mxu0 0.0
        %2483 = vmatpush1.msra.mxu0 %v2438
        %2484 = vmatprep.subr.mxu0 0.0
        %2485 = vmatpush1.msra.mxu0 %v2437
        %2486 = vmatprep.subr.mxu0 0.0
        %2487 = vmatpush1.msra.mxu0 %v2436
        %2488 = vmatprep.subr.mxu0 0.0
        %2489 = vmatpush1.msra.mxu0 %v2435
        %2490 = vmatprep.subr.mxu0 0.0
        %2491 = vmatpush2.msra.mxu0 0.0
        %2492 = vmatprep.subr.mxu0 0.0
        %2493 = vmatpush2.msra.mxu0 0.0
        %2494 = vmatprep.subr.mxu0 0.0
        %2495 = vmatpush2.msra.mxu0 0.0
        %2496 = vmatprep.subr.mxu0 0.0
        %2497 = vmatpush2.msra.mxu0 0.0
        %2498 = vmatprep.subr.mxu0 0.0
        %2499 = vmatpush2.msra.mxu0 0.0
        %2500 = vmatprep.subr.mxu0 0.0
        %2501 = vmatpush2.msra.mxu0 0.0
        %2502 = vmatprep.subr.mxu0 0.0
        %2503 = vmatpush2.msra.mxu0 0.0
        %2504 = vmatprep.subr.mxu0 0.0
        %2505 = vmatpush2.msra.mxu0 0.0
        %2506 = vmatprep.subr.mxu0 0.0
        %2507 = vmatpush2.msra.mxu0 0.0
        %2508 = vmatprep.subr.mxu0 0.0
        %2509 = vmatpush2.msra.mxu0 0.0
        %2510 = vmatprep.subr.mxu0 0.0
        %2511 = vmatpush2.msra.mxu0 0.0
        %2512 = vmatprep.subr.mxu0 0.0
        %2513 = vmatpush2.msra.mxu0 0.0
        %2514 = vmatprep.subr.mxu0 0.0
        %2515 = vmatpush2.msra.mxu0 0.0
        %2516 = vmatprep.subr.mxu0 0.0
        %2517 = vmatpush2.msra.mxu0 0.0
        %2518 = vmatprep.subr.mxu0 0.0
        %2519 = vmatpush2.msra.mxu0 0.0
        %2520 = vmatprep.subr.mxu0 0.0
        %2521 = vmatpush2.msra.mxu0 0.0
        %2522 = vmatprep.mubr.f32.mxu0 0.0
        %2523 = vmatmul.mubr.f32.gmra.mxu0 %v2433
        %v2524 = vpop.f32.mrf.mxu0
        %v2525 = vadd.f32 %v2456, %v2524
        %v2526 = vpop.f32.mrf.mxu0
        %2527 = vmatprep.mubr.f32.mxu0 0.0
        %2528 = vmatmul.mubr.f32.gmra.mxu0 %v2434
        %v2529 = vpop.f32.mrf.mxu0
        %v2530 = vadd.f32 %v2456, %v2529
        %v2531 = vpop.f32.mrf.mxu0
        %2532 = vdwg.mxu0
        %v2533 = vadd.f32 %v2305, %v2525
        %v2534 = vadd.f32 %v2306, %v2530
        %2535 = vst.msk [vmem:[%s513] sm:$0xff] %vm525, %v2533
        %2536 = vst.msk [vmem:[%s513 + $0x8] sm:$0xff] %vm525, %v2534
        %s2537 = sand.u32 %s338, 1
        %s2538 = scalar_lea.sflag [#allocation3], %s2537
        %s2539 = sand.u32 %s338, 1
        %s2540 = smul.addr %s2539, 16
        %s2541 = scalar_lea.vmem [#allocation10], %s2540
        // Predicated region
        $region93: #{tpu_custom_call.1} parent=75 // pred_check
          %p2542 = pneg %p348
        $region94: #{tpu_custom_call.1} parent=75 // pred_check_branch
          %2544 = sbr.rel (%p2542) target = $region96
        $region95: #{tpu_custom_call.1} parent=75 // pred_region
          %s2545 = smul.u32 2, %s31
          %s2547 = ssub.s32 256, 256
          %2548 = vsyncadd %s2538, %s2547
          %s2549 = smul.addr %s2545, 128
          %s2550 = scalar_lea.hbm %s14, %s2549
          %s2551 = sshll.u32 %s2541, 4
          %s2552 = int_to_ptr.vmem [resolvable:$true] %s2551
          %2557 = dma.vmem_to_hbm [thread:$0]  %s2552, 256, %s2550, %s2538, 128, 128, 8
        $region96: #{tpu_custom_call.1} parent=75 // pred_fallthru
          _
      $region76: #{tpu_custom_call.1} parent=5 // pred_fallthru
        _
      %p2558 = scmp.le.s32.totalorder 2, %s26
      // Predicated region
      $region97: #{tpu_custom_call.1} parent=5 // pred_check
        %p2559 = pneg %p2558
      $region98: #{tpu_custom_call.1} parent=5 // pred_check_branch
        %2561 = sbr.rel (%p2559) target = $region100
      $region99: #{tpu_custom_call.1} parent=5 // pred_region
        %s2562 = ssub.s32 %s26, 2
        // Predicated region
        $region101: #{tpu_custom_call.1} parent=99 // pred_check
          %p2563 = pneg %p354
        $region102: #{tpu_custom_call.1} parent=99 // pred_check_branch
          %2565 = sbr.rel (%p2563) target = $region104
        $region103: #{tpu_custom_call.1} parent=99 // pred_region
          %s2566 = sand.u32 %s339, 1
          %s2567 = scalar_lea.sflag [#allocation3], %s2566
          %s2568 = sand.u32 %s339, 1
          %s2569 = smul.addr %s2568, 16
          %s2570 = scalar_lea.vmem [#allocation10], %s2569
          %2571 = dma.done %s2567, 256
        $region104: #{tpu_custom_call.1} parent=99 // pred_fallthru
          _
      $region100: #{tpu_custom_call.1} parent=5 // pred_fallthru
        _
    $region6: #{tpu_custom_call.1} parent=1 // loop_footer
      %s30 = sadd.s32 1, %s26
    $region7: #{tpu_custom_call.1} parent=1 // loop_footer_branch
      %25 = sbr.rel target = $region3
    $region8: #{tpu_custom_call.1} parent=1 // loop_exit
      _
    %2572 = vsyncpa [#allocation3], 1
    %s2573 = scalar_lea.sflag [#allocation3], 1
    %2574 = vsyncpa %s2573, 1
    %2575 = vsyncpa [#allocation4], 1
    %s2576 = scalar_lea.sflag [#allocation4], 1
    %2577 = vsyncpa %s2576, 1
    %2578 = vsyncpa [#allocation6], 1
    %2579 = vsyncpa [#allocation9], 1

</llo_original>
